<compile_context>
chip_gen: v7x
topology: tpu7x:2x2x1
jax: 0.10.0
libtpu: 0.0.40
codegen_flags: <defaults>
</compile_context>

<pallas_src>
import functools

import jax
import jax.numpy as jnp
from jax.experimental import pallas as pl
from jax.experimental.pallas import tpu as pltpu


# ----------------------------- fused Pallas kernel -----------------------------

def _make_fused_rnn_kernel(num_layers, ndir, T, B, H):
    """Whole (embedded-input -> LSTM stack -> Linear) in one grid-less kernel."""
    G = 4 * H

    def kernel(*refs):
        it = iter(refs)
        x_ref = next(it)            # (T*B, E)    bf16, rows = t*B + b
        h0_ref = next(it)           # (L*ndir, B, H) f32
        c0_ref = next(it)           # (L*ndir, B, H) f32
        layers = [(next(it), next(it), next(it)) for _ in range(num_layers)]
        wp_ref = next(it)           # (ndir*H, O_pad) bf16 (lane-padded)
        bp_ref = next(it)           # (1, O_pad)      f32  (lane-padded)
        scores_ref = next(it)       # (T*B, O_pad)    f32
        hN_ref = next(it)           # (L*ndir*B, H)   f32
        cN_ref = next(it)           # (L*ndir*B, H)   f32

        hN_parts, cN_parts = [], []
        layer_in = None             # f32 value (T*B, ndir*H) for layers > 0

        for l in range(num_layers):
            wih_ref, b_ref, whh_ref = layers[l]

            # Hoisted input projection: all time steps, both directions, one
            # bf16 MXU matmul with f32 accumulation.  Result stays in vregs.
            src_bf = x_ref[...] if l == 0 else layer_in.astype(jnp.bfloat16)
            gx = jnp.dot(src_bf, wih_ref[...],
                         preferred_element_type=jnp.float32) + b_ref[...]
            # gx: (T*B, ndir*G) f32.

            whh = whh_ref[...]      # (ndir*H, G) f32, block-stacked [fwd; bwd]

            if ndir == 2:
                h = jnp.concatenate([h0_ref[2 * l], h0_ref[2 * l + 1]], axis=0)
                c = jnp.concatenate([c0_ref[2 * l], c0_ref[2 * l + 1]], axis=0)
            else:
                h = h0_ref[l]
                c = c0_ref[l]
            h = h.astype(jnp.float32)   # (ndir*B, H) fused carry
            c = c.astype(jnp.float32)

            zeros_bh = jnp.zeros((B, H), jnp.float32)
            fwd_out, bwd_out = [], []

            # Sequential recurrence, fully unrolled (T small & static).
            for t in range(T):
                if ndir == 2:
                    tb = T - 1 - t
                    # (2B, G) precomputed gates: rows 0:B forward @t,
                    # rows B:2B backward @T-1-t.
                    gx_step = jnp.concatenate(
                        [gx[t * B:(t + 1) * B, 0:G],
                         gx[tb * B:(tb + 1) * B, G:2 * G]], axis=0)
                    # Block-diagonal LHS [[h_f, 0], [0, h_b]] -> one recurrent
                    # matmul covers both directions.
                    lhs = jnp.concatenate(
                        [jnp.concatenate([h[0:B], zeros_bh], axis=1),
                         jnp.concatenate([zeros_bh, h[B:2 * B]], axis=1)],
                        axis=0)
                else:
                    gx_step = gx[t * B:(t + 1) * B, :]
                    lhs = h

                gates = gx_step + jnp.dot(lhs, whh,
                                          preferred_element_type=jnp.float32)
                # One full-width sigmoid (single EUP push) + one tanh on g.
                sig = jax.nn.sigmoid(gates)
                i = sig[:, 0 * H:1 * H]
                f = sig[:, 1 * H:2 * H]
                o = sig[:, 3 * H:4 * H]
                g = jnp.tanh(gates[:, 2 * H:3 * H])
                c = f * c + i * g
                h = o * jnp.tanh(c)

                fwd_out.append(h[0:B])
                if ndir == 2:
                    bwd_out.append(h[B:2 * B])

            fwd_cat = jnp.concatenate(fwd_out, axis=0)            # (T*B, H)
            if ndir == 2:
                bwd_cat = jnp.concatenate(list(reversed(bwd_out)), axis=0)
                layer_in = jnp.concatenate([fwd_cat, bwd_cat], axis=1)
                hN_parts += [h[0:B], h[B:2 * B]]
                cN_parts += [c[0:B], c[B:2 * B]]
            else:
                layer_in = fwd_cat
                hN_parts.append(h)
                cN_parts.append(c)

        # Final states: one dense slab store each (no per-(B,H) partial stores).
        hN_ref[...] = jnp.concatenate(hN_parts, axis=0)
        cN_ref[...] = jnp.concatenate(cN_parts, axis=0)

        # Fused, lane-padded output projection (nn.Linear) on VMEM/vreg-resident
        # last-layer activations; bf16 MXU operands, f32 accumulation.
        scores_ref[...] = (
            jnp.dot(layer_in.astype(jnp.bfloat16), wp_ref[...],
                    preferred_element_type=jnp.float32)
            + bp_ref[...]).astype(scores_ref.dtype)

    return kernel


# ----------------------------- parameters -----------------------------

def _uniform(key, shape, scale=0.1):
    return jax.random.uniform(key, shape, jnp.float32, -scale, scale)


def init_params(key, input_size, emb_dim, h_dim, output_dim,
                num_layers, bidirectional):
    """PyTorch-layout parameters (used by the pure-JAX reference)."""
    ndir = 2 if bidirectional else 1
    n_keys = 1 + 4 * num_layers * ndir + 2
    ks = iter(jax.random.split(key, n_keys))
    params = {"embedding": _uniform(next(ks), (input_size, emb_dim)), "lstm": []}
    for l in range(num_layers):
        d_in = emb_dim if l == 0 else h_dim * ndir
        for _d in range(ndir):
            params["lstm"].append({
                "w_ih": _uniform(next(ks), (4 * h_dim, d_in)),
                "w_hh": _uniform(next(ks), (4 * h_dim, h_dim)),
                "b_ih": _uniform(next(ks), (4 * h_dim,)),
                "b_hh": _uniform(next(ks), (4 * h_dim,)),
            })
    params["w_pred"] = _uniform(next(ks), (output_dim, h_dim * ndir))
    params["b_pred"] = _uniform(next(ks), (output_dim,))
    return params


def pack_params_for_kernel(params, num_layers, bidirectional):
    """One-time re-layout into the kernel-facing format (done outside jit)."""
    ndir = 2 if bidirectional else 1
    H = params["lstm"][0]["w_hh"].shape[-1]
    O = params["w_pred"].shape[0]
    G = 4 * H
    width = ndir * H
    O_pad = ((O + 127) // 128) * 128

    packed = {"embedding": params["embedding"], "layers": []}
    for l in range(num_layers):
        ps = [params["lstm"][l * ndir + d] for d in range(ndir)]
        wih_comb = jnp.concatenate([p["w_ih"].T for p in ps],
                                   axis=1).astype(jnp.bfloat16)   # (D_in, ndir*G)
        b_comb = jnp.concatenate([p["b_ih"] + p["b_hh"]
                                  for p in ps]).reshape(1, ndir * G)
        whh_comb = jnp.concatenate([p["w_hh"].T for p in ps],
                                   axis=0)                        # (ndir*H, G) f32
        packed["layers"].append((wih_comb, b_comb, whh_comb))

    wp = jnp.zeros((width, O_pad), jnp.float32)
    wp = wp.at[:, :O].set(params["w_pred"].T)
    packed["w_pred"] = wp.astype(jnp.bfloat16)                    # lane-padded
    bp = jnp.zeros((1, O_pad), jnp.float32)
    packed["b_pred"] = bp.at[:, :O].set(params["b_pred"])
    return packed


# ----------------------------- forward -----------------------------

def rnn_model_forward(packed, sentence, hidden_st, *, num_layers,
                      bidirectional, output_dim):
    ndir = 2 if bidirectional else 1
    B, T, W = sentence.shape
    emb_table = packed["embedding"]
    E = emb_table.shape[1]
    H = packed["layers"][0][2].shape[-1] // 4
    O_pad = packed["w_pred"].shape[1]

    # Embedding lookup is a data-dependent gather -> plain XLA glue; bag-sum and
    # the single time-major layout transform are cheap one-off glue ops.
    emb = jnp.take(emb_table, sentence.reshape(B * T, W), axis=0)
    x = emb.sum(axis=1).reshape(B, T, E)
    x_tm = jnp.transpose(x, (1, 0, 2)).reshape(T * B, E).astype(jnp.bfloat16)

    h0, c0 = hidden_st                                            # (L*ndir, B, H)

    args = [x_tm, h0, c0]
    for l in range(num_layers):
        args += list(packed["layers"][l])
    args += [packed["w_pred"], packed["b_pred"]]

    kernel = _make_fused_rnn_kernel(num_layers, ndir, T, B, H)
    vmem_spec = pl.BlockSpec(memory_space=pltpu.MemorySpace.VMEM)

    scores_pad, hN_flat, cN_flat = pl.pallas_call(
        kernel,
        out_shape=(jax.ShapeDtypeStruct((T * B, O_pad), jnp.float32),
                   jax.ShapeDtypeStruct((num_layers * ndir * B, H), jnp.float32),
                   jax.ShapeDtypeStruct((num_layers * ndir * B, H), jnp.float32)),
        in_specs=[vmem_spec] * len(args),
        out_specs=(vmem_spec, vmem_spec, vmem_spec),
        compiler_params=pltpu.CompilerParams(
            vmem_limit_bytes=32 * 1024 * 1024),
    )(*args)

    # nn.Dropout with p=0.0 / inference -> identity.
    scores = scores_pad[:, :output_dim].reshape(T, B, output_dim)
    scores = jnp.transpose(scores, (1, 0, 2))                     # (B, T, O)
    hN = hN_flat.reshape(num_layers * ndir, B, H)
    cN = cN_flat.reshape(num_layers * ndir, B, H)
    return scores, (hN, cN)


# ----------------------------- pure-JAX reference -----------------------------

def _lstm_ref(x_btd, p, h0, c0):
    def step(carry, x_t):
        h, c = carry
        gates = x_t @ p["w_ih"].T + h @ p["w_hh"].T + p["b_ih"] + p["b_hh"]
        i, f, g, o = jnp.split(gates, 4, axis=-1)
        c = jax.nn.sigmoid(f) * c + jax.nn.sigmoid(i) * jnp.tanh(g)
        h = jax.nn.sigmoid(o) * jnp.tanh(c)
        return (h, c), h
    (hT, cT), out = jax.lax.scan(step, (h0, c0), jnp.transpose(x_btd, (1, 0, 2)))
    return jnp.transpose(out, (1, 0, 2)), hT, cT


def rnn_model_forward_ref(params, sentence, hidden_st, *, num_layers,
                          bidirectional):
    ndir = 2 if bidirectional else 1
    B, T, W = sentence.shape
    emb = jnp.take(params["embedding"], sentence.reshape(B * T, W), axis=0)
    x = emb.sum(axis=1).reshape(B, T, -1)
    h0, c0 = hidden_st
    h_fin, c_fin = [], []
    layer_in = x
    for l in range(num_layers):
        outs = []
        for d in range(ndir):
            idx = l * ndir + d
            p = params["lstm"][idx]
            xs = layer_in if d == 0 else jnp.flip(layer_in, 1)
            o, hT, cT = _lstm_ref(xs, p, h0[idx], c0[idx])
            if d == 1:
                o = jnp.flip(o, 1)
            outs.append(o)
            h_fin.append(hT)
            c_fin.append(cT)
        layer_in = outs[0] if ndir == 1 else jnp.concatenate(outs, -1)
    scores = layer_in.reshape(B * T, -1) @ params["w_pred"].T + params["b_pred"]
    return scores.reshape(B, T, -1), (jnp.stack(h_fin), jnp.stack(c_fin))


# ----------------------------- main -----------------------------

if __name__ == "__main__":
    input_size, emb_dim, h_dim, output_dim = 50, 32, 32, 8
    num_layers, bidirectional, dropout = 2, True, 0.0
    ndir = 2 if bidirectional else 1
    B, T, W = 2, 8, 3

    key = jax.random.PRNGKey(0)
    k_params, k_sent = jax.random.split(key)
    params = init_params(k_params, input_size, emb_dim, h_dim, output_dim,
                         num_layers, bidirectional)
    packed = pack_params_for_kernel(params, num_layers, bidirectional)

    sentence = jax.random.randint(k_sent, (B, T, W), 0, input_size,
                                  dtype=jnp.int32)
    h0 = jnp.zeros((num_layers * ndir, B, h_dim), jnp.float32)
    c0 = jnp.zeros_like(h0)

    fwd = jax.jit(functools.partial(rnn_model_forward,
                                    num_layers=num_layers,
                                    bidirectional=bidirectional,
                                    output_dim=output_dim))
    scores, (hN, cN) = fwd(packed, sentence, (h0, c0))
    jax.block_until_ready((scores, hN, cN))

    scores_r, (hN_r, cN_r) = rnn_model_forward_ref(params, sentence, (h0, c0),
                                                   num_layers=num_layers,
                                                   bidirectional=bidirectional)
    assert scores.shape == (B, T, output_dim)
    assert hN.shape == (num_layers * ndir, B, h_dim)
    # bf16 MXU inputs with f32 accumulation -> looser tolerance than pure f32.
    assert jnp.allclose(scores, scores_r, atol=2e-2), "scores mismatch"
    assert jnp.allclose(hN, hN_r, atol=2e-2), "h_n mismatch"
    assert jnp.allclose(cN, cN_r, atol=2e-2), "c_n mismatch"

    print("KERNEL_OK")
</pallas_src>

<mosaic_0001>
module attributes {stable_mosaic.version = 11 : i64} {
  func.func @kernel(%arg0: memref<16x32xbf16, #tpu.memory_space<vmem>>, %arg1: memref<4x2x32xf32, #tpu.memory_space<vmem>>, %arg2: memref<4x2x32xf32, #tpu.memory_space<vmem>>, %arg3: memref<32x256xbf16, #tpu.memory_space<vmem>>, %arg4: memref<1x256xf32, #tpu.memory_space<vmem>>, %arg5: memref<64x128xf32, #tpu.memory_space<vmem>>, %arg6: memref<64x256xbf16, #tpu.memory_space<vmem>>, %arg7: memref<1x256xf32, #tpu.memory_space<vmem>>, %arg8: memref<64x128xf32, #tpu.memory_space<vmem>>, %arg9: memref<64x128xbf16, #tpu.memory_space<vmem>>, %arg10: memref<1x128xf32, #tpu.memory_space<vmem>>, %arg11: memref<16x128xf32, #tpu.memory_space<vmem>>, %arg12: memref<8x32xf32, #tpu.memory_space<vmem>>, %arg13: memref<8x32xf32, #tpu.memory_space<vmem>>) attributes {dimension_semantics = [], scalar_prefetch = 0 : i64, scratch_operands = 0 : i64, tpu.core_type = #tpu.core_type<tc>} {
    %c0 = arith.constant 0 : index
    %c0_0 = arith.constant 0 : index
    %0 = vector.load %arg0[%c0, %c0_0] : memref<16x32xbf16, #tpu.memory_space<vmem>>, vector<16x32xbf16>
    %c0_1 = arith.constant 0 : index
    %c0_2 = arith.constant 0 : index
    %1 = vector.load %arg3[%c0_1, %c0_2] : memref<32x256xbf16, #tpu.memory_space<vmem>>, vector<32x256xbf16>
    %cst = arith.constant dense<0.000000e+00> : vector<16x256xf32>
    %2 = tpu.matmul %0, %1, %cst {dimension_numbers = #tpu.dot_dimension_numbers<[1], [0], [0], [1], [0, 0, 1, 1], [], []>} : vector<16x32xbf16>, vector<32x256xbf16>, vector<16x256xf32> -> vector<16x256xf32>
    %c0_3 = arith.constant 0 : index
    %c0_4 = arith.constant 0 : index
    %3 = vector.load %arg4[%c0_3, %c0_4] : memref<1x256xf32, #tpu.memory_space<vmem>>, vector<1x256xf32>
    %4 = vector.broadcast %3 : vector<1x256xf32> to vector<16x256xf32>
    %5 = arith.addf %2, %4 : vector<16x256xf32>
    %c0_5 = arith.constant 0 : index
    %c0_6 = arith.constant 0 : index
    %6 = vector.load %arg5[%c0_5, %c0_6] : memref<64x128xf32, #tpu.memory_space<vmem>>, vector<64x128xf32>
    %c0_7 = arith.constant 0 : index
    %c0_8 = arith.constant 0 : index
    %c0_9 = arith.constant 0 : index
    %7 = vector.load %arg1[%c0_7, %c0_8, %c0_9] : memref<4x2x32xf32, #tpu.memory_space<vmem>>, vector<1x2x32xf32>
    %8 = vector.shape_cast %7 : vector<1x2x32xf32> to vector<2x32xf32>
    %c1 = arith.constant 1 : index
    %c0_10 = arith.constant 0 : index
    %c0_11 = arith.constant 0 : index
    %9 = vector.load %arg1[%c1, %c0_10, %c0_11] : memref<4x2x32xf32, #tpu.memory_space<vmem>>, vector<1x2x32xf32>
    %10 = vector.shape_cast %9 : vector<1x2x32xf32> to vector<2x32xf32>
    %11 = tpu.concatenate %8, %10 in 0 : vector<2x32xf32>, vector<2x32xf32> -> vector<4x32xf32>
    %c0_12 = arith.constant 0 : index
    %c0_13 = arith.constant 0 : index
    %c0_14 = arith.constant 0 : index
    %12 = vector.load %arg2[%c0_12, %c0_13, %c0_14] : memref<4x2x32xf32, #tpu.memory_space<vmem>>, vector<1x2x32xf32>
    %13 = vector.shape_cast %12 : vector<1x2x32xf32> to vector<2x32xf32>
    %c1_15 = arith.constant 1 : index
    %c0_16 = arith.constant 0 : index
    %c0_17 = arith.constant 0 : index
    %14 = vector.load %arg2[%c1_15, %c0_16, %c0_17] : memref<4x2x32xf32, #tpu.memory_space<vmem>>, vector<1x2x32xf32>
    %15 = vector.shape_cast %14 : vector<1x2x32xf32> to vector<2x32xf32>
    %16 = tpu.concatenate %13, %15 in 0 : vector<2x32xf32>, vector<2x32xf32> -> vector<4x32xf32>
    %cst_18 = arith.constant 0.000000e+00 : f32
    %17 = vector.broadcast %cst_18 : f32 to vector<2x32xf32>
    %18 = vector.extract_strided_slice %5 {offsets = [0, 0], sizes = [2, 128], strides = [1, 1]} : vector<16x256xf32> to vector<2x128xf32>
    %19 = vector.extract_strided_slice %5 {offsets = [14, 128], sizes = [2, 128], strides = [1, 1]} : vector<16x256xf32> to vector<2x128xf32>
    %20 = tpu.concatenate %18, %19 in 0 : vector<2x128xf32>, vector<2x128xf32> -> vector<4x128xf32>
    %21 = vector.extract_strided_slice %11 {offsets = [0, 0], sizes = [2, 32], strides = [1, 1]} : vector<4x32xf32> to vector<2x32xf32>
    %22 = tpu.concatenate %21, %17 in 1 : vector<2x32xf32>, vector<2x32xf32> -> vector<2x64xf32>
    %23 = vector.extract_strided_slice %11 {offsets = [2, 0], sizes = [2, 32], strides = [1, 1]} : vector<4x32xf32> to vector<2x32xf32>
    %24 = tpu.concatenate %17, %23 in 1 : vector<2x32xf32>, vector<2x32xf32> -> vector<2x64xf32>
    %25 = tpu.concatenate %22, %24 in 0 : vector<2x64xf32>, vector<2x64xf32> -> vector<4x64xf32>
    %cst_19 = arith.constant dense<0.000000e+00> : vector<4x128xf32>
    %26 = tpu.matmul %25, %6, %cst_19 {dimension_numbers = #tpu.dot_dimension_numbers<[1], [0], [0], [1], [0, 0, 1, 1], [], []>} : vector<4x64xf32>, vector<64x128xf32>, vector<4x128xf32> -> vector<4x128xf32>
    %27 = arith.addf %20, %26 : vector<4x128xf32>
    %28 = arith.negf %27 : vector<4x128xf32>
    %29 = math.exp %28 : vector<4x128xf32>
    %cst_20 = arith.constant 1.000000e+00 : f32
    %30 = vector.broadcast %cst_20 : f32 to vector<4x128xf32>
    %31 = arith.addf %30, %29 : vector<4x128xf32>
    %32 = arith.divf %30, %31 : vector<4x128xf32>
    %33 = vector.extract_strided_slice %32 {offsets = [0, 0], sizes = [4, 32], strides = [1, 1]} : vector<4x128xf32> to vector<4x32xf32>
    %34 = vector.extract_strided_slice %32 {offsets = [0, 32], sizes = [4, 32], strides = [1, 1]} : vector<4x128xf32> to vector<4x32xf32>
    %35 = vector.extract_strided_slice %32 {offsets = [0, 96], sizes = [4, 32], strides = [1, 1]} : vector<4x128xf32> to vector<4x32xf32>
    %36 = vector.extract_strided_slice %27 {offsets = [0, 64], sizes = [4, 32], strides = [1, 1]} : vector<4x128xf32> to vector<4x32xf32>
    %37 = math.tanh %36 : vector<4x32xf32>
    %38 = arith.mulf %34, %16 : vector<4x32xf32>
    %39 = arith.mulf %33, %37 : vector<4x32xf32>
    %40 = arith.addf %38, %39 : vector<4x32xf32>
    %41 = math.tanh %40 : vector<4x32xf32>
    %42 = arith.mulf %35, %41 : vector<4x32xf32>
    %43 = vector.extract_strided_slice %42 {offsets = [0, 0], sizes = [2, 32], strides = [1, 1]} : vector<4x32xf32> to vector<2x32xf32>
    %44 = vector.extract_strided_slice %42 {offsets = [2, 0], sizes = [2, 32], strides = [1, 1]} : vector<4x32xf32> to vector<2x32xf32>
    %45 = vector.extract_strided_slice %5 {offsets = [2, 0], sizes = [2, 128], strides = [1, 1]} : vector<16x256xf32> to vector<2x128xf32>
    %46 = vector.extract_strided_slice %5 {offsets = [12, 128], sizes = [2, 128], strides = [1, 1]} : vector<16x256xf32> to vector<2x128xf32>
    %47 = tpu.concatenate %45, %46 in 0 : vector<2x128xf32>, vector<2x128xf32> -> vector<4x128xf32>
    %48 = vector.extract_strided_slice %42 {offsets = [0, 0], sizes = [2, 32], strides = [1, 1]} : vector<4x32xf32> to vector<2x32xf32>
    %49 = tpu.concatenate %48, %17 in 1 : vector<2x32xf32>, vector<2x32xf32> -> vector<2x64xf32>
    %50 = vector.extract_strided_slice %42 {offsets = [2, 0], sizes = [2, 32], strides = [1, 1]} : vector<4x32xf32> to vector<2x32xf32>
    %51 = tpu.concatenate %17, %50 in 1 : vector<2x32xf32>, vector<2x32xf32> -> vector<2x64xf32>
    %52 = tpu.concatenate %49, %51 in 0 : vector<2x64xf32>, vector<2x64xf32> -> vector<4x64xf32>
    %cst_21 = arith.constant dense<0.000000e+00> : vector<4x128xf32>
    %53 = tpu.matmul %52, %6, %cst_21 {dimension_numbers = #tpu.dot_dimension_numbers<[1], [0], [0], [1], [0, 0, 1, 1], [], []>} : vector<4x64xf32>, vector<64x128xf32>, vector<4x128xf32> -> vector<4x128xf32>
    %54 = arith.addf %47, %53 : vector<4x128xf32>
    %55 = arith.negf %54 : vector<4x128xf32>
    %56 = math.exp %55 : vector<4x128xf32>
    %cst_22 = arith.constant 1.000000e+00 : f32
    %57 = vector.broadcast %cst_22 : f32 to vector<4x128xf32>
    %58 = arith.addf %57, %56 : vector<4x128xf32>
    %59 = arith.divf %57, %58 : vector<4x128xf32>
    %60 = vector.extract_strided_slice %59 {offsets = [0, 0], sizes = [4, 32], strides = [1, 1]} : vector<4x128xf32> to vector<4x32xf32>
    %61 = vector.extract_strided_slice %59 {offsets = [0, 32], sizes = [4, 32], strides = [1, 1]} : vector<4x128xf32> to vector<4x32xf32>
    %62 = vector.extract_strided_slice %59 {offsets = [0, 96], sizes = [4, 32], strides = [1, 1]} : vector<4x128xf32> to vector<4x32xf32>
    %63 = vector.extract_strided_slice %54 {offsets = [0, 64], sizes = [4, 32], strides = [1, 1]} : vector<4x128xf32> to vector<4x32xf32>
    %64 = math.tanh %63 : vector<4x32xf32>
    %65 = arith.mulf %61, %40 : vector<4x32xf32>
    %66 = arith.mulf %60, %64 : vector<4x32xf32>
    %67 = arith.addf %65, %66 : vector<4x32xf32>
    %68 = math.tanh %67 : vector<4x32xf32>
    %69 = arith.mulf %62, %68 : vector<4x32xf32>
    %70 = vector.extract_strided_slice %69 {offsets = [0, 0], sizes = [2, 32], strides = [1, 1]} : vector<4x32xf32> to vector<2x32xf32>
    %71 = vector.extract_strided_slice %69 {offsets = [2, 0], sizes = [2, 32], strides = [1, 1]} : vector<4x32xf32> to vector<2x32xf32>
    %72 = vector.extract_strided_slice %5 {offsets = [4, 0], sizes = [2, 128], strides = [1, 1]} : vector<16x256xf32> to vector<2x128xf32>
    %73 = vector.extract_strided_slice %5 {offsets = [10, 128], sizes = [2, 128], strides = [1, 1]} : vector<16x256xf32> to vector<2x128xf32>
    %74 = tpu.concatenate %72, %73 in 0 : vector<2x128xf32>, vector<2x128xf32> -> vector<4x128xf32>
    %75 = vector.extract_strided_slice %69 {offsets = [0, 0], sizes = [2, 32], strides = [1, 1]} : vector<4x32xf32> to vector<2x32xf32>
    %76 = tpu.concatenate %75, %17 in 1 : vector<2x32xf32>, vector<2x32xf32> -> vector<2x64xf32>
    %77 = vector.extract_strided_slice %69 {offsets = [2, 0], sizes = [2, 32], strides = [1, 1]} : vector<4x32xf32> to vector<2x32xf32>
    %78 = tpu.concatenate %17, %77 in 1 : vector<2x32xf32>, vector<2x32xf32> -> vector<2x64xf32>
    %79 = tpu.concatenate %76, %78 in 0 : vector<2x64xf32>, vector<2x64xf32> -> vector<4x64xf32>
    %cst_23 = arith.constant dense<0.000000e+00> : vector<4x128xf32>
    %80 = tpu.matmul %79, %6, %cst_23 {dimension_numbers = #tpu.dot_dimension_numbers<[1], [0], [0], [1], [0, 0, 1, 1], [], []>} : vector<4x64xf32>, vector<64x128xf32>, vector<4x128xf32> -> vector<4x128xf32>
    %81 = arith.addf %74, %80 : vector<4x128xf32>
    %82 = arith.negf %81 : vector<4x128xf32>
    %83 = math.exp %82 : vector<4x128xf32>
    %cst_24 = arith.constant 1.000000e+00 : f32
    %84 = vector.broadcast %cst_24 : f32 to vector<4x128xf32>
    %85 = arith.addf %84, %83 : vector<4x128xf32>
    %86 = arith.divf %84, %85 : vector<4x128xf32>
    %87 = vector.extract_strided_slice %86 {offsets = [0, 0], sizes = [4, 32], strides = [1, 1]} : vector<4x128xf32> to vector<4x32xf32>
    %88 = vector.extract_strided_slice %86 {offsets = [0, 32], sizes = [4, 32], strides = [1, 1]} : vector<4x128xf32> to vector<4x32xf32>
    %89 = vector.extract_strided_slice %86 {offsets = [0, 96], sizes = [4, 32], strides = [1, 1]} : vector<4x128xf32> to vector<4x32xf32>
    %90 = vector.extract_strided_slice %81 {offsets = [0, 64], sizes = [4, 32], strides = [1, 1]} : vector<4x128xf32> to vector<4x32xf32>
    %91 = math.tanh %90 : vector<4x32xf32>
    %92 = arith.mulf %88, %67 : vector<4x32xf32>
    %93 = arith.mulf %87, %91 : vector<4x32xf32>
    %94 = arith.addf %92, %93 : vector<4x32xf32>
    %95 = math.tanh %94 : vector<4x32xf32>
    %96 = arith.mulf %89, %95 : vector<4x32xf32>
    %97 = vector.extract_strided_slice %96 {offsets = [0, 0], sizes = [2, 32], strides = [1, 1]} : vector<4x32xf32> to vector<2x32xf32>
    %98 = vector.extract_strided_slice %96 {offsets = [2, 0], sizes = [2, 32], strides = [1, 1]} : vector<4x32xf32> to vector<2x32xf32>
    %99 = vector.extract_strided_slice %5 {offsets = [6, 0], sizes = [2, 128], strides = [1, 1]} : vector<16x256xf32> to vector<2x128xf32>
    %100 = vector.extract_strided_slice %5 {offsets = [8, 128], sizes = [2, 128], strides = [1, 1]} : vector<16x256xf32> to vector<2x128xf32>
    %101 = tpu.concatenate %99, %100 in 0 : vector<2x128xf32>, vector<2x128xf32> -> vector<4x128xf32>
    %102 = vector.extract_strided_slice %96 {offsets = [0, 0], sizes = [2, 32], strides = [1, 1]} : vector<4x32xf32> to vector<2x32xf32>
    %103 = tpu.concatenate %102, %17 in 1 : vector<2x32xf32>, vector<2x32xf32> -> vector<2x64xf32>
    %104 = vector.extract_strided_slice %96 {offsets = [2, 0], sizes = [2, 32], strides = [1, 1]} : vector<4x32xf32> to vector<2x32xf32>
    %105 = tpu.concatenate %17, %104 in 1 : vector<2x32xf32>, vector<2x32xf32> -> vector<2x64xf32>
    %106 = tpu.concatenate %103, %105 in 0 : vector<2x64xf32>, vector<2x64xf32> -> vector<4x64xf32>
    %cst_25 = arith.constant dense<0.000000e+00> : vector<4x128xf32>
    %107 = tpu.matmul %106, %6, %cst_25 {dimension_numbers = #tpu.dot_dimension_numbers<[1], [0], [0], [1], [0, 0, 1, 1], [], []>} : vector<4x64xf32>, vector<64x128xf32>, vector<4x128xf32> -> vector<4x128xf32>
    %108 = arith.addf %101, %107 : vector<4x128xf32>
    %109 = arith.negf %108 : vector<4x128xf32>
    %110 = math.exp %109 : vector<4x128xf32>
    %cst_26 = arith.constant 1.000000e+00 : f32
    %111 = vector.broadcast %cst_26 : f32 to vector<4x128xf32>
    %112 = arith.addf %111, %110 : vector<4x128xf32>
    %113 = arith.divf %111, %112 : vector<4x128xf32>
    %114 = vector.extract_strided_slice %113 {offsets = [0, 0], sizes = [4, 32], strides = [1, 1]} : vector<4x128xf32> to vector<4x32xf32>
    %115 = vector.extract_strided_slice %113 {offsets = [0, 32], sizes = [4, 32], strides = [1, 1]} : vector<4x128xf32> to vector<4x32xf32>
    %116 = vector.extract_strided_slice %113 {offsets = [0, 96], sizes = [4, 32], strides = [1, 1]} : vector<4x128xf32> to vector<4x32xf32>
    %117 = vector.extract_strided_slice %108 {offsets = [0, 64], sizes = [4, 32], strides = [1, 1]} : vector<4x128xf32> to vector<4x32xf32>
    %118 = math.tanh %117 : vector<4x32xf32>
    %119 = arith.mulf %115, %94 : vector<4x32xf32>
    %120 = arith.mulf %114, %118 : vector<4x32xf32>
    %121 = arith.addf %119, %120 : vector<4x32xf32>
    %122 = math.tanh %121 : vector<4x32xf32>
    %123 = arith.mulf %116, %122 : vector<4x32xf32>
    %124 = vector.extract_strided_slice %123 {offsets = [0, 0], sizes = [2, 32], strides = [1, 1]} : vector<4x32xf32> to vector<2x32xf32>
    %125 = vector.extract_strided_slice %123 {offsets = [2, 0], sizes = [2, 32], strides = [1, 1]} : vector<4x32xf32> to vector<2x32xf32>
    %126 = vector.extract_strided_slice %5 {offsets = [8, 0], sizes = [2, 128], strides = [1, 1]} : vector<16x256xf32> to vector<2x128xf32>
    %127 = vector.extract_strided_slice %5 {offsets = [6, 128], sizes = [2, 128], strides = [1, 1]} : vector<16x256xf32> to vector<2x128xf32>
    %128 = tpu.concatenate %126, %127 in 0 : vector<2x128xf32>, vector<2x128xf32> -> vector<4x128xf32>
    %129 = vector.extract_strided_slice %123 {offsets = [0, 0], sizes = [2, 32], strides = [1, 1]} : vector<4x32xf32> to vector<2x32xf32>
    %130 = tpu.concatenate %129, %17 in 1 : vector<2x32xf32>, vector<2x32xf32> -> vector<2x64xf32>
    %131 = vector.extract_strided_slice %123 {offsets = [2, 0], sizes = [2, 32], strides = [1, 1]} : vector<4x32xf32> to vector<2x32xf32>
    %132 = tpu.concatenate %17, %131 in 1 : vector<2x32xf32>, vector<2x32xf32> -> vector<2x64xf32>
    %133 = tpu.concatenate %130, %132 in 0 : vector<2x64xf32>, vector<2x64xf32> -> vector<4x64xf32>
    %cst_27 = arith.constant dense<0.000000e+00> : vector<4x128xf32>
    %134 = tpu.matmul %133, %6, %cst_27 {dimension_numbers = #tpu.dot_dimension_numbers<[1], [0], [0], [1], [0, 0, 1, 1], [], []>} : vector<4x64xf32>, vector<64x128xf32>, vector<4x128xf32> -> vector<4x128xf32>
    %135 = arith.addf %128, %134 : vector<4x128xf32>
    %136 = arith.negf %135 : vector<4x128xf32>
    %137 = math.exp %136 : vector<4x128xf32>
    %cst_28 = arith.constant 1.000000e+00 : f32
    %138 = vector.broadcast %cst_28 : f32 to vector<4x128xf32>
    %139 = arith.addf %138, %137 : vector<4x128xf32>
    %140 = arith.divf %138, %139 : vector<4x128xf32>
    %141 = vector.extract_strided_slice %140 {offsets = [0, 0], sizes = [4, 32], strides = [1, 1]} : vector<4x128xf32> to vector<4x32xf32>
    %142 = vector.extract_strided_slice %140 {offsets = [0, 32], sizes = [4, 32], strides = [1, 1]} : vector<4x128xf32> to vector<4x32xf32>
    %143 = vector.extract_strided_slice %140 {offsets = [0, 96], sizes = [4, 32], strides = [1, 1]} : vector<4x128xf32> to vector<4x32xf32>
    %144 = vector.extract_strided_slice %135 {offsets = [0, 64], sizes = [4, 32], strides = [1, 1]} : vector<4x128xf32> to vector<4x32xf32>
    %145 = math.tanh %144 : vector<4x32xf32>
    %146 = arith.mulf %142, %121 : vector<4x32xf32>
    %147 = arith.mulf %141, %145 : vector<4x32xf32>
    %148 = arith.addf %146, %147 : vector<4x32xf32>
    %149 = math.tanh %148 : vector<4x32xf32>
    %150 = arith.mulf %143, %149 : vector<4x32xf32>
    %151 = vector.extract_strided_slice %150 {offsets = [0, 0], sizes = [2, 32], strides = [1, 1]} : vector<4x32xf32> to vector<2x32xf32>
    %152 = vector.extract_strided_slice %150 {offsets = [2, 0], sizes = [2, 32], strides = [1, 1]} : vector<4x32xf32> to vector<2x32xf32>
    %153 = vector.extract_strided_slice %5 {offsets = [10, 0], sizes = [2, 128], strides = [1, 1]} : vector<16x256xf32> to vector<2x128xf32>
    %154 = vector.extract_strided_slice %5 {offsets = [4, 128], sizes = [2, 128], strides = [1, 1]} : vector<16x256xf32> to vector<2x128xf32>
    %155 = tpu.concatenate %153, %154 in 0 : vector<2x128xf32>, vector<2x128xf32> -> vector<4x128xf32>
    %156 = vector.extract_strided_slice %150 {offsets = [0, 0], sizes = [2, 32], strides = [1, 1]} : vector<4x32xf32> to vector<2x32xf32>
    %157 = tpu.concatenate %156, %17 in 1 : vector<2x32xf32>, vector<2x32xf32> -> vector<2x64xf32>
    %158 = vector.extract_strided_slice %150 {offsets = [2, 0], sizes = [2, 32], strides = [1, 1]} : vector<4x32xf32> to vector<2x32xf32>
    %159 = tpu.concatenate %17, %158 in 1 : vector<2x32xf32>, vector<2x32xf32> -> vector<2x64xf32>
    %160 = tpu.concatenate %157, %159 in 0 : vector<2x64xf32>, vector<2x64xf32> -> vector<4x64xf32>
    %cst_29 = arith.constant dense<0.000000e+00> : vector<4x128xf32>
    %161 = tpu.matmul %160, %6, %cst_29 {dimension_numbers = #tpu.dot_dimension_numbers<[1], [0], [0], [1], [0, 0, 1, 1], [], []>} : vector<4x64xf32>, vector<64x128xf32>, vector<4x128xf32> -> vector<4x128xf32>
    %162 = arith.addf %155, %161 : vector<4x128xf32>
    %163 = arith.negf %162 : vector<4x128xf32>
    %164 = math.exp %163 : vector<4x128xf32>
    %cst_30 = arith.constant 1.000000e+00 : f32
    %165 = vector.broadcast %cst_30 : f32 to vector<4x128xf32>
    %166 = arith.addf %165, %164 : vector<4x128xf32>
    %167 = arith.divf %165, %166 : vector<4x128xf32>
    %168 = vector.extract_strided_slice %167 {offsets = [0, 0], sizes = [4, 32], strides = [1, 1]} : vector<4x128xf32> to vector<4x32xf32>
    %169 = vector.extract_strided_slice %167 {offsets = [0, 32], sizes = [4, 32], strides = [1, 1]} : vector<4x128xf32> to vector<4x32xf32>
    %170 = vector.extract_strided_slice %167 {offsets = [0, 96], sizes = [4, 32], strides = [1, 1]} : vector<4x128xf32> to vector<4x32xf32>
    %171 = vector.extract_strided_slice %162 {offsets = [0, 64], sizes = [4, 32], strides = [1, 1]} : vector<4x128xf32> to vector<4x32xf32>
    %172 = math.tanh %171 : vector<4x32xf32>
    %173 = arith.mulf %169, %148 : vector<4x32xf32>
    %174 = arith.mulf %168, %172 : vector<4x32xf32>
    %175 = arith.addf %173, %174 : vector<4x32xf32>
    %176 = math.tanh %175 : vector<4x32xf32>
    %177 = arith.mulf %170, %176 : vector<4x32xf32>
    %178 = vector.extract_strided_slice %177 {offsets = [0, 0], sizes = [2, 32], strides = [1, 1]} : vector<4x32xf32> to vector<2x32xf32>
    %179 = vector.extract_strided_slice %177 {offsets = [2, 0], sizes = [2, 32], strides = [1, 1]} : vector<4x32xf32> to vector<2x32xf32>
    %180 = vector.extract_strided_slice %5 {offsets = [12, 0], sizes = [2, 128], strides = [1, 1]} : vector<16x256xf32> to vector<2x128xf32>
    %181 = vector.extract_strided_slice %5 {offsets = [2, 128], sizes = [2, 128], strides = [1, 1]} : vector<16x256xf32> to vector<2x128xf32>
    %182 = tpu.concatenate %180, %181 in 0 : vector<2x128xf32>, vector<2x128xf32> -> vector<4x128xf32>
    %183 = vector.extract_strided_slice %177 {offsets = [0, 0], sizes = [2, 32], strides = [1, 1]} : vector<4x32xf32> to vector<2x32xf32>
    %184 = tpu.concatenate %183, %17 in 1 : vector<2x32xf32>, vector<2x32xf32> -> vector<2x64xf32>
    %185 = vector.extract_strided_slice %177 {offsets = [2, 0], sizes = [2, 32], strides = [1, 1]} : vector<4x32xf32> to vector<2x32xf32>
    %186 = tpu.concatenate %17, %185 in 1 : vector<2x32xf32>, vector<2x32xf32> -> vector<2x64xf32>
    %187 = tpu.concatenate %184, %186 in 0 : vector<2x64xf32>, vector<2x64xf32> -> vector<4x64xf32>
    %cst_31 = arith.constant dense<0.000000e+00> : vector<4x128xf32>
    %188 = tpu.matmul %187, %6, %cst_31 {dimension_numbers = #tpu.dot_dimension_numbers<[1], [0], [0], [1], [0, 0, 1, 1], [], []>} : vector<4x64xf32>, vector<64x128xf32>, vector<4x128xf32> -> vector<4x128xf32>
    %189 = arith.addf %182, %188 : vector<4x128xf32>
    %190 = arith.negf %189 : vector<4x128xf32>
    %191 = math.exp %190 : vector<4x128xf32>
    %cst_32 = arith.constant 1.000000e+00 : f32
    %192 = vector.broadcast %cst_32 : f32 to vector<4x128xf32>
    %193 = arith.addf %192, %191 : vector<4x128xf32>
    %194 = arith.divf %192, %193 : vector<4x128xf32>
    %195 = vector.extract_strided_slice %194 {offsets = [0, 0], sizes = [4, 32], strides = [1, 1]} : vector<4x128xf32> to vector<4x32xf32>
    %196 = vector.extract_strided_slice %194 {offsets = [0, 32], sizes = [4, 32], strides = [1, 1]} : vector<4x128xf32> to vector<4x32xf32>
    %197 = vector.extract_strided_slice %194 {offsets = [0, 96], sizes = [4, 32], strides = [1, 1]} : vector<4x128xf32> to vector<4x32xf32>
    %198 = vector.extract_strided_slice %189 {offsets = [0, 64], sizes = [4, 32], strides = [1, 1]} : vector<4x128xf32> to vector<4x32xf32>
    %199 = math.tanh %198 : vector<4x32xf32>
    %200 = arith.mulf %196, %175 : vector<4x32xf32>
    %201 = arith.mulf %195, %199 : vector<4x32xf32>
    %202 = arith.addf %200, %201 : vector<4x32xf32>
    %203 = math.tanh %202 : vector<4x32xf32>
    %204 = arith.mulf %197, %203 : vector<4x32xf32>
    %205 = vector.extract_strided_slice %204 {offsets = [0, 0], sizes = [2, 32], strides = [1, 1]} : vector<4x32xf32> to vector<2x32xf32>
    %206 = vector.extract_strided_slice %204 {offsets = [2, 0], sizes = [2, 32], strides = [1, 1]} : vector<4x32xf32> to vector<2x32xf32>
    %207 = vector.extract_strided_slice %5 {offsets = [14, 0], sizes = [2, 128], strides = [1, 1]} : vector<16x256xf32> to vector<2x128xf32>
    %208 = vector.extract_strided_slice %5 {offsets = [0, 128], sizes = [2, 128], strides = [1, 1]} : vector<16x256xf32> to vector<2x128xf32>
    %209 = tpu.concatenate %207, %208 in 0 : vector<2x128xf32>, vector<2x128xf32> -> vector<4x128xf32>
    %210 = vector.extract_strided_slice %204 {offsets = [0, 0], sizes = [2, 32], strides = [1, 1]} : vector<4x32xf32> to vector<2x32xf32>
    %211 = tpu.concatenate %210, %17 in 1 : vector<2x32xf32>, vector<2x32xf32> -> vector<2x64xf32>
    %212 = vector.extract_strided_slice %204 {offsets = [2, 0], sizes = [2, 32], strides = [1, 1]} : vector<4x32xf32> to vector<2x32xf32>
    %213 = tpu.concatenate %17, %212 in 1 : vector<2x32xf32>, vector<2x32xf32> -> vector<2x64xf32>
    %214 = tpu.concatenate %211, %213 in 0 : vector<2x64xf32>, vector<2x64xf32> -> vector<4x64xf32>
    %cst_33 = arith.constant dense<0.000000e+00> : vector<4x128xf32>
    %215 = tpu.matmul %214, %6, %cst_33 {dimension_numbers = #tpu.dot_dimension_numbers<[1], [0], [0], [1], [0, 0, 1, 1], [], []>} : vector<4x64xf32>, vector<64x128xf32>, vector<4x128xf32> -> vector<4x128xf32>
    %216 = arith.addf %209, %215 : vector<4x128xf32>
    %217 = arith.negf %216 : vector<4x128xf32>
    %218 = math.exp %217 : vector<4x128xf32>
    %cst_34 = arith.constant 1.000000e+00 : f32
    %219 = vector.broadcast %cst_34 : f32 to vector<4x128xf32>
    %220 = arith.addf %219, %218 : vector<4x128xf32>
    %221 = arith.divf %219, %220 : vector<4x128xf32>
    %222 = vector.extract_strided_slice %221 {offsets = [0, 0], sizes = [4, 32], strides = [1, 1]} : vector<4x128xf32> to vector<4x32xf32>
    %223 = vector.extract_strided_slice %221 {offsets = [0, 32], sizes = [4, 32], strides = [1, 1]} : vector<4x128xf32> to vector<4x32xf32>
    %224 = vector.extract_strided_slice %221 {offsets = [0, 96], sizes = [4, 32], strides = [1, 1]} : vector<4x128xf32> to vector<4x32xf32>
    %225 = vector.extract_strided_slice %216 {offsets = [0, 64], sizes = [4, 32], strides = [1, 1]} : vector<4x128xf32> to vector<4x32xf32>
    %226 = math.tanh %225 : vector<4x32xf32>
    %227 = arith.mulf %223, %202 : vector<4x32xf32>
    %228 = arith.mulf %222, %226 : vector<4x32xf32>
    %229 = arith.addf %227, %228 : vector<4x32xf32>
    %230 = math.tanh %229 : vector<4x32xf32>
    %231 = arith.mulf %224, %230 : vector<4x32xf32>
    %232 = vector.extract_strided_slice %231 {offsets = [0, 0], sizes = [2, 32], strides = [1, 1]} : vector<4x32xf32> to vector<2x32xf32>
    %233 = vector.extract_strided_slice %231 {offsets = [2, 0], sizes = [2, 32], strides = [1, 1]} : vector<4x32xf32> to vector<2x32xf32>
    %234 = tpu.concatenate %43, %70, %97, %124, %151, %178, %205, %232 in 0 : vector<2x32xf32>, vector<2x32xf32>, vector<2x32xf32>, vector<2x32xf32>, vector<2x32xf32>, vector<2x32xf32>, vector<2x32xf32>, vector<2x32xf32> -> vector<16x32xf32>
    %235 = tpu.concatenate %233, %206, %179, %152, %125, %98, %71, %44 in 0 : vector<2x32xf32>, vector<2x32xf32>, vector<2x32xf32>, vector<2x32xf32>, vector<2x32xf32>, vector<2x32xf32>, vector<2x32xf32>, vector<2x32xf32> -> vector<16x32xf32>
    %236 = tpu.concatenate %234, %235 in 1 : vector<16x32xf32>, vector<16x32xf32> -> vector<16x64xf32>
    %237 = vector.extract_strided_slice %231 {offsets = [0, 0], sizes = [2, 32], strides = [1, 1]} : vector<4x32xf32> to vector<2x32xf32>
    %238 = vector.extract_strided_slice %231 {offsets = [2, 0], sizes = [2, 32], strides = [1, 1]} : vector<4x32xf32> to vector<2x32xf32>
    %239 = vector.extract_strided_slice %229 {offsets = [0, 0], sizes = [2, 32], strides = [1, 1]} : vector<4x32xf32> to vector<2x32xf32>
    %240 = vector.extract_strided_slice %229 {offsets = [2, 0], sizes = [2, 32], strides = [1, 1]} : vector<4x32xf32> to vector<2x32xf32>
    %241 = arith.truncf %236 : vector<16x64xf32> to vector<16x64xbf16>
    %c0_35 = arith.constant 0 : index
    %c0_36 = arith.constant 0 : index
    %242 = vector.load %arg6[%c0_35, %c0_36] : memref<64x256xbf16, #tpu.memory_space<vmem>>, vector<64x256xbf16>
    %cst_37 = arith.constant dense<0.000000e+00> : vector<16x256xf32>
    %243 = tpu.matmul %241, %242, %cst_37 {dimension_numbers = #tpu.dot_dimension_numbers<[1], [0], [0], [1], [0, 0, 1, 1], [], []>} : vector<16x64xbf16>, vector<64x256xbf16>, vector<16x256xf32> -> vector<16x256xf32>
    %c0_38 = arith.constant 0 : index
    %c0_39 = arith.constant 0 : index
    %244 = vector.load %arg7[%c0_38, %c0_39] : memref<1x256xf32, #tpu.memory_space<vmem>>, vector<1x256xf32>
    %245 = vector.broadcast %244 : vector<1x256xf32> to vector<16x256xf32>
    %246 = arith.addf %243, %245 : vector<16x256xf32>
    %c0_40 = arith.constant 0 : index
    %c0_41 = arith.constant 0 : index
    %247 = vector.load %arg8[%c0_40, %c0_41] : memref<64x128xf32, #tpu.memory_space<vmem>>, vector<64x128xf32>
    %c2 = arith.constant 2 : index
    %c0_42 = arith.constant 0 : index
    %c0_43 = arith.constant 0 : index
    %248 = vector.load %arg1[%c2, %c0_42, %c0_43] : memref<4x2x32xf32, #tpu.memory_space<vmem>>, vector<1x2x32xf32>
    %249 = vector.shape_cast %248 : vector<1x2x32xf32> to vector<2x32xf32>
    %c3 = arith.constant 3 : index
    %c0_44 = arith.constant 0 : index
    %c0_45 = arith.constant 0 : index
    %250 = vector.load %arg1[%c3, %c0_44, %c0_45] : memref<4x2x32xf32, #tpu.memory_space<vmem>>, vector<1x2x32xf32>
    %251 = vector.shape_cast %250 : vector<1x2x32xf32> to vector<2x32xf32>
    %252 = tpu.concatenate %249, %251 in 0 : vector<2x32xf32>, vector<2x32xf32> -> vector<4x32xf32>
    %c2_46 = arith.constant 2 : index
    %c0_47 = arith.constant 0 : index
    %c0_48 = arith.constant 0 : index
    %253 = vector.load %arg2[%c2_46, %c0_47, %c0_48] : memref<4x2x32xf32, #tpu.memory_space<vmem>>, vector<1x2x32xf32>
    %254 = vector.shape_cast %253 : vector<1x2x32xf32> to vector<2x32xf32>
    %c3_49 = arith.constant 3 : index
    %c0_50 = arith.constant 0 : index
    %c0_51 = arith.constant 0 : index
    %255 = vector.load %arg2[%c3_49, %c0_50, %c0_51] : memref<4x2x32xf32, #tpu.memory_space<vmem>>, vector<1x2x32xf32>
    %256 = vector.shape_cast %255 : vector<1x2x32xf32> to vector<2x32xf32>
    %257 = tpu.concatenate %254, %256 in 0 : vector<2x32xf32>, vector<2x32xf32> -> vector<4x32xf32>
    %cst_52 = arith.constant 0.000000e+00 : f32
    %258 = vector.broadcast %cst_52 : f32 to vector<2x32xf32>
    %259 = vector.extract_strided_slice %246 {offsets = [0, 0], sizes = [2, 128], strides = [1, 1]} : vector<16x256xf32> to vector<2x128xf32>
    %260 = vector.extract_strided_slice %246 {offsets = [14, 128], sizes = [2, 128], strides = [1, 1]} : vector<16x256xf32> to vector<2x128xf32>
    %261 = tpu.concatenate %259, %260 in 0 : vector<2x128xf32>, vector<2x128xf32> -> vector<4x128xf32>
    %262 = vector.extract_strided_slice %252 {offsets = [0, 0], sizes = [2, 32], strides = [1, 1]} : vector<4x32xf32> to vector<2x32xf32>
    %263 = tpu.concatenate %262, %258 in 1 : vector<2x32xf32>, vector<2x32xf32> -> vector<2x64xf32>
    %264 = vector.extract_strided_slice %252 {offsets = [2, 0], sizes = [2, 32], strides = [1, 1]} : vector<4x32xf32> to vector<2x32xf32>
    %265 = tpu.concatenate %258, %264 in 1 : vector<2x32xf32>, vector<2x32xf32> -> vector<2x64xf32>
    %266 = tpu.concatenate %263, %265 in 0 : vector<2x64xf32>, vector<2x64xf32> -> vector<4x64xf32>
    %cst_53 = arith.constant dense<0.000000e+00> : vector<4x128xf32>
    %267 = tpu.matmul %266, %247, %cst_53 {dimension_numbers = #tpu.dot_dimension_numbers<[1], [0], [0], [1], [0, 0, 1, 1], [], []>} : vector<4x64xf32>, vector<64x128xf32>, vector<4x128xf32> -> vector<4x128xf32>
    %268 = arith.addf %261, %267 : vector<4x128xf32>
    %269 = arith.negf %268 : vector<4x128xf32>
    %270 = math.exp %269 : vector<4x128xf32>
    %cst_54 = arith.constant 1.000000e+00 : f32
    %271 = vector.broadcast %cst_54 : f32 to vector<4x128xf32>
    %272 = arith.addf %271, %270 : vector<4x128xf32>
    %273 = arith.divf %271, %272 : vector<4x128xf32>
    %274 = vector.extract_strided_slice %273 {offsets = [0, 0], sizes = [4, 32], strides = [1, 1]} : vector<4x128xf32> to vector<4x32xf32>
    %275 = vector.extract_strided_slice %273 {offsets = [0, 32], sizes = [4, 32], strides = [1, 1]} : vector<4x128xf32> to vector<4x32xf32>
    %276 = vector.extract_strided_slice %273 {offsets = [0, 96], sizes = [4, 32], strides = [1, 1]} : vector<4x128xf32> to vector<4x32xf32>
    %277 = vector.extract_strided_slice %268 {offsets = [0, 64], sizes = [4, 32], strides = [1, 1]} : vector<4x128xf32> to vector<4x32xf32>
    %278 = math.tanh %277 : vector<4x32xf32>
    %279 = arith.mulf %275, %257 : vector<4x32xf32>
    %280 = arith.mulf %274, %278 : vector<4x32xf32>
    %281 = arith.addf %279, %280 : vector<4x32xf32>
    %282 = math.tanh %281 : vector<4x32xf32>
    %283 = arith.mulf %276, %282 : vector<4x32xf32>
    %284 = vector.extract_strided_slice %283 {offsets = [0, 0], sizes = [2, 32], strides = [1, 1]} : vector<4x32xf32> to vector<2x32xf32>
    %285 = vector.extract_strided_slice %283 {offsets = [2, 0], sizes = [2, 32], strides = [1, 1]} : vector<4x32xf32> to vector<2x32xf32>
    %286 = vector.extract_strided_slice %246 {offsets = [2, 0], sizes = [2, 128], strides = [1, 1]} : vector<16x256xf32> to vector<2x128xf32>
    %287 = vector.extract_strided_slice %246 {offsets = [12, 128], sizes = [2, 128], strides = [1, 1]} : vector<16x256xf32> to vector<2x128xf32>
    %288 = tpu.concatenate %286, %287 in 0 : vector<2x128xf32>, vector<2x128xf32> -> vector<4x128xf32>
    %289 = vector.extract_strided_slice %283 {offsets = [0, 0], sizes = [2, 32], strides = [1, 1]} : vector<4x32xf32> to vector<2x32xf32>
    %290 = tpu.concatenate %289, %258 in 1 : vector<2x32xf32>, vector<2x32xf32> -> vector<2x64xf32>
    %291 = vector.extract_strided_slice %283 {offsets = [2, 0], sizes = [2, 32], strides = [1, 1]} : vector<4x32xf32> to vector<2x32xf32>
    %292 = tpu.concatenate %258, %291 in 1 : vector<2x32xf32>, vector<2x32xf32> -> vector<2x64xf32>
    %293 = tpu.concatenate %290, %292 in 0 : vector<2x64xf32>, vector<2x64xf32> -> vector<4x64xf32>
    %cst_55 = arith.constant dense<0.000000e+00> : vector<4x128xf32>
    %294 = tpu.matmul %293, %247, %cst_55 {dimension_numbers = #tpu.dot_dimension_numbers<[1], [0], [0], [1], [0, 0, 1, 1], [], []>} : vector<4x64xf32>, vector<64x128xf32>, vector<4x128xf32> -> vector<4x128xf32>
    %295 = arith.addf %288, %294 : vector<4x128xf32>
    %296 = arith.negf %295 : vector<4x128xf32>
    %297 = math.exp %296 : vector<4x128xf32>
    %cst_56 = arith.constant 1.000000e+00 : f32
    %298 = vector.broadcast %cst_56 : f32 to vector<4x128xf32>
    %299 = arith.addf %298, %297 : vector<4x128xf32>
    %300 = arith.divf %298, %299 : vector<4x128xf32>
    %301 = vector.extract_strided_slice %300 {offsets = [0, 0], sizes = [4, 32], strides = [1, 1]} : vector<4x128xf32> to vector<4x32xf32>
    %302 = vector.extract_strided_slice %300 {offsets = [0, 32], sizes = [4, 32], strides = [1, 1]} : vector<4x128xf32> to vector<4x32xf32>
    %303 = vector.extract_strided_slice %300 {offsets = [0, 96], sizes = [4, 32], strides = [1, 1]} : vector<4x128xf32> to vector<4x32xf32>
    %304 = vector.extract_strided_slice %295 {offsets = [0, 64], sizes = [4, 32], strides = [1, 1]} : vector<4x128xf32> to vector<4x32xf32>
    %305 = math.tanh %304 : vector<4x32xf32>
    %306 = arith.mulf %302, %281 : vector<4x32xf32>
    %307 = arith.mulf %301, %305 : vector<4x32xf32>
    %308 = arith.addf %306, %307 : vector<4x32xf32>
    %309 = math.tanh %308 : vector<4x32xf32>
    %310 = arith.mulf %303, %309 : vector<4x32xf32>
    %311 = vector.extract_strided_slice %310 {offsets = [0, 0], sizes = [2, 32], strides = [1, 1]} : vector<4x32xf32> to vector<2x32xf32>
    %312 = vector.extract_strided_slice %310 {offsets = [2, 0], sizes = [2, 32], strides = [1, 1]} : vector<4x32xf32> to vector<2x32xf32>
    %313 = vector.extract_strided_slice %246 {offsets = [4, 0], sizes = [2, 128], strides = [1, 1]} : vector<16x256xf32> to vector<2x128xf32>
    %314 = vector.extract_strided_slice %246 {offsets = [10, 128], sizes = [2, 128], strides = [1, 1]} : vector<16x256xf32> to vector<2x128xf32>
    %315 = tpu.concatenate %313, %314 in 0 : vector<2x128xf32>, vector<2x128xf32> -> vector<4x128xf32>
    %316 = vector.extract_strided_slice %310 {offsets = [0, 0], sizes = [2, 32], strides = [1, 1]} : vector<4x32xf32> to vector<2x32xf32>
    %317 = tpu.concatenate %316, %258 in 1 : vector<2x32xf32>, vector<2x32xf32> -> vector<2x64xf32>
    %318 = vector.extract_strided_slice %310 {offsets = [2, 0], sizes = [2, 32], strides = [1, 1]} : vector<4x32xf32> to vector<2x32xf32>
    %319 = tpu.concatenate %258, %318 in 1 : vector<2x32xf32>, vector<2x32xf32> -> vector<2x64xf32>
    %320 = tpu.concatenate %317, %319 in 0 : vector<2x64xf32>, vector<2x64xf32> -> vector<4x64xf32>
    %cst_57 = arith.constant dense<0.000000e+00> : vector<4x128xf32>
    %321 = tpu.matmul %320, %247, %cst_57 {dimension_numbers = #tpu.dot_dimension_numbers<[1], [0], [0], [1], [0, 0, 1, 1], [], []>} : vector<4x64xf32>, vector<64x128xf32>, vector<4x128xf32> -> vector<4x128xf32>
    %322 = arith.addf %315, %321 : vector<4x128xf32>
    %323 = arith.negf %322 : vector<4x128xf32>
    %324 = math.exp %323 : vector<4x128xf32>
    %cst_58 = arith.constant 1.000000e+00 : f32
    %325 = vector.broadcast %cst_58 : f32 to vector<4x128xf32>
    %326 = arith.addf %325, %324 : vector<4x128xf32>
    %327 = arith.divf %325, %326 : vector<4x128xf32>
    %328 = vector.extract_strided_slice %327 {offsets = [0, 0], sizes = [4, 32], strides = [1, 1]} : vector<4x128xf32> to vector<4x32xf32>
    %329 = vector.extract_strided_slice %327 {offsets = [0, 32], sizes = [4, 32], strides = [1, 1]} : vector<4x128xf32> to vector<4x32xf32>
    %330 = vector.extract_strided_slice %327 {offsets = [0, 96], sizes = [4, 32], strides = [1, 1]} : vector<4x128xf32> to vector<4x32xf32>
    %331 = vector.extract_strided_slice %322 {offsets = [0, 64], sizes = [4, 32], strides = [1, 1]} : vector<4x128xf32> to vector<4x32xf32>
    %332 = math.tanh %331 : vector<4x32xf32>
    %333 = arith.mulf %329, %308 : vector<4x32xf32>
    %334 = arith.mulf %328, %332 : vector<4x32xf32>
    %335 = arith.addf %333, %334 : vector<4x32xf32>
    %336 = math.tanh %335 : vector<4x32xf32>
    %337 = arith.mulf %330, %336 : vector<4x32xf32>
    %338 = vector.extract_strided_slice %337 {offsets = [0, 0], sizes = [2, 32], strides = [1, 1]} : vector<4x32xf32> to vector<2x32xf32>
    %339 = vector.extract_strided_slice %337 {offsets = [2, 0], sizes = [2, 32], strides = [1, 1]} : vector<4x32xf32> to vector<2x32xf32>
    %340 = vector.extract_strided_slice %246 {offsets = [6, 0], sizes = [2, 128], strides = [1, 1]} : vector<16x256xf32> to vector<2x128xf32>
    %341 = vector.extract_strided_slice %246 {offsets = [8, 128], sizes = [2, 128], strides = [1, 1]} : vector<16x256xf32> to vector<2x128xf32>
    %342 = tpu.concatenate %340, %341 in 0 : vector<2x128xf32>, vector<2x128xf32> -> vector<4x128xf32>
    %343 = vector.extract_strided_slice %337 {offsets = [0, 0], sizes = [2, 32], strides = [1, 1]} : vector<4x32xf32> to vector<2x32xf32>
    %344 = tpu.concatenate %343, %258 in 1 : vector<2x32xf32>, vector<2x32xf32> -> vector<2x64xf32>
    %345 = vector.extract_strided_slice %337 {offsets = [2, 0], sizes = [2, 32], strides = [1, 1]} : vector<4x32xf32> to vector<2x32xf32>
    %346 = tpu.concatenate %258, %345 in 1 : vector<2x32xf32>, vector<2x32xf32> -> vector<2x64xf32>
    %347 = tpu.concatenate %344, %346 in 0 : vector<2x64xf32>, vector<2x64xf32> -> vector<4x64xf32>
    %cst_59 = arith.constant dense<0.000000e+00> : vector<4x128xf32>
    %348 = tpu.matmul %347, %247, %cst_59 {dimension_numbers = #tpu.dot_dimension_numbers<[1], [0], [0], [1], [0, 0, 1, 1], [], []>} : vector<4x64xf32>, vector<64x128xf32>, vector<4x128xf32> -> vector<4x128xf32>
    %349 = arith.addf %342, %348 : vector<4x128xf32>
    %350 = arith.negf %349 : vector<4x128xf32>
    %351 = math.exp %350 : vector<4x128xf32>
    %cst_60 = arith.constant 1.000000e+00 : f32
    %352 = vector.broadcast %cst_60 : f32 to vector<4x128xf32>
    %353 = arith.addf %352, %351 : vector<4x128xf32>
    %354 = arith.divf %352, %353 : vector<4x128xf32>
    %355 = vector.extract_strided_slice %354 {offsets = [0, 0], sizes = [4, 32], strides = [1, 1]} : vector<4x128xf32> to vector<4x32xf32>
    %356 = vector.extract_strided_slice %354 {offsets = [0, 32], sizes = [4, 32], strides = [1, 1]} : vector<4x128xf32> to vector<4x32xf32>
    %357 = vector.extract_strided_slice %354 {offsets = [0, 96], sizes = [4, 32], strides = [1, 1]} : vector<4x128xf32> to vector<4x32xf32>
    %358 = vector.extract_strided_slice %349 {offsets = [0, 64], sizes = [4, 32], strides = [1, 1]} : vector<4x128xf32> to vector<4x32xf32>
    %359 = math.tanh %358 : vector<4x32xf32>
    %360 = arith.mulf %356, %335 : vector<4x32xf32>
    %361 = arith.mulf %355, %359 : vector<4x32xf32>
    %362 = arith.addf %360, %361 : vector<4x32xf32>
    %363 = math.tanh %362 : vector<4x32xf32>
    %364 = arith.mulf %357, %363 : vector<4x32xf32>
    %365 = vector.extract_strided_slice %364 {offsets = [0, 0], sizes = [2, 32], strides = [1, 1]} : vector<4x32xf32> to vector<2x32xf32>
    %366 = vector.extract_strided_slice %364 {offsets = [2, 0], sizes = [2, 32], strides = [1, 1]} : vector<4x32xf32> to vector<2x32xf32>
    %367 = vector.extract_strided_slice %246 {offsets = [8, 0], sizes = [2, 128], strides = [1, 1]} : vector<16x256xf32> to vector<2x128xf32>
    %368 = vector.extract_strided_slice %246 {offsets = [6, 128], sizes = [2, 128], strides = [1, 1]} : vector<16x256xf32> to vector<2x128xf32>
    %369 = tpu.concatenate %367, %368 in 0 : vector<2x128xf32>, vector<2x128xf32> -> vector<4x128xf32>
    %370 = vector.extract_strided_slice %364 {offsets = [0, 0], sizes = [2, 32], strides = [1, 1]} : vector<4x32xf32> to vector<2x32xf32>
    %371 = tpu.concatenate %370, %258 in 1 : vector<2x32xf32>, vector<2x32xf32> -> vector<2x64xf32>
    %372 = vector.extract_strided_slice %364 {offsets = [2, 0], sizes = [2, 32], strides = [1, 1]} : vector<4x32xf32> to vector<2x32xf32>
    %373 = tpu.concatenate %258, %372 in 1 : vector<2x32xf32>, vector<2x32xf32> -> vector<2x64xf32>
    %374 = tpu.concatenate %371, %373 in 0 : vector<2x64xf32>, vector<2x64xf32> -> vector<4x64xf32>
    %cst_61 = arith.constant dense<0.000000e+00> : vector<4x128xf32>
    %375 = tpu.matmul %374, %247, %cst_61 {dimension_numbers = #tpu.dot_dimension_numbers<[1], [0], [0], [1], [0, 0, 1, 1], [], []>} : vector<4x64xf32>, vector<64x128xf32>, vector<4x128xf32> -> vector<4x128xf32>
    %376 = arith.addf %369, %375 : vector<4x128xf32>
    %377 = arith.negf %376 : vector<4x128xf32>
    %378 = math.exp %377 : vector<4x128xf32>
    %cst_62 = arith.constant 1.000000e+00 : f32
    %379 = vector.broadcast %cst_62 : f32 to vector<4x128xf32>
    %380 = arith.addf %379, %378 : vector<4x128xf32>
    %381 = arith.divf %379, %380 : vector<4x128xf32>
    %382 = vector.extract_strided_slice %381 {offsets = [0, 0], sizes = [4, 32], strides = [1, 1]} : vector<4x128xf32> to vector<4x32xf32>
    %383 = vector.extract_strided_slice %381 {offsets = [0, 32], sizes = [4, 32], strides = [1, 1]} : vector<4x128xf32> to vector<4x32xf32>
    %384 = vector.extract_strided_slice %381 {offsets = [0, 96], sizes = [4, 32], strides = [1, 1]} : vector<4x128xf32> to vector<4x32xf32>
    %385 = vector.extract_strided_slice %376 {offsets = [0, 64], sizes = [4, 32], strides = [1, 1]} : vector<4x128xf32> to vector<4x32xf32>
    %386 = math.tanh %385 : vector<4x32xf32>
    %387 = arith.mulf %383, %362 : vector<4x32xf32>
    %388 = arith.mulf %382, %386 : vector<4x32xf32>
    %389 = arith.addf %387, %388 : vector<4x32xf32>
    %390 = math.tanh %389 : vector<4x32xf32>
    %391 = arith.mulf %384, %390 : vector<4x32xf32>
    %392 = vector.extract_strided_slice %391 {offsets = [0, 0], sizes = [2, 32], strides = [1, 1]} : vector<4x32xf32> to vector<2x32xf32>
    %393 = vector.extract_strided_slice %391 {offsets = [2, 0], sizes = [2, 32], strides = [1, 1]} : vector<4x32xf32> to vector<2x32xf32>
    %394 = vector.extract_strided_slice %246 {offsets = [10, 0], sizes = [2, 128], strides = [1, 1]} : vector<16x256xf32> to vector<2x128xf32>
    %395 = vector.extract_strided_slice %246 {offsets = [4, 128], sizes = [2, 128], strides = [1, 1]} : vector<16x256xf32> to vector<2x128xf32>
    %396 = tpu.concatenate %394, %395 in 0 : vector<2x128xf32>, vector<2x128xf32> -> vector<4x128xf32>
    %397 = vector.extract_strided_slice %391 {offsets = [0, 0], sizes = [2, 32], strides = [1, 1]} : vector<4x32xf32> to vector<2x32xf32>
    %398 = tpu.concatenate %397, %258 in 1 : vector<2x32xf32>, vector<2x32xf32> -> vector<2x64xf32>
    %399 = vector.extract_strided_slice %391 {offsets = [2, 0], sizes = [2, 32], strides = [1, 1]} : vector<4x32xf32> to vector<2x32xf32>
    %400 = tpu.concatenate %258, %399 in 1 : vector<2x32xf32>, vector<2x32xf32> -> vector<2x64xf32>
    %401 = tpu.concatenate %398, %400 in 0 : vector<2x64xf32>, vector<2x64xf32> -> vector<4x64xf32>
    %cst_63 = arith.constant dense<0.000000e+00> : vector<4x128xf32>
    %402 = tpu.matmul %401, %247, %cst_63 {dimension_numbers = #tpu.dot_dimension_numbers<[1], [0], [0], [1], [0, 0, 1, 1], [], []>} : vector<4x64xf32>, vector<64x128xf32>, vector<4x128xf32> -> vector<4x128xf32>
    %403 = arith.addf %396, %402 : vector<4x128xf32>
    %404 = arith.negf %403 : vector<4x128xf32>
    %405 = math.exp %404 : vector<4x128xf32>
    %cst_64 = arith.constant 1.000000e+00 : f32
    %406 = vector.broadcast %cst_64 : f32 to vector<4x128xf32>
    %407 = arith.addf %406, %405 : vector<4x128xf32>
    %408 = arith.divf %406, %407 : vector<4x128xf32>
    %409 = vector.extract_strided_slice %408 {offsets = [0, 0], sizes = [4, 32], strides = [1, 1]} : vector<4x128xf32> to vector<4x32xf32>
    %410 = vector.extract_strided_slice %408 {offsets = [0, 32], sizes = [4, 32], strides = [1, 1]} : vector<4x128xf32> to vector<4x32xf32>
    %411 = vector.extract_strided_slice %408 {offsets = [0, 96], sizes = [4, 32], strides = [1, 1]} : vector<4x128xf32> to vector<4x32xf32>
    %412 = vector.extract_strided_slice %403 {offsets = [0, 64], sizes = [4, 32], strides = [1, 1]} : vector<4x128xf32> to vector<4x32xf32>
    %413 = math.tanh %412 : vector<4x32xf32>
    %414 = arith.mulf %410, %389 : vector<4x32xf32>
    %415 = arith.mulf %409, %413 : vector<4x32xf32>
    %416 = arith.addf %414, %415 : vector<4x32xf32>
    %417 = math.tanh %416 : vector<4x32xf32>
    %418 = arith.mulf %411, %417 : vector<4x32xf32>
    %419 = vector.extract_strided_slice %418 {offsets = [0, 0], sizes = [2, 32], strides = [1, 1]} : vector<4x32xf32> to vector<2x32xf32>
    %420 = vector.extract_strided_slice %418 {offsets = [2, 0], sizes = [2, 32], strides = [1, 1]} : vector<4x32xf32> to vector<2x32xf32>
    %421 = vector.extract_strided_slice %246 {offsets = [12, 0], sizes = [2, 128], strides = [1, 1]} : vector<16x256xf32> to vector<2x128xf32>
    %422 = vector.extract_strided_slice %246 {offsets = [2, 128], sizes = [2, 128], strides = [1, 1]} : vector<16x256xf32> to vector<2x128xf32>
    %423 = tpu.concatenate %421, %422 in 0 : vector<2x128xf32>, vector<2x128xf32> -> vector<4x128xf32>
    %424 = vector.extract_strided_slice %418 {offsets = [0, 0], sizes = [2, 32], strides = [1, 1]} : vector<4x32xf32> to vector<2x32xf32>
    %425 = tpu.concatenate %424, %258 in 1 : vector<2x32xf32>, vector<2x32xf32> -> vector<2x64xf32>
    %426 = vector.extract_strided_slice %418 {offsets = [2, 0], sizes = [2, 32], strides = [1, 1]} : vector<4x32xf32> to vector<2x32xf32>
    %427 = tpu.concatenate %258, %426 in 1 : vector<2x32xf32>, vector<2x32xf32> -> vector<2x64xf32>
    %428 = tpu.concatenate %425, %427 in 0 : vector<2x64xf32>, vector<2x64xf32> -> vector<4x64xf32>
    %cst_65 = arith.constant dense<0.000000e+00> : vector<4x128xf32>
    %429 = tpu.matmul %428, %247, %cst_65 {dimension_numbers = #tpu.dot_dimension_numbers<[1], [0], [0], [1], [0, 0, 1, 1], [], []>} : vector<4x64xf32>, vector<64x128xf32>, vector<4x128xf32> -> vector<4x128xf32>
    %430 = arith.addf %423, %429 : vector<4x128xf32>
    %431 = arith.negf %430 : vector<4x128xf32>
    %432 = math.exp %431 : vector<4x128xf32>
    %cst_66 = arith.constant 1.000000e+00 : f32
    %433 = vector.broadcast %cst_66 : f32 to vector<4x128xf32>
    %434 = arith.addf %433, %432 : vector<4x128xf32>
    %435 = arith.divf %433, %434 : vector<4x128xf32>
    %436 = vector.extract_strided_slice %435 {offsets = [0, 0], sizes = [4, 32], strides = [1, 1]} : vector<4x128xf32> to vector<4x32xf32>
    %437 = vector.extract_strided_slice %435 {offsets = [0, 32], sizes = [4, 32], strides = [1, 1]} : vector<4x128xf32> to vector<4x32xf32>
    %438 = vector.extract_strided_slice %435 {offsets = [0, 96], sizes = [4, 32], strides = [1, 1]} : vector<4x128xf32> to vector<4x32xf32>
    %439 = vector.extract_strided_slice %430 {offsets = [0, 64], sizes = [4, 32], strides = [1, 1]} : vector<4x128xf32> to vector<4x32xf32>
    %440 = math.tanh %439 : vector<4x32xf32>
    %441 = arith.mulf %437, %416 : vector<4x32xf32>
    %442 = arith.mulf %436, %440 : vector<4x32xf32>
    %443 = arith.addf %441, %442 : vector<4x32xf32>
    %444 = math.tanh %443 : vector<4x32xf32>
    %445 = arith.mulf %438, %444 : vector<4x32xf32>
    %446 = vector.extract_strided_slice %445 {offsets = [0, 0], sizes = [2, 32], strides = [1, 1]} : vector<4x32xf32> to vector<2x32xf32>
    %447 = vector.extract_strided_slice %445 {offsets = [2, 0], sizes = [2, 32], strides = [1, 1]} : vector<4x32xf32> to vector<2x32xf32>
    %448 = vector.extract_strided_slice %246 {offsets = [14, 0], sizes = [2, 128], strides = [1, 1]} : vector<16x256xf32> to vector<2x128xf32>
    %449 = vector.extract_strided_slice %246 {offsets = [0, 128], sizes = [2, 128], strides = [1, 1]} : vector<16x256xf32> to vector<2x128xf32>
    %450 = tpu.concatenate %448, %449 in 0 : vector<2x128xf32>, vector<2x128xf32> -> vector<4x128xf32>
    %451 = vector.extract_strided_slice %445 {offsets = [0, 0], sizes = [2, 32], strides = [1, 1]} : vector<4x32xf32> to vector<2x32xf32>
    %452 = tpu.concatenate %451, %258 in 1 : vector<2x32xf32>, vector<2x32xf32> -> vector<2x64xf32>
    %453 = vector.extract_strided_slice %445 {offsets = [2, 0], sizes = [2, 32], strides = [1, 1]} : vector<4x32xf32> to vector<2x32xf32>
    %454 = tpu.concatenate %258, %453 in 1 : vector<2x32xf32>, vector<2x32xf32> -> vector<2x64xf32>
    %455 = tpu.concatenate %452, %454 in 0 : vector<2x64xf32>, vector<2x64xf32> -> vector<4x64xf32>
    %cst_67 = arith.constant dense<0.000000e+00> : vector<4x128xf32>
    %456 = tpu.matmul %455, %247, %cst_67 {dimension_numbers = #tpu.dot_dimension_numbers<[1], [0], [0], [1], [0, 0, 1, 1], [], []>} : vector<4x64xf32>, vector<64x128xf32>, vector<4x128xf32> -> vector<4x128xf32>
    %457 = arith.addf %450, %456 : vector<4x128xf32>
    %458 = arith.negf %457 : vector<4x128xf32>
    %459 = math.exp %458 : vector<4x128xf32>
    %cst_68 = arith.constant 1.000000e+00 : f32
    %460 = vector.broadcast %cst_68 : f32 to vector<4x128xf32>
    %461 = arith.addf %460, %459 : vector<4x128xf32>
    %462 = arith.divf %460, %461 : vector<4x128xf32>
    %463 = vector.extract_strided_slice %462 {offsets = [0, 0], sizes = [4, 32], strides = [1, 1]} : vector<4x128xf32> to vector<4x32xf32>
    %464 = vector.extract_strided_slice %462 {offsets = [0, 32], sizes = [4, 32], strides = [1, 1]} : vector<4x128xf32> to vector<4x32xf32>
    %465 = vector.extract_strided_slice %462 {offsets = [0, 96], sizes = [4, 32], strides = [1, 1]} : vector<4x128xf32> to vector<4x32xf32>
    %466 = vector.extract_strided_slice %457 {offsets = [0, 64], sizes = [4, 32], strides = [1, 1]} : vector<4x128xf32> to vector<4x32xf32>
    %467 = math.tanh %466 : vector<4x32xf32>
    %468 = arith.mulf %464, %443 : vector<4x32xf32>
    %469 = arith.mulf %463, %467 : vector<4x32xf32>
    %470 = arith.addf %468, %469 : vector<4x32xf32>
    %471 = math.tanh %470 : vector<4x32xf32>
    %472 = arith.mulf %465, %471 : vector<4x32xf32>
    %473 = vector.extract_strided_slice %472 {offsets = [0, 0], sizes = [2, 32], strides = [1, 1]} : vector<4x32xf32> to vector<2x32xf32>
    %474 = vector.extract_strided_slice %472 {offsets = [2, 0], sizes = [2, 32], strides = [1, 1]} : vector<4x32xf32> to vector<2x32xf32>
    %475 = tpu.concatenate %284, %311, %338, %365, %392, %419, %446, %473 in 0 : vector<2x32xf32>, vector<2x32xf32>, vector<2x32xf32>, vector<2x32xf32>, vector<2x32xf32>, vector<2x32xf32>, vector<2x32xf32>, vector<2x32xf32> -> vector<16x32xf32>
    %476 = tpu.concatenate %474, %447, %420, %393, %366, %339, %312, %285 in 0 : vector<2x32xf32>, vector<2x32xf32>, vector<2x32xf32>, vector<2x32xf32>, vector<2x32xf32>, vector<2x32xf32>, vector<2x32xf32>, vector<2x32xf32> -> vector<16x32xf32>
    %477 = tpu.concatenate %475, %476 in 1 : vector<16x32xf32>, vector<16x32xf32> -> vector<16x64xf32>
    %478 = vector.extract_strided_slice %472 {offsets = [0, 0], sizes = [2, 32], strides = [1, 1]} : vector<4x32xf32> to vector<2x32xf32>
    %479 = vector.extract_strided_slice %472 {offsets = [2, 0], sizes = [2, 32], strides = [1, 1]} : vector<4x32xf32> to vector<2x32xf32>
    %480 = vector.extract_strided_slice %470 {offsets = [0, 0], sizes = [2, 32], strides = [1, 1]} : vector<4x32xf32> to vector<2x32xf32>
    %481 = vector.extract_strided_slice %470 {offsets = [2, 0], sizes = [2, 32], strides = [1, 1]} : vector<4x32xf32> to vector<2x32xf32>
    %482 = tpu.concatenate %237, %238, %478, %479 in 0 : vector<2x32xf32>, vector<2x32xf32>, vector<2x32xf32>, vector<2x32xf32> -> vector<8x32xf32>
    %c0_69 = arith.constant 0 : index
    %c0_70 = arith.constant 0 : index
    %483 = vector.load %arg12[%c0_69, %c0_70] : memref<8x32xf32, #tpu.memory_space<vmem>>, vector<8x32xf32>
    tpu.vector_store %arg12[%c0_69, %c0_70], %482 {strides = array<i32>} : memref<8x32xf32, #tpu.memory_space<vmem>>, vector<8x32xf32>,
    %484 = tpu.concatenate %239, %240, %480, %481 in 0 : vector<2x32xf32>, vector<2x32xf32>, vector<2x32xf32>, vector<2x32xf32> -> vector<8x32xf32>
    %c0_71 = arith.constant 0 : index
    %c0_72 = arith.constant 0 : index
    %485 = vector.load %arg13[%c0_71, %c0_72] : memref<8x32xf32, #tpu.memory_space<vmem>>, vector<8x32xf32>
    tpu.vector_store %arg13[%c0_71, %c0_72], %484 {strides = array<i32>} : memref<8x32xf32, #tpu.memory_space<vmem>>, vector<8x32xf32>,
    %486 = arith.truncf %477 : vector<16x64xf32> to vector<16x64xbf16>
    %c0_73 = arith.constant 0 : index
    %c0_74 = arith.constant 0 : index
    %487 = vector.load %arg9[%c0_73, %c0_74] : memref<64x128xbf16, #tpu.memory_space<vmem>>, vector<64x128xbf16>
    %cst_75 = arith.constant dense<0.000000e+00> : vector<16x128xf32>
    %488 = tpu.matmul %486, %487, %cst_75 {dimension_numbers = #tpu.dot_dimension_numbers<[1], [0], [0], [1], [0, 0, 1, 1], [], []>} : vector<16x64xbf16>, vector<64x128xbf16>, vector<16x128xf32> -> vector<16x128xf32>
    %c0_76 = arith.constant 0 : index
    %c0_77 = arith.constant 0 : index
    %489 = vector.load %arg10[%c0_76, %c0_77] : memref<1x128xf32, #tpu.memory_space<vmem>>, vector<1x128xf32>
    %490 = vector.broadcast %489 : vector<1x128xf32> to vector<16x128xf32>
    %491 = arith.addf %488, %490 : vector<16x128xf32>
    %c0_78 = arith.constant 0 : index
    %c0_79 = arith.constant 0 : index
    %492 = vector.load %arg11[%c0_78, %c0_79] : memref<16x128xf32, #tpu.memory_space<vmem>>, vector<16x128xf32>
    tpu.vector_store %arg11[%c0_78, %c0_79], %491 {strides = array<i32>} : memref<16x128xf32, #tpu.memory_space<vmem>>, vector<16x128xf32>,
    return
  }
}

</mosaic_0001>

<llo_original>
// kernel: rnn_model_forward.1
$region0: #{rnn_model_forward.1}
  #allocation0 [shape = 'u32[]', space=smem, size = 0x4, offset = 0x4, fixed_abs, tag = 'smem constant byte address 0x4 - core index']
  #allocation1 [shape = 'u32[144,128]{1,0:T(1,128)}', space=vmem, size = 0x12000, scoped, tag = 'internal scratch']
  %s0 = inlined_call_operand.vmem [shape: bf16[16,32], index: 0, kind: input, shape index: {}]
  %s1 = inlined_call_operand.vmem [shape: f32[4,2,32], index: 1, kind: input, shape index: {}]
  %s2 = inlined_call_operand.vmem [shape: f32[4,2,32], index: 2, kind: input, shape index: {}]
  %s3 = inlined_call_operand.vmem [shape: bf16[32,256], index: 3, kind: input, shape index: {}]
  %s4 = inlined_call_operand.vmem [shape: f32[1,256], index: 4, kind: input, shape index: {}]
  %s5 = inlined_call_operand.vmem [shape: f32[64,128], index: 5, kind: input, shape index: {}]
  %s6 = inlined_call_operand.vmem [shape: bf16[64,256], index: 6, kind: input, shape index: {}]
  %s7 = inlined_call_operand.vmem [shape: f32[1,256], index: 7, kind: input, shape index: {}]
  %s8 = inlined_call_operand.vmem [shape: f32[64,128], index: 8, kind: input, shape index: {}]
  %s9 = inlined_call_operand.vmem [shape: bf16[64,128], index: 9, kind: input, shape index: {}]
  %s10 = inlined_call_operand.vmem [shape: f32[1,128], index: 10, kind: input, shape index: {}]
  %s11 = inlined_call_operand.vmem [shape: f32[16,128], index: 11, kind: output, shape index: {0}]
  %s12 = inlined_call_operand.hbm [shape: f32[8,32], index: 12, kind: output, shape index: {1}]
  %s13 = inlined_call_operand.hbm [shape: f32[8,32], index: 13, kind: output, shape index: {2}]
  %14 = xla_tuple %s11, %s12, %s13
  %s15 = sld [smem:[#allocation0]]
  $region70: #{rnn_model_forward.1} parent=0
    _
  %s17 = ssub.s32 1, %s15
  %s18 = scalar_select 0, %s17, %s15
  $region1: #{rnn_model_forward.1} parent=0
    #allocation2 [shape = 'u8[4096]{0}', space=vmem, size = 0x1000, scoped, tag = 'output window, operand 1, single buffered']
    #allocation3 [shape = 's32[1]{0}', space=sflag, size = 0x4, scoped, tag = 'scoped memory for rnn_model_forward.1']
    #allocation4 [shape = 'u8[4096]{0}', space=vmem, size = 0x1000, scoped, tag = 'output window, operand 2, single buffered']
    #allocation5 [shape = 's32[1]{0}', space=sflag, size = 0x4, scoped, tag = 'scoped memory for rnn_model_forward.1']
    %19 = vsyncpa [#allocation3], 0
    %20 = vsyncpa [#allocation5], 0
    // Predicated region
    $region2: #{rnn_model_forward.1} parent=1 // pred_check
      _
    $region3: #{rnn_model_forward.1} parent=1 // pred_check_branch
      %22 = sbr.rel (0) target = $region5
    $region4: #{rnn_model_forward.1} parent=1 // pred_region
      _
    $region5: #{rnn_model_forward.1} parent=1 // pred_fallthru
      _
    // Predicated region
    $region6: #{rnn_model_forward.1} parent=1 // pred_check
      _
    $region7: #{rnn_model_forward.1} parent=1 // pred_check_branch
      %24 = sbr.rel (0) target = $region9
    $region8: #{rnn_model_forward.1} parent=1 // pred_region
      _
    $region9: #{rnn_model_forward.1} parent=1 // pred_fallthru
      _
    // Predicated region
    $region10: #{rnn_model_forward.1} parent=1 // pred_check
      _
    $region11: #{rnn_model_forward.1} parent=1 // pred_check_branch
      %26 = sbr.rel (0) target = $region13
    $region12: #{rnn_model_forward.1} parent=1 // pred_region
      _
    $region13: #{rnn_model_forward.1} parent=1 // pred_fallthru
      _
    // Predicated region
    $region14: #{rnn_model_forward.1} parent=1 // pred_check
      _
    $region15: #{rnn_model_forward.1} parent=1 // pred_check_branch
      %28 = sbr.rel (0) target = $region17
    $region16: #{rnn_model_forward.1} parent=1 // pred_region
      _
    $region17: #{rnn_model_forward.1} parent=1 // pred_fallthru
      _
    // Predicated region
    $region18: #{rnn_model_forward.1} parent=1 // pred_check
      _
    $region19: #{rnn_model_forward.1} parent=1 // pred_check_branch
      %30 = sbr.rel (0) target = $region21
    $region20: #{rnn_model_forward.1} parent=1 // pred_region
      _
    $region21: #{rnn_model_forward.1} parent=1 // pred_fallthru
      _
    // Predicated region
    $region22: #{rnn_model_forward.1} parent=1 // pred_check
      _
    $region23: #{rnn_model_forward.1} parent=1 // pred_check_branch
      %32 = sbr.rel (0) target = $region25
    $region24: #{rnn_model_forward.1} parent=1 // pred_region
      _
    $region25: #{rnn_model_forward.1} parent=1 // pred_fallthru
      _
    // Predicated region
    $region26: #{rnn_model_forward.1} parent=1 // pred_check
      _
    $region27: #{rnn_model_forward.1} parent=1 // pred_check_branch
      %34 = sbr.rel (0) target = $region29
    $region28: #{rnn_model_forward.1} parent=1 // pred_region
      _
    $region29: #{rnn_model_forward.1} parent=1 // pred_fallthru
      _
    // Predicated region
    $region30: #{rnn_model_forward.1} parent=1 // pred_check
      _
    $region31: #{rnn_model_forward.1} parent=1 // pred_check_branch
      %36 = sbr.rel (0) target = $region33
    $region32: #{rnn_model_forward.1} parent=1 // pred_region
      _
    $region33: #{rnn_model_forward.1} parent=1 // pred_fallthru
      _
    // Predicated region
    $region34: #{rnn_model_forward.1} parent=1 // pred_check
      _
    $region35: #{rnn_model_forward.1} parent=1 // pred_check_branch
      %38 = sbr.rel (0) target = $region37
    $region36: #{rnn_model_forward.1} parent=1 // pred_region
      _
    $region37: #{rnn_model_forward.1} parent=1 // pred_fallthru
      _
    // Predicated region
    $region38: #{rnn_model_forward.1} parent=1 // pred_check
      _
    $region39: #{rnn_model_forward.1} parent=1 // pred_check_branch
      %40 = sbr.rel (0) target = $region41
    $region40: #{rnn_model_forward.1} parent=1 // pred_region
      _
    $region41: #{rnn_model_forward.1} parent=1 // pred_fallthru
      _
    // Predicated region
    $region42: #{rnn_model_forward.1} parent=1 // pred_check
      _
    $region43: #{rnn_model_forward.1} parent=1 // pred_check_branch
      %42 = sbr.rel (0) target = $region45
    $region44: #{rnn_model_forward.1} parent=1 // pred_region
      _
    $region45: #{rnn_model_forward.1} parent=1 // pred_fallthru
      _
    %v44 = vld [vmem:[%s0] sm:$0xf]
    %v45 = vld [vmem:[%s0 + $0x4] sm:$0xf]
    %v46 = vld [vmem:[%s3] sm:$0xff]
    %v47 = vld [vmem:[%s3 + $0x8] sm:$0xff]
    %v48 = vld [vmem:[%s3 + $0x10] sm:$0xff]
    %v49 = vld [vmem:[%s3 + $0x18] sm:$0xff]
    %v50 = vld [vmem:[%s4] sm:$0x3]
    %v52 = vlaneseq
    %v53 = vshrl.u32 %v52, 7
    %v54 = vsub.s32 0, %v53
    %v55 = vrot.slane %v50, %v54
    %v56 = vlaneseq
    %v57 = vshrl.u32 %v56, 7
    %v58 = vsub.s32 1, %v57
    %v59 = vrot.slane %v50, %v58
    %v64 = vunpack.c.l.b16 %v44
    %v65 = vunpack.c.l.b16 %v45
    %v66 = vpack.c.b16 %v65, %v64
    %v71 = vunpack.c.l.b16 %v46
    %v72 = vunpack.c.h.b16 %v46
    %v73 = vunpack.c.l.b16 %v47
    %v74 = vunpack.c.h.b16 %v47
    %v75 = vunpack.c.l.b16 %v48
    %v76 = vunpack.c.h.b16 %v48
    %v77 = vunpack.c.l.b16 %v49
    %v78 = vunpack.c.h.b16 %v49
    %v79 = vpack.c.b16 %v73, %v71
    %v80 = vpack.c.b16 %v74, %v72
    %v81 = vpack.c.b16 %v77, %v75
    %v82 = vpack.c.b16 %v78, %v76
    %vm87 = vcmask 261120
    %v89 = vsel %vm87, %v66, 0
    %91 = vmatprep.subr.bf16.mxu0 %v80
    %92 = vmatpush1.bf16.msra.mxu0 %v79
    %93 = vmatprep.subr.bf16.mxu0 %v82
    %94 = vmatpush1.bf16.msra.mxu0 %v81
    %95 = vmatprep.subr.bf16.mxu0 0
    %96 = vmatpush1.bf16.msra.mxu0 0
    %97 = vmatprep.subr.bf16.mxu0 0
    %98 = vmatpush1.bf16.msra.mxu0 0
    %99 = vmatprep.subr.bf16.mxu0 0
    %100 = vmatpush1.bf16.msra.mxu0 0
    %101 = vmatprep.subr.bf16.mxu0 0
    %102 = vmatpush1.bf16.msra.mxu0 0
    %103 = vmatprep.subr.bf16.mxu0 0
    %104 = vmatpush1.bf16.msra.mxu0 0
    %105 = vmatprep.subr.bf16.mxu0 0
    %106 = vmatpush1.bf16.msra.mxu0 0
    %107 = vmatprep.subr.bf16.mxu0 0
    %108 = vmatpush1.bf16.msra.mxu0 0
    %109 = vmatprep.subr.bf16.mxu0 0
    %110 = vmatpush1.bf16.msra.mxu0 0
    %111 = vmatprep.subr.bf16.mxu0 0
    %112 = vmatpush1.bf16.msra.mxu0 0
    %113 = vmatprep.subr.bf16.mxu0 0
    %114 = vmatpush1.bf16.msra.mxu0 0
    %115 = vmatprep.subr.bf16.mxu0 0
    %116 = vmatpush1.bf16.msra.mxu0 0
    %117 = vmatprep.subr.bf16.mxu0 0
    %118 = vmatpush1.bf16.msra.mxu0 0
    %119 = vmatprep.subr.bf16.mxu0 0
    %120 = vmatpush1.bf16.msra.mxu0 0
    %121 = vmatprep.subr.bf16.mxu0 0
    %122 = vmatpush1.bf16.msra.mxu0 0
    %123 = vmatprep.mubr.bf16.mxu0 0
    %124 = vmatmul.mubr.bf16.gmra.mrb[0].mxu0 %v89
    %v125 = vpop.f32.mrb[0].mxu0
    %v126 = vadd.f32 %v55, %v125
    %v127 = vpop.f32.mrb[0].mxu0
    %v128 = vadd.f32 %v59, %v127
    %v129 = vpop.f32.mrb[0].mxu0
    %v130 = vadd.f32 %v55, %v129
    %v131 = vpop.f32.mrb[0].mxu0
    %v132 = vadd.f32 %v59, %v131
    %133 = vdwg.mxu0
    %v134 = vld [vmem:[%s5] sm:$0xff]
    %v135 = vld [vmem:[%s5 + $0x8] sm:$0xff]
    %v136 = vld [vmem:[%s5 + $0x10] sm:$0xff]
    %v137 = vld [vmem:[%s5 + $0x18] sm:$0xff]
    %v138 = vld [vmem:[%s5 + $0x20] sm:$0xff]
    %v139 = vld [vmem:[%s5 + $0x28] sm:$0xff]
    %v140 = vld [vmem:[%s5 + $0x30] sm:$0xff]
    %v141 = vld [vmem:[%s5 + $0x38] sm:$0xff]
    %v142 = vld [vmem:[%s1] sm:$0x3]
    %s143 = scalar_lea.vmem %s1, 2
    %v144 = vld [vmem:[%s143] sm:$0x3]
    %v146 = vrot.slane %v144, 6
    %vm148 = vcmask 1041408
    %v149 = vsel %vm148, %v142, %v146
    %v150 = vld [vmem:[%s2] sm:$0x3]
    %s151 = scalar_lea.vmem %s2, 2
    %v152 = vld [vmem:[%s151] sm:$0x3]
    %v154 = vrot.slane %v152, 6
    %v156 = vsel %vm148, %v150, %v154
    %v158 = vrot.slane %v132, 4
    %v160 = vsel %vm148, %v126, %v158
    %v161 = vsel %vm87, %v149, 0.0
    %v163 = vrot.slane %v149, 2
    %164 = vrot.lane.b32.xlu0 %v163, 32
    %v165 = vpop.permute.xlu0 %164
    %v167 = vsel %vm87, 0.0, %v165
    %v169 = vrot.slane %v167, 6
    %v171 = vsel %vm148, %v161, %v169
    %vm172 = vcmask 523264
    %v174 = vsel %vm172, %v171, 0
    %176 = vmatprep.subr.mxu0 0.0
    %177 = vmatpush1.msra.mxu0 %v134
    %178 = vmatprep.subr.mxu0 0.0
    %179 = vmatpush1.msra.mxu0 %v135
    %180 = vmatprep.subr.mxu0 0.0
    %181 = vmatpush1.msra.mxu0 %v136
    %182 = vmatprep.subr.mxu0 0.0
    %183 = vmatpush1.msra.mxu0 %v137
    %184 = vmatprep.subr.mxu0 0.0
    %185 = vmatpush1.msra.mxu0 %v138
    %186 = vmatprep.subr.mxu0 0.0
    %187 = vmatpush1.msra.mxu0 %v139
    %188 = vmatprep.subr.mxu0 0.0
    %189 = vmatpush1.msra.mxu0 %v140
    %190 = vmatprep.subr.mxu0 0.0
    %191 = vmatpush1.msra.mxu0 %v141
    %192 = vmatprep.subr.mxu0 0.0
    %193 = vmatpush1.msra.mxu0 0.0
    %194 = vmatprep.subr.mxu0 0.0
    %195 = vmatpush1.msra.mxu0 0.0
    %196 = vmatprep.subr.mxu0 0.0
    %197 = vmatpush1.msra.mxu0 0.0
    %198 = vmatprep.subr.mxu0 0.0
    %199 = vmatpush1.msra.mxu0 0.0
    %200 = vmatprep.subr.mxu0 0.0
    %201 = vmatpush1.msra.mxu0 0.0
    %202 = vmatprep.subr.mxu0 0.0
    %203 = vmatpush1.msra.mxu0 0.0
    %204 = vmatprep.subr.mxu0 0.0
    %205 = vmatpush1.msra.mxu0 0.0
    %206 = vmatprep.subr.mxu0 0.0
    %207 = vmatpush1.msra.mxu0 0.0
    %208 = vmatprep.subr.mxu0 0.0
    %209 = vmatpush1.msra.mxu0 0.0
    %210 = vmatprep.subr.mxu0 0.0
    %211 = vmatpush1.msra.mxu0 0.0
    %212 = vmatprep.subr.mxu0 0.0
    %213 = vmatpush1.msra.mxu0 0.0
    %214 = vmatprep.subr.mxu0 0.0
    %215 = vmatpush1.msra.mxu0 0.0
    %216 = vmatprep.subr.mxu0 0.0
    %217 = vmatpush1.msra.mxu0 0.0
    %218 = vmatprep.subr.mxu0 0.0
    %219 = vmatpush1.msra.mxu0 0.0
    %220 = vmatprep.subr.mxu0 0.0
    %221 = vmatpush1.msra.mxu0 0.0
    %222 = vmatprep.subr.mxu0 0.0
    %223 = vmatpush1.msra.mxu0 0.0
    %224 = vmatprep.subr.mxu0 0.0
    %225 = vmatpush1.msra.mxu0 0.0
    %226 = vmatprep.subr.mxu0 0.0
    %227 = vmatpush1.msra.mxu0 0.0
    %228 = vmatprep.subr.mxu0 0.0
    %229 = vmatpush1.msra.mxu0 0.0
    %230 = vmatprep.subr.mxu0 0.0
    %231 = vmatpush1.msra.mxu0 0.0
    %232 = vmatprep.subr.mxu0 0.0
    %233 = vmatpush1.msra.mxu0 0.0
    %234 = vmatprep.subr.mxu0 0.0
    %235 = vmatpush1.msra.mxu0 0.0
    %236 = vmatprep.subr.mxu0 0.0
    %237 = vmatpush1.msra.mxu0 0.0
    %238 = vmatprep.subr.mxu0 0.0
    %239 = vmatpush1.msra.mxu0 0.0
    %240 = vmatprep.mubr.f32.mxu0 0.0
    %241 = vmatmul.mubr.f32.gmra.mrb[0].mxu0 %v174
    %v242 = vpop.f32.mrb[0].mxu0
    %v243 = vadd.f32 0.0, %v242
    %v244 = vpop.f32.mrb[0].mxu0
    %245 = vdwg.mxu0
    %v246 = vadd.f32 %v160, %v243
    %v247 = vxor.u32 %v246, 2147483648
    %v248 = vmul.f32 %v247, 1.442695
    %v249 = vpow.pop %v248
    %v250 = vadd.f32 %v249, 1.0
    %v251 = vrcp.pop %v250
    %v252 = vmul.f32 1.0, %v251
    %v253 = vtanh.pop %v246
    %255 = vrot.lane.b32.xlu0 %v156, 32
    %v256 = vpop.permute.xlu0 %255
    %v258 = vmul.f32 %v252, %v256
    %260 = vrot.lane.b32.xlu0 %v253, 64
    %v261 = vpop.permute.xlu0 %260
    %v263 = vmul.f32 %v252, %v261
    %265 = vrot.lane.b32.xlu0 %v263, 32
    %v266 = vpop.permute.xlu0 %265
    %v268 = vadd.f32 %v258, %v266
    %v269 = vtanh.pop %v268
    %271 = vrot.lane.b32.xlu0 %v269, 64
    %v272 = vpop.permute.xlu0 %271
    %v274 = vmul.f32 %v252, %v272
    %v276 = vrot.slane %v126, 2
    %v278 = vrot.slane %v132, 2
    %v280 = vsel %vm148, %v276, %v278
    %282 = vrot.lane.b32.xlu0 %v274, 32
    %v283 = vpop.permute.xlu0 %282
    %v285 = vsel %vm87, %v283, 0.0
    %v286 = vrot.slane %v274, 2
    %287 = vrot.lane.b32.xlu0 %v286, 64
    %v288 = vpop.permute.xlu0 %287
    %v290 = vsel %vm87, 0.0, %v288
    %v292 = vrot.slane %v290, 6
    %v294 = vsel %vm148, %v285, %v292
    %v296 = vsel %vm172, %v294, 0
    %298 = vmatprep.subr.mxu0 0.0
    %299 = vmatpush1.msra.mxu0 %v134
    %300 = vmatprep.subr.mxu0 0.0
    %301 = vmatpush1.msra.mxu0 %v135
    %302 = vmatprep.subr.mxu0 0.0
    %303 = vmatpush1.msra.mxu0 %v136
    %304 = vmatprep.subr.mxu0 0.0
    %305 = vmatpush1.msra.mxu0 %v137
    %306 = vmatprep.subr.mxu0 0.0
    %307 = vmatpush1.msra.mxu0 %v138
    %308 = vmatprep.subr.mxu0 0.0
    %309 = vmatpush1.msra.mxu0 %v139
    %310 = vmatprep.subr.mxu0 0.0
    %311 = vmatpush1.msra.mxu0 %v140
    %312 = vmatprep.subr.mxu0 0.0
    %313 = vmatpush1.msra.mxu0 %v141
    %314 = vmatprep.subr.mxu0 0.0
    %315 = vmatpush1.msra.mxu0 0.0
    %316 = vmatprep.subr.mxu0 0.0
    %317 = vmatpush1.msra.mxu0 0.0
    %318 = vmatprep.subr.mxu0 0.0
    %319 = vmatpush1.msra.mxu0 0.0
    %320 = vmatprep.subr.mxu0 0.0
    %321 = vmatpush1.msra.mxu0 0.0
    %322 = vmatprep.subr.mxu0 0.0
    %323 = vmatpush1.msra.mxu0 0.0
    %324 = vmatprep.subr.mxu0 0.0
    %325 = vmatpush1.msra.mxu0 0.0
    %326 = vmatprep.subr.mxu0 0.0
    %327 = vmatpush1.msra.mxu0 0.0
    %328 = vmatprep.subr.mxu0 0.0
    %329 = vmatpush1.msra.mxu0 0.0
    %330 = vmatprep.subr.mxu0 0.0
    %331 = vmatpush1.msra.mxu0 0.0
    %332 = vmatprep.subr.mxu0 0.0
    %333 = vmatpush1.msra.mxu0 0.0
    %334 = vmatprep.subr.mxu0 0.0
    %335 = vmatpush1.msra.mxu0 0.0
    %336 = vmatprep.subr.mxu0 0.0
    %337 = vmatpush1.msra.mxu0 0.0
    %338 = vmatprep.subr.mxu0 0.0
    %339 = vmatpush1.msra.mxu0 0.0
    %340 = vmatprep.subr.mxu0 0.0
    %341 = vmatpush1.msra.mxu0 0.0
    %342 = vmatprep.subr.mxu0 0.0
    %343 = vmatpush1.msra.mxu0 0.0
    %344 = vmatprep.subr.mxu0 0.0
    %345 = vmatpush1.msra.mxu0 0.0
    %346 = vmatprep.subr.mxu0 0.0
    %347 = vmatpush1.msra.mxu0 0.0
    %348 = vmatprep.subr.mxu0 0.0
    %349 = vmatpush1.msra.mxu0 0.0
    %350 = vmatprep.subr.mxu0 0.0
    %351 = vmatpush1.msra.mxu0 0.0
    %352 = vmatprep.subr.mxu0 0.0
    %353 = vmatpush1.msra.mxu0 0.0
    %354 = vmatprep.subr.mxu0 0.0
    %355 = vmatpush1.msra.mxu0 0.0
    %356 = vmatprep.subr.mxu0 0.0
    %357 = vmatpush1.msra.mxu0 0.0
    %358 = vmatprep.subr.mxu0 0.0
    %359 = vmatpush1.msra.mxu0 0.0
    %360 = vmatprep.subr.mxu0 0.0
    %361 = vmatpush1.msra.mxu0 0.0
    %362 = vmatprep.mubr.f32.mxu0 0.0
    %363 = vmatmul.mubr.f32.gmra.mrb[0].mxu0 %v296
    %v364 = vpop.f32.mrb[0].mxu0
    %v365 = vadd.f32 0.0, %v364
    %v366 = vpop.f32.mrb[0].mxu0
    %367 = vdwg.mxu0
    %v368 = vadd.f32 %v280, %v365
    %v369 = vxor.u32 %v368, 2147483648
    %v370 = vmul.f32 %v369, 1.442695
    %v371 = vpow.pop %v370
    %v372 = vadd.f32 %v371, 1.0
    %v373 = vrcp.pop %v372
    %v374 = vmul.f32 1.0, %v373
    %v375 = vtanh.pop %v368
    %v376 = vmul.f32 %v374, %v268
    %378 = vrot.lane.b32.xlu0 %v375, 64
    %v379 = vpop.permute.xlu0 %378
    %v381 = vmul.f32 %v374, %v379
    %383 = vrot.lane.b32.xlu0 %v381, 32
    %v384 = vpop.permute.xlu0 %383
    %v386 = vadd.f32 %v376, %v384
    %v387 = vtanh.pop %v386
    %389 = vrot.lane.b32.xlu0 %v387, 64
    %v390 = vpop.permute.xlu0 %389
    %v392 = vmul.f32 %v374, %v390
    %v393 = vrot.slane %v126, 4
    %v395 = vsel %vm148, %v393, %v132
    %397 = vrot.lane.b32.xlu0 %v392, 32
    %v398 = vpop.permute.xlu0 %397
    %v400 = vsel %vm87, %v398, 0.0
    %v401 = vrot.slane %v392, 2
    %402 = vrot.lane.b32.xlu0 %v401, 64
    %v403 = vpop.permute.xlu0 %402
    %v405 = vsel %vm87, 0.0, %v403
    %v407 = vrot.slane %v405, 6
    %v409 = vsel %vm148, %v400, %v407
    %v411 = vsel %vm172, %v409, 0
    %413 = vmatprep.subr.mxu0 0.0
    %414 = vmatpush1.msra.mxu0 %v134
    %415 = vmatprep.subr.mxu0 0.0
    %416 = vmatpush1.msra.mxu0 %v135
    %417 = vmatprep.subr.mxu0 0.0
    %418 = vmatpush1.msra.mxu0 %v136
    %419 = vmatprep.subr.mxu0 0.0
    %420 = vmatpush1.msra.mxu0 %v137
    %421 = vmatprep.subr.mxu0 0.0
    %422 = vmatpush1.msra.mxu0 %v138
    %423 = vmatprep.subr.mxu0 0.0
    %424 = vmatpush1.msra.mxu0 %v139
    %425 = vmatprep.subr.mxu0 0.0
    %426 = vmatpush1.msra.mxu0 %v140
    %427 = vmatprep.subr.mxu0 0.0
    %428 = vmatpush1.msra.mxu0 %v141
    %429 = vmatprep.subr.mxu0 0.0
    %430 = vmatpush1.msra.mxu0 0.0
    %431 = vmatprep.subr.mxu0 0.0
    %432 = vmatpush1.msra.mxu0 0.0
    %433 = vmatprep.subr.mxu0 0.0
    %434 = vmatpush1.msra.mxu0 0.0
    %435 = vmatprep.subr.mxu0 0.0
    %436 = vmatpush1.msra.mxu0 0.0
    %437 = vmatprep.subr.mxu0 0.0
    %438 = vmatpush1.msra.mxu0 0.0
    %439 = vmatprep.subr.mxu0 0.0
    %440 = vmatpush1.msra.mxu0 0.0
    %441 = vmatprep.subr.mxu0 0.0
    %442 = vmatpush1.msra.mxu0 0.0
    %443 = vmatprep.subr.mxu0 0.0
    %444 = vmatpush1.msra.mxu0 0.0
    %445 = vmatprep.subr.mxu0 0.0
    %446 = vmatpush1.msra.mxu0 0.0
    %447 = vmatprep.subr.mxu0 0.0
    %448 = vmatpush1.msra.mxu0 0.0
    %449 = vmatprep.subr.mxu0 0.0
    %450 = vmatpush1.msra.mxu0 0.0
    %451 = vmatprep.subr.mxu0 0.0
    %452 = vmatpush1.msra.mxu0 0.0
    %453 = vmatprep.subr.mxu0 0.0
    %454 = vmatpush1.msra.mxu0 0.0
    %455 = vmatprep.subr.mxu0 0.0
    %456 = vmatpush1.msra.mxu0 0.0
    %457 = vmatprep.subr.mxu0 0.0
    %458 = vmatpush1.msra.mxu0 0.0
    %459 = vmatprep.subr.mxu0 0.0
    %460 = vmatpush1.msra.mxu0 0.0
    %461 = vmatprep.subr.mxu0 0.0
    %462 = vmatpush1.msra.mxu0 0.0
    %463 = vmatprep.subr.mxu0 0.0
    %464 = vmatpush1.msra.mxu0 0.0
    %465 = vmatprep.subr.mxu0 0.0
    %466 = vmatpush1.msra.mxu0 0.0
    %467 = vmatprep.subr.mxu0 0.0
    %468 = vmatpush1.msra.mxu0 0.0
    %469 = vmatprep.subr.mxu0 0.0
    %470 = vmatpush1.msra.mxu0 0.0
    %471 = vmatprep.subr.mxu0 0.0
    %472 = vmatpush1.msra.mxu0 0.0
    %473 = vmatprep.subr.mxu0 0.0
    %474 = vmatpush1.msra.mxu0 0.0
    %475 = vmatprep.subr.mxu0 0.0
    %476 = vmatpush1.msra.mxu0 0.0
    %477 = vmatprep.mubr.f32.mxu0 0.0
    %478 = vmatmul.mubr.f32.gmra.mrb[0].mxu0 %v411
    %v479 = vpop.f32.mrb[0].mxu0
    %v480 = vadd.f32 0.0, %v479
    %v481 = vpop.f32.mrb[0].mxu0
    %482 = vdwg.mxu0
    %v483 = vadd.f32 %v395, %v480
    %v484 = vxor.u32 %v483, 2147483648
    %v485 = vmul.f32 %v484, 1.442695
    %v486 = vpow.pop %v485
    %v487 = vadd.f32 %v486, 1.0
    %v488 = vrcp.pop %v487
    %v489 = vmul.f32 1.0, %v488
    %v490 = vtanh.pop %v483
    %v491 = vmul.f32 %v489, %v386
    %493 = vrot.lane.b32.xlu0 %v490, 64
    %v494 = vpop.permute.xlu0 %493
    %v496 = vmul.f32 %v489, %v494
    %498 = vrot.lane.b32.xlu0 %v496, 32
    %v499 = vpop.permute.xlu0 %498
    %v501 = vadd.f32 %v491, %v499
    %v502 = vtanh.pop %v501
    %504 = vrot.lane.b32.xlu0 %v502, 64
    %v505 = vpop.permute.xlu0 %504
    %v507 = vmul.f32 %v489, %v505
    %v508 = vrot.slane %v126, 6
    %v510 = vrot.slane %v132, 6
    %v512 = vsel %vm148, %v508, %v510
    %514 = vrot.lane.b32.xlu0 %v507, 32
    %v515 = vpop.permute.xlu0 %514
    %v517 = vsel %vm87, %v515, 0.0
    %v518 = vrot.slane %v507, 2
    %519 = vrot.lane.b32.xlu0 %v518, 64
    %v520 = vpop.permute.xlu0 %519
    %v522 = vsel %vm87, 0.0, %v520
    %v524 = vrot.slane %v522, 6
    %v526 = vsel %vm148, %v517, %v524
    %v528 = vsel %vm172, %v526, 0
    %530 = vmatprep.subr.mxu0 0.0
    %531 = vmatpush1.msra.mxu0 %v134
    %532 = vmatprep.subr.mxu0 0.0
    %533 = vmatpush1.msra.mxu0 %v135
    %534 = vmatprep.subr.mxu0 0.0
    %535 = vmatpush1.msra.mxu0 %v136
    %536 = vmatprep.subr.mxu0 0.0
    %537 = vmatpush1.msra.mxu0 %v137
    %538 = vmatprep.subr.mxu0 0.0
    %539 = vmatpush1.msra.mxu0 %v138
    %540 = vmatprep.subr.mxu0 0.0
    %541 = vmatpush1.msra.mxu0 %v139
    %542 = vmatprep.subr.mxu0 0.0
    %543 = vmatpush1.msra.mxu0 %v140
    %544 = vmatprep.subr.mxu0 0.0
    %545 = vmatpush1.msra.mxu0 %v141
    %546 = vmatprep.subr.mxu0 0.0
    %547 = vmatpush1.msra.mxu0 0.0
    %548 = vmatprep.subr.mxu0 0.0
    %549 = vmatpush1.msra.mxu0 0.0
    %550 = vmatprep.subr.mxu0 0.0
    %551 = vmatpush1.msra.mxu0 0.0
    %552 = vmatprep.subr.mxu0 0.0
    %553 = vmatpush1.msra.mxu0 0.0
    %554 = vmatprep.subr.mxu0 0.0
    %555 = vmatpush1.msra.mxu0 0.0
    %556 = vmatprep.subr.mxu0 0.0
    %557 = vmatpush1.msra.mxu0 0.0
    %558 = vmatprep.subr.mxu0 0.0
    %559 = vmatpush1.msra.mxu0 0.0
    %560 = vmatprep.subr.mxu0 0.0
    %561 = vmatpush1.msra.mxu0 0.0
    %562 = vmatprep.subr.mxu0 0.0
    %563 = vmatpush1.msra.mxu0 0.0
    %564 = vmatprep.subr.mxu0 0.0
    %565 = vmatpush1.msra.mxu0 0.0
    %566 = vmatprep.subr.mxu0 0.0
    %567 = vmatpush1.msra.mxu0 0.0
    %568 = vmatprep.subr.mxu0 0.0
    %569 = vmatpush1.msra.mxu0 0.0
    %570 = vmatprep.subr.mxu0 0.0
    %571 = vmatpush1.msra.mxu0 0.0
    %572 = vmatprep.subr.mxu0 0.0
    %573 = vmatpush1.msra.mxu0 0.0
    %574 = vmatprep.subr.mxu0 0.0
    %575 = vmatpush1.msra.mxu0 0.0
    %576 = vmatprep.subr.mxu0 0.0
    %577 = vmatpush1.msra.mxu0 0.0
    %578 = vmatprep.subr.mxu0 0.0
    %579 = vmatpush1.msra.mxu0 0.0
    %580 = vmatprep.subr.mxu0 0.0
    %581 = vmatpush1.msra.mxu0 0.0
    %582 = vmatprep.subr.mxu0 0.0
    %583 = vmatpush1.msra.mxu0 0.0
    %584 = vmatprep.subr.mxu0 0.0
    %585 = vmatpush1.msra.mxu0 0.0
    %586 = vmatprep.subr.mxu0 0.0
    %587 = vmatpush1.msra.mxu0 0.0
    %588 = vmatprep.subr.mxu0 0.0
    %589 = vmatpush1.msra.mxu0 0.0
    %590 = vmatprep.subr.mxu0 0.0
    %591 = vmatpush1.msra.mxu0 0.0
    %592 = vmatprep.subr.mxu0 0.0
    %593 = vmatpush1.msra.mxu0 0.0
    %594 = vmatprep.mubr.f32.mxu0 0.0
    %595 = vmatmul.mubr.f32.gmra.mrb[0].mxu0 %v528
    %v596 = vpop.f32.mrb[0].mxu0
    %v597 = vadd.f32 0.0, %v596
    %v598 = vpop.f32.mrb[0].mxu0
    %599 = vdwg.mxu0
    %v600 = vadd.f32 %v512, %v597
    %v601 = vxor.u32 %v600, 2147483648
    %v602 = vmul.f32 %v601, 1.442695
    %v603 = vpow.pop %v602
    %v604 = vadd.f32 %v603, 1.0
    %v605 = vrcp.pop %v604
    %v606 = vmul.f32 1.0, %v605
    %v607 = vtanh.pop %v600
    %v608 = vmul.f32 %v606, %v501
    %610 = vrot.lane.b32.xlu0 %v607, 64
    %v611 = vpop.permute.xlu0 %610
    %v613 = vmul.f32 %v606, %v611
    %615 = vrot.lane.b32.xlu0 %v613, 32
    %v616 = vpop.permute.xlu0 %615
    %v618 = vadd.f32 %v608, %v616
    %v619 = vtanh.pop %v618
    %621 = vrot.lane.b32.xlu0 %v619, 64
    %v622 = vpop.permute.xlu0 %621
    %v624 = vmul.f32 %v606, %v622
    %v626 = vrot.slane %v128, 4
    %v628 = vsel %vm148, %v130, %v626
    %630 = vrot.lane.b32.xlu0 %v624, 32
    %v631 = vpop.permute.xlu0 %630
    %v633 = vsel %vm87, %v631, 0.0
    %v634 = vrot.slane %v624, 2
    %635 = vrot.lane.b32.xlu0 %v634, 64
    %v636 = vpop.permute.xlu0 %635
    %v638 = vsel %vm87, 0.0, %v636
    %v640 = vrot.slane %v638, 6
    %v642 = vsel %vm148, %v633, %v640
    %v644 = vsel %vm172, %v642, 0
    %646 = vmatprep.subr.mxu0 0.0
    %647 = vmatpush1.msra.mxu0 %v134
    %648 = vmatprep.subr.mxu0 0.0
    %649 = vmatpush1.msra.mxu0 %v135
    %650 = vmatprep.subr.mxu0 0.0
    %651 = vmatpush1.msra.mxu0 %v136
    %652 = vmatprep.subr.mxu0 0.0
    %653 = vmatpush1.msra.mxu0 %v137
    %654 = vmatprep.subr.mxu0 0.0
    %655 = vmatpush1.msra.mxu0 %v138
    %656 = vmatprep.subr.mxu0 0.0
    %657 = vmatpush1.msra.mxu0 %v139
    %658 = vmatprep.subr.mxu0 0.0
    %659 = vmatpush1.msra.mxu0 %v140
    %660 = vmatprep.subr.mxu0 0.0
    %661 = vmatpush1.msra.mxu0 %v141
    %662 = vmatprep.subr.mxu0 0.0
    %663 = vmatpush1.msra.mxu0 0.0
    %664 = vmatprep.subr.mxu0 0.0
    %665 = vmatpush1.msra.mxu0 0.0
    %666 = vmatprep.subr.mxu0 0.0
    %667 = vmatpush1.msra.mxu0 0.0
    %668 = vmatprep.subr.mxu0 0.0
    %669 = vmatpush1.msra.mxu0 0.0
    %670 = vmatprep.subr.mxu0 0.0
    %671 = vmatpush1.msra.mxu0 0.0
    %672 = vmatprep.subr.mxu0 0.0
    %673 = vmatpush1.msra.mxu0 0.0
    %674 = vmatprep.subr.mxu0 0.0
    %675 = vmatpush1.msra.mxu0 0.0
    %676 = vmatprep.subr.mxu0 0.0
    %677 = vmatpush1.msra.mxu0 0.0
    %678 = vmatprep.subr.mxu0 0.0
    %679 = vmatpush1.msra.mxu0 0.0
    %680 = vmatprep.subr.mxu0 0.0
    %681 = vmatpush1.msra.mxu0 0.0
    %682 = vmatprep.subr.mxu0 0.0
    %683 = vmatpush1.msra.mxu0 0.0
    %684 = vmatprep.subr.mxu0 0.0
    %685 = vmatpush1.msra.mxu0 0.0
    %686 = vmatprep.subr.mxu0 0.0
    %687 = vmatpush1.msra.mxu0 0.0
    %688 = vmatprep.subr.mxu0 0.0
    %689 = vmatpush1.msra.mxu0 0.0
    %690 = vmatprep.subr.mxu0 0.0
    %691 = vmatpush1.msra.mxu0 0.0
    %692 = vmatprep.subr.mxu0 0.0
    %693 = vmatpush1.msra.mxu0 0.0
    %694 = vmatprep.subr.mxu0 0.0
    %695 = vmatpush1.msra.mxu0 0.0
    %696 = vmatprep.subr.mxu0 0.0
    %697 = vmatpush1.msra.mxu0 0.0
    %698 = vmatprep.subr.mxu0 0.0
    %699 = vmatpush1.msra.mxu0 0.0
    %700 = vmatprep.subr.mxu0 0.0
    %701 = vmatpush1.msra.mxu0 0.0
    %702 = vmatprep.subr.mxu0 0.0
    %703 = vmatpush1.msra.mxu0 0.0
    %704 = vmatprep.subr.mxu0 0.0
    %705 = vmatpush1.msra.mxu0 0.0
    %706 = vmatprep.subr.mxu0 0.0
    %707 = vmatpush1.msra.mxu0 0.0
    %708 = vmatprep.subr.mxu0 0.0
    %709 = vmatpush1.msra.mxu0 0.0
    %710 = vmatprep.mubr.f32.mxu0 0.0
    %711 = vmatmul.mubr.f32.gmra.mrb[0].mxu0 %v644
    %v712 = vpop.f32.mrb[0].mxu0
    %v713 = vadd.f32 0.0, %v712
    %v714 = vpop.f32.mrb[0].mxu0
    %715 = vdwg.mxu0
    %v716 = vadd.f32 %v628, %v713
    %v717 = vxor.u32 %v716, 2147483648
    %v718 = vmul.f32 %v717, 1.442695
    %v719 = vpow.pop %v718
    %v720 = vadd.f32 %v719, 1.0
    %v721 = vrcp.pop %v720
    %v722 = vmul.f32 1.0, %v721
    %v723 = vtanh.pop %v716
    %v724 = vmul.f32 %v722, %v618
    %726 = vrot.lane.b32.xlu0 %v723, 64
    %v727 = vpop.permute.xlu0 %726
    %v729 = vmul.f32 %v722, %v727
    %731 = vrot.lane.b32.xlu0 %v729, 32
    %v732 = vpop.permute.xlu0 %731
    %v734 = vadd.f32 %v724, %v732
    %v735 = vtanh.pop %v734
    %737 = vrot.lane.b32.xlu0 %v735, 64
    %v738 = vpop.permute.xlu0 %737
    %v740 = vmul.f32 %v722, %v738
    %v742 = vrot.slane %v130, 2
    %v744 = vrot.slane %v128, 2
    %v746 = vsel %vm148, %v742, %v744
    %748 = vrot.lane.b32.xlu0 %v740, 32
    %v749 = vpop.permute.xlu0 %748
    %v751 = vsel %vm87, %v749, 0.0
    %v752 = vrot.slane %v740, 2
    %753 = vrot.lane.b32.xlu0 %v752, 64
    %v754 = vpop.permute.xlu0 %753
    %v756 = vsel %vm87, 0.0, %v754
    %v758 = vrot.slane %v756, 6
    %v760 = vsel %vm148, %v751, %v758
    %v762 = vsel %vm172, %v760, 0
    %764 = vmatprep.subr.mxu0 0.0
    %765 = vmatpush1.msra.mxu0 %v134
    %766 = vmatprep.subr.mxu0 0.0
    %767 = vmatpush1.msra.mxu0 %v135
    %768 = vmatprep.subr.mxu0 0.0
    %769 = vmatpush1.msra.mxu0 %v136
    %770 = vmatprep.subr.mxu0 0.0
    %771 = vmatpush1.msra.mxu0 %v137
    %772 = vmatprep.subr.mxu0 0.0
    %773 = vmatpush1.msra.mxu0 %v138
    %774 = vmatprep.subr.mxu0 0.0
    %775 = vmatpush1.msra.mxu0 %v139
    %776 = vmatprep.subr.mxu0 0.0
    %777 = vmatpush1.msra.mxu0 %v140
    %778 = vmatprep.subr.mxu0 0.0
    %779 = vmatpush1.msra.mxu0 %v141
    %780 = vmatprep.subr.mxu0 0.0
    %781 = vmatpush1.msra.mxu0 0.0
    %782 = vmatprep.subr.mxu0 0.0
    %783 = vmatpush1.msra.mxu0 0.0
    %784 = vmatprep.subr.mxu0 0.0
    %785 = vmatpush1.msra.mxu0 0.0
    %786 = vmatprep.subr.mxu0 0.0
    %787 = vmatpush1.msra.mxu0 0.0
    %788 = vmatprep.subr.mxu0 0.0
    %789 = vmatpush1.msra.mxu0 0.0
    %790 = vmatprep.subr.mxu0 0.0
    %791 = vmatpush1.msra.mxu0 0.0
    %792 = vmatprep.subr.mxu0 0.0
    %793 = vmatpush1.msra.mxu0 0.0
    %794 = vmatprep.subr.mxu0 0.0
    %795 = vmatpush1.msra.mxu0 0.0
    %796 = vmatprep.subr.mxu0 0.0
    %797 = vmatpush1.msra.mxu0 0.0
    %798 = vmatprep.subr.mxu0 0.0
    %799 = vmatpush1.msra.mxu0 0.0
    %800 = vmatprep.subr.mxu0 0.0
    %801 = vmatpush1.msra.mxu0 0.0
    %802 = vmatprep.subr.mxu0 0.0
    %803 = vmatpush1.msra.mxu0 0.0
    %804 = vmatprep.subr.mxu0 0.0
    %805 = vmatpush1.msra.mxu0 0.0
    %806 = vmatprep.subr.mxu0 0.0
    %807 = vmatpush1.msra.mxu0 0.0
    %808 = vmatprep.subr.mxu0 0.0
    %809 = vmatpush1.msra.mxu0 0.0
    %810 = vmatprep.subr.mxu0 0.0
    %811 = vmatpush1.msra.mxu0 0.0
    %812 = vmatprep.subr.mxu0 0.0
    %813 = vmatpush1.msra.mxu0 0.0
    %814 = vmatprep.subr.mxu0 0.0
    %815 = vmatpush1.msra.mxu0 0.0
    %816 = vmatprep.subr.mxu0 0.0
    %817 = vmatpush1.msra.mxu0 0.0
    %818 = vmatprep.subr.mxu0 0.0
    %819 = vmatpush1.msra.mxu0 0.0
    %820 = vmatprep.subr.mxu0 0.0
    %821 = vmatpush1.msra.mxu0 0.0
    %822 = vmatprep.subr.mxu0 0.0
    %823 = vmatpush1.msra.mxu0 0.0
    %824 = vmatprep.subr.mxu0 0.0
    %825 = vmatpush1.msra.mxu0 0.0
    %826 = vmatprep.subr.mxu0 0.0
    %827 = vmatpush1.msra.mxu0 0.0
    %828 = vmatprep.mubr.f32.mxu0 0.0
    %829 = vmatmul.mubr.f32.gmra.mrb[0].mxu0 %v762
    %v830 = vpop.f32.mrb[0].mxu0
    %v831 = vadd.f32 0.0, %v830
    %v832 = vpop.f32.mrb[0].mxu0
    %833 = vdwg.mxu0
    %v834 = vadd.f32 %v746, %v831
    %v835 = vxor.u32 %v834, 2147483648
    %v836 = vmul.f32 %v835, 1.442695
    %v837 = vpow.pop %v836
    %v838 = vadd.f32 %v837, 1.0
    %v839 = vrcp.pop %v838
    %v840 = vmul.f32 1.0, %v839
    %v841 = vtanh.pop %v834
    %v842 = vmul.f32 %v840, %v734
    %844 = vrot.lane.b32.xlu0 %v841, 64
    %v845 = vpop.permute.xlu0 %844
    %v847 = vmul.f32 %v840, %v845
    %849 = vrot.lane.b32.xlu0 %v847, 32
    %v850 = vpop.permute.xlu0 %849
    %v852 = vadd.f32 %v842, %v850
    %v853 = vtanh.pop %v852
    %855 = vrot.lane.b32.xlu0 %v853, 64
    %v856 = vpop.permute.xlu0 %855
    %v858 = vmul.f32 %v840, %v856
    %v859 = vrot.slane %v130, 4
    %v861 = vsel %vm148, %v859, %v128
    %863 = vrot.lane.b32.xlu0 %v858, 32
    %v864 = vpop.permute.xlu0 %863
    %v866 = vsel %vm87, %v864, 0.0
    %v867 = vrot.slane %v858, 2
    %868 = vrot.lane.b32.xlu0 %v867, 64
    %v869 = vpop.permute.xlu0 %868
    %v871 = vsel %vm87, 0.0, %v869
    %v873 = vrot.slane %v871, 6
    %v875 = vsel %vm148, %v866, %v873
    %v877 = vsel %vm172, %v875, 0
    %879 = vmatprep.subr.mxu0 0.0
    %880 = vmatpush1.msra.mxu0 %v134
    %881 = vmatprep.subr.mxu0 0.0
    %882 = vmatpush1.msra.mxu0 %v135
    %883 = vmatprep.subr.mxu0 0.0
    %884 = vmatpush1.msra.mxu0 %v136
    %885 = vmatprep.subr.mxu0 0.0
    %886 = vmatpush1.msra.mxu0 %v137
    %887 = vmatprep.subr.mxu0 0.0
    %888 = vmatpush1.msra.mxu0 %v138
    %889 = vmatprep.subr.mxu0 0.0
    %890 = vmatpush1.msra.mxu0 %v139
    %891 = vmatprep.subr.mxu0 0.0
    %892 = vmatpush1.msra.mxu0 %v140
    %893 = vmatprep.subr.mxu0 0.0
    %894 = vmatpush1.msra.mxu0 %v141
    %895 = vmatprep.subr.mxu0 0.0
    %896 = vmatpush1.msra.mxu0 0.0
    %897 = vmatprep.subr.mxu0 0.0
    %898 = vmatpush1.msra.mxu0 0.0
    %899 = vmatprep.subr.mxu0 0.0
    %900 = vmatpush1.msra.mxu0 0.0
    %901 = vmatprep.subr.mxu0 0.0
    %902 = vmatpush1.msra.mxu0 0.0
    %903 = vmatprep.subr.mxu0 0.0
    %904 = vmatpush1.msra.mxu0 0.0
    %905 = vmatprep.subr.mxu0 0.0
    %906 = vmatpush1.msra.mxu0 0.0
    %907 = vmatprep.subr.mxu0 0.0
    %908 = vmatpush1.msra.mxu0 0.0
    %909 = vmatprep.subr.mxu0 0.0
    %910 = vmatpush1.msra.mxu0 0.0
    %911 = vmatprep.subr.mxu0 0.0
    %912 = vmatpush1.msra.mxu0 0.0
    %913 = vmatprep.subr.mxu0 0.0
    %914 = vmatpush1.msra.mxu0 0.0
    %915 = vmatprep.subr.mxu0 0.0
    %916 = vmatpush1.msra.mxu0 0.0
    %917 = vmatprep.subr.mxu0 0.0
    %918 = vmatpush1.msra.mxu0 0.0
    %919 = vmatprep.subr.mxu0 0.0
    %920 = vmatpush1.msra.mxu0 0.0
    %921 = vmatprep.subr.mxu0 0.0
    %922 = vmatpush1.msra.mxu0 0.0
    %923 = vmatprep.subr.mxu0 0.0
    %924 = vmatpush1.msra.mxu0 0.0
    %925 = vmatprep.subr.mxu0 0.0
    %926 = vmatpush1.msra.mxu0 0.0
    %927 = vmatprep.subr.mxu0 0.0
    %928 = vmatpush1.msra.mxu0 0.0
    %929 = vmatprep.subr.mxu0 0.0
    %930 = vmatpush1.msra.mxu0 0.0
    %931 = vmatprep.subr.mxu0 0.0
    %932 = vmatpush1.msra.mxu0 0.0
    %933 = vmatprep.subr.mxu0 0.0
    %934 = vmatpush1.msra.mxu0 0.0
    %935 = vmatprep.subr.mxu0 0.0
    %936 = vmatpush1.msra.mxu0 0.0
    %937 = vmatprep.subr.mxu0 0.0
    %938 = vmatpush1.msra.mxu0 0.0
    %939 = vmatprep.subr.mxu0 0.0
    %940 = vmatpush1.msra.mxu0 0.0
    %941 = vmatprep.subr.mxu0 0.0
    %942 = vmatpush1.msra.mxu0 0.0
    %943 = vmatprep.mubr.f32.mxu0 0.0
    %944 = vmatmul.mubr.f32.gmra.mrb[0].mxu0 %v877
    %v945 = vpop.f32.mrb[0].mxu0
    %v946 = vadd.f32 0.0, %v945
    %v947 = vpop.f32.mrb[0].mxu0
    %948 = vdwg.mxu0
    %v949 = vadd.f32 %v861, %v946
    %v950 = vxor.u32 %v949, 2147483648
    %v951 = vmul.f32 %v950, 1.442695
    %v952 = vpow.pop %v951
    %v953 = vadd.f32 %v952, 1.0
    %v954 = vrcp.pop %v953
    %v955 = vmul.f32 1.0, %v954
    %v956 = vtanh.pop %v949
    %v957 = vmul.f32 %v955, %v852
    %959 = vrot.lane.b32.xlu0 %v956, 64
    %v960 = vpop.permute.xlu0 %959
    %v962 = vmul.f32 %v955, %v960
    %964 = vrot.lane.b32.xlu0 %v962, 32
    %v965 = vpop.permute.xlu0 %964
    %v967 = vadd.f32 %v957, %v965
    %v968 = vtanh.pop %v967
    %970 = vrot.lane.b32.xlu0 %v968, 64
    %v971 = vpop.permute.xlu0 %970
    %v973 = vmul.f32 %v955, %v971
    %v974 = vrot.slane %v130, 6
    %v976 = vrot.slane %v128, 6
    %v978 = vsel %vm148, %v974, %v976
    %980 = vrot.lane.b32.xlu0 %v973, 32
    %v981 = vpop.permute.xlu0 %980
    %v983 = vsel %vm87, %v981, 0.0
    %v984 = vrot.slane %v973, 2
    %985 = vrot.lane.b32.xlu0 %v984, 64
    %v986 = vpop.permute.xlu0 %985
    %v988 = vsel %vm87, 0.0, %v986
    %v990 = vrot.slane %v988, 6
    %v992 = vsel %vm148, %v983, %v990
    %v994 = vsel %vm172, %v992, 0
    %996 = vmatprep.subr.mxu0 0.0
    %997 = vmatpush1.msra.mxu0 %v134
    %998 = vmatprep.subr.mxu0 0.0
    %999 = vmatpush1.msra.mxu0 %v135
    %1000 = vmatprep.subr.mxu0 0.0
    %1001 = vmatpush1.msra.mxu0 %v136
    %1002 = vmatprep.subr.mxu0 0.0
    %1003 = vmatpush1.msra.mxu0 %v137
    %1004 = vmatprep.subr.mxu0 0.0
    %1005 = vmatpush1.msra.mxu0 %v138
    %1006 = vmatprep.subr.mxu0 0.0
    %1007 = vmatpush1.msra.mxu0 %v139
    %1008 = vmatprep.subr.mxu0 0.0
    %1009 = vmatpush1.msra.mxu0 %v140
    %1010 = vmatprep.subr.mxu0 0.0
    %1011 = vmatpush1.msra.mxu0 %v141
    %1012 = vmatprep.subr.mxu0 0.0
    %1013 = vmatpush1.msra.mxu0 0.0
    %1014 = vmatprep.subr.mxu0 0.0
    %1015 = vmatpush1.msra.mxu0 0.0
    %1016 = vmatprep.subr.mxu0 0.0
    %1017 = vmatpush1.msra.mxu0 0.0
    %1018 = vmatprep.subr.mxu0 0.0
    %1019 = vmatpush1.msra.mxu0 0.0
    %1020 = vmatprep.subr.mxu0 0.0
    %1021 = vmatpush1.msra.mxu0 0.0
    %1022 = vmatprep.subr.mxu0 0.0
    %1023 = vmatpush1.msra.mxu0 0.0
    %1024 = vmatprep.subr.mxu0 0.0
    %1025 = vmatpush1.msra.mxu0 0.0
    %1026 = vmatprep.subr.mxu0 0.0
    %1027 = vmatpush1.msra.mxu0 0.0
    %1028 = vmatprep.subr.mxu0 0.0
    %1029 = vmatpush1.msra.mxu0 0.0
    %1030 = vmatprep.subr.mxu0 0.0
    %1031 = vmatpush1.msra.mxu0 0.0
    %1032 = vmatprep.subr.mxu0 0.0
    %1033 = vmatpush1.msra.mxu0 0.0
    %1034 = vmatprep.subr.mxu0 0.0
    %1035 = vmatpush1.msra.mxu0 0.0
    %1036 = vmatprep.subr.mxu0 0.0
    %1037 = vmatpush1.msra.mxu0 0.0
    %1038 = vmatprep.subr.mxu0 0.0
    %1039 = vmatpush1.msra.mxu0 0.0
    %1040 = vmatprep.subr.mxu0 0.0
    %1041 = vmatpush1.msra.mxu0 0.0
    %1042 = vmatprep.subr.mxu0 0.0
    %1043 = vmatpush1.msra.mxu0 0.0
    %1044 = vmatprep.subr.mxu0 0.0
    %1045 = vmatpush1.msra.mxu0 0.0
    %1046 = vmatprep.subr.mxu0 0.0
    %1047 = vmatpush1.msra.mxu0 0.0
    %1048 = vmatprep.subr.mxu0 0.0
    %1049 = vmatpush1.msra.mxu0 0.0
    %1050 = vmatprep.subr.mxu0 0.0
    %1051 = vmatpush1.msra.mxu0 0.0
    %1052 = vmatprep.subr.mxu0 0.0
    %1053 = vmatpush1.msra.mxu0 0.0
    %1054 = vmatprep.subr.mxu0 0.0
    %1055 = vmatpush1.msra.mxu0 0.0
    %1056 = vmatprep.subr.mxu0 0.0
    %1057 = vmatpush1.msra.mxu0 0.0
    %1058 = vmatprep.subr.mxu0 0.0
    %1059 = vmatpush1.msra.mxu0 0.0
    %1060 = vmatprep.mubr.f32.mxu0 0.0
    %1061 = vmatmul.mubr.f32.gmra.mrb[0].mxu0 %v994
    %v1062 = vpop.f32.mrb[0].mxu0
    %v1063 = vadd.f32 0.0, %v1062
    %v1064 = vpop.f32.mrb[0].mxu0
    %1065 = vdwg.mxu0
    %v1066 = vadd.f32 %v978, %v1063
    %v1067 = vxor.u32 %v1066, 2147483648
    %v1068 = vmul.f32 %v1067, 1.442695
    %v1069 = vpow.pop %v1068
    %v1070 = vadd.f32 %v1069, 1.0
    %v1071 = vrcp.pop %v1070
    %v1072 = vmul.f32 1.0, %v1071
    %v1073 = vtanh.pop %v1066
    %v1074 = vmul.f32 %v1072, %v967
    %1076 = vrot.lane.b32.xlu0 %v1073, 64
    %v1077 = vpop.permute.xlu0 %1076
    %v1079 = vmul.f32 %v1072, %v1077
    %1081 = vrot.lane.b32.xlu0 %v1079, 32
    %v1082 = vpop.permute.xlu0 %1081
    %v1084 = vadd.f32 %v1074, %v1082
    %v1085 = vtanh.pop %v1084
    %1087 = vrot.lane.b32.xlu0 %v1085, 64
    %v1088 = vpop.permute.xlu0 %1087
    %v1090 = vmul.f32 %v1072, %v1088
    %v1091 = vrot.slane %v392, 6
    %v1093 = vrot.slane %v507, 4
    %v1096 = vrot.slane %v858, 6
    %v1098 = vrot.slane %v973, 4
    %v1101 = vrot.slane %v1090, 2
    %v1103 = vsel %vm148, %v274, %v1091
    %vm1104 = vcmask 1043456
    %v1105 = vsel %vm1104, %v1103, %v1093
    %vm1106 = vcmask 1045504
    %v1107 = vsel %vm1106, %v1105, %v634
    %v1108 = vsel %vm148, %v740, %v1096
    %v1109 = vsel %vm1104, %v1108, %v1098
    %v1110 = vsel %vm1106, %v1109, %v1101
    %v1111 = vrot.slane %v740, 4
    %v1113 = vrot.slane %v274, 4
    %v1115 = vsel %vm148, %v1101, %v973
    %v1116 = vsel %vm1104, %v1115, %v1096
    %v1117 = vsel %vm1106, %v1116, %v1111
    %v1118 = vsel %vm148, %v634, %v507
    %v1119 = vsel %vm1104, %v1118, %v1091
    %v1120 = vsel %vm1106, %v1119, %v1113
    %1123 = vrot.lane.b32.xlu0 %v1107, 32
    %v1124 = vpop.permute.xlu0 %1123
    %1125 = vrot.lane.b32.xlu0 %v1110, 32
    %v1126 = vpop.permute.xlu0 %1125
    %1131 = vrot.lane.b32.xlu0 %v1117, 64
    %v1132 = vpop.permute.xlu0 %1131
    %1133 = vrot.lane.b32.xlu0 %v1120, 64
    %v1134 = vpop.permute.xlu0 %1133
    %v1137 = vsel %vm87, %v1124, %v1132
    %v1138 = vsel %vm87, %v1126, %v1134
    %v1139 = vpack.c.bf16 %v1138, %v1137
    %v1140 = vld [vmem:[%s6] sm:$0xff]
    %v1141 = vld [vmem:[%s6 + $0x8] sm:$0xff]
    %v1142 = vld [vmem:[%s6 + $0x10] sm:$0xff]
    %v1143 = vld [vmem:[%s6 + $0x18] sm:$0xff]
    %v1144 = vld [vmem:[%s6 + $0x20] sm:$0xff]
    %v1145 = vld [vmem:[%s6 + $0x28] sm:$0xff]
    %v1146 = vld [vmem:[%s6 + $0x30] sm:$0xff]
    %v1147 = vld [vmem:[%s6 + $0x38] sm:$0xff]
    %v1148 = vld [vmem:[%s7] sm:$0x3]
    %v1150 = vlaneseq
    %v1151 = vshrl.u32 %v1150, 7
    %v1152 = vsub.s32 0, %v1151
    %v1153 = vrot.slane %v1148, %v1152
    %v1154 = vlaneseq
    %v1155 = vshrl.u32 %v1154, 7
    %v1156 = vsub.s32 1, %v1155
    %v1157 = vrot.slane %v1148, %v1156
    %v1168 = vunpack.c.l.b16 %v1140
    %v1169 = vunpack.c.h.b16 %v1140
    %v1170 = vunpack.c.l.b16 %v1141
    %v1171 = vunpack.c.h.b16 %v1141
    %v1172 = vunpack.c.l.b16 %v1142
    %v1173 = vunpack.c.h.b16 %v1142
    %v1174 = vunpack.c.l.b16 %v1143
    %v1175 = vunpack.c.h.b16 %v1143
    %v1176 = vunpack.c.l.b16 %v1144
    %v1177 = vunpack.c.h.b16 %v1144
    %v1178 = vunpack.c.l.b16 %v1145
    %v1179 = vunpack.c.h.b16 %v1145
    %v1180 = vunpack.c.l.b16 %v1146
    %v1181 = vunpack.c.h.b16 %v1146
    %v1182 = vunpack.c.l.b16 %v1147
    %v1183 = vunpack.c.h.b16 %v1147
    %v1184 = vpack.c.b16 %v1170, %v1168
    %v1185 = vpack.c.b16 %v1171, %v1169
    %v1186 = vpack.c.b16 %v1174, %v1172
    %v1187 = vpack.c.b16 %v1175, %v1173
    %v1188 = vpack.c.b16 %v1178, %v1176
    %v1189 = vpack.c.b16 %v1179, %v1177
    %v1190 = vpack.c.b16 %v1182, %v1180
    %v1191 = vpack.c.b16 %v1183, %v1181
    %v1201 = vsel %vm172, %v1139, 0
    %1203 = vmatprep.subr.bf16.mxu0 %v1185
    %1204 = vmatpush1.bf16.msra.mxu0 %v1184
    %1205 = vmatprep.subr.bf16.mxu0 %v1187
    %1206 = vmatpush1.bf16.msra.mxu0 %v1186
    %1207 = vmatprep.subr.bf16.mxu0 %v1189
    %1208 = vmatpush1.bf16.msra.mxu0 %v1188
    %1209 = vmatprep.subr.bf16.mxu0 %v1191
    %1210 = vmatpush1.bf16.msra.mxu0 %v1190
    %1211 = vmatprep.subr.bf16.mxu0 0
    %1212 = vmatpush1.bf16.msra.mxu0 0
    %1213 = vmatprep.subr.bf16.mxu0 0
    %1214 = vmatpush1.bf16.msra.mxu0 0
    %1215 = vmatprep.subr.bf16.mxu0 0
    %1216 = vmatpush1.bf16.msra.mxu0 0
    %1217 = vmatprep.subr.bf16.mxu0 0
    %1218 = vmatpush1.bf16.msra.mxu0 0
    %1219 = vmatprep.subr.bf16.mxu0 0
    %1220 = vmatpush1.bf16.msra.mxu0 0
    %1221 = vmatprep.subr.bf16.mxu0 0
    %1222 = vmatpush1.bf16.msra.mxu0 0
    %1223 = vmatprep.subr.bf16.mxu0 0
    %1224 = vmatpush1.bf16.msra.mxu0 0
    %1225 = vmatprep.subr.bf16.mxu0 0
    %1226 = vmatpush1.bf16.msra.mxu0 0
    %1227 = vmatprep.subr.bf16.mxu0 0
    %1228 = vmatpush1.bf16.msra.mxu0 0
    %1229 = vmatprep.subr.bf16.mxu0 0
    %1230 = vmatpush1.bf16.msra.mxu0 0
    %1231 = vmatprep.subr.bf16.mxu0 0
    %1232 = vmatpush1.bf16.msra.mxu0 0
    %1233 = vmatprep.subr.bf16.mxu0 0
    %1234 = vmatpush1.bf16.msra.mxu0 0
    %1235 = vmatprep.mubr.bf16.mxu0 0
    %1236 = vmatmul.mubr.bf16.gmra.mrb[0].mxu0 %v1201
    %v1237 = vpop.f32.mrb[0].mxu0
    %v1238 = vadd.f32 %v1153, %v1237
    %v1239 = vpop.f32.mrb[0].mxu0
    %v1240 = vadd.f32 %v1157, %v1239
    %v1241 = vpop.f32.mrb[0].mxu0
    %v1242 = vadd.f32 %v1153, %v1241
    %v1243 = vpop.f32.mrb[0].mxu0
    %v1244 = vadd.f32 %v1157, %v1243
    %1245 = vdwg.mxu0
    %v1246 = vld [vmem:[%s8] sm:$0xff]
    %v1247 = vld [vmem:[%s8 + $0x8] sm:$0xff]
    %v1248 = vld [vmem:[%s8 + $0x10] sm:$0xff]
    %v1249 = vld [vmem:[%s8 + $0x18] sm:$0xff]
    %v1250 = vld [vmem:[%s8 + $0x20] sm:$0xff]
    %v1251 = vld [vmem:[%s8 + $0x28] sm:$0xff]
    %v1252 = vld [vmem:[%s8 + $0x30] sm:$0xff]
    %v1253 = vld [vmem:[%s8 + $0x38] sm:$0xff]
    %s1254 = scalar_lea.vmem %s1, 4
    %v1255 = vld [vmem:[%s1254] sm:$0x3]
    %s1256 = scalar_lea.vmem %s1, 6
    %v1257 = vld [vmem:[%s1256] sm:$0x3]
    %v1259 = vrot.slane %v1257, 6
    %v1261 = vsel %vm148, %v1255, %v1259
    %s1262 = scalar_lea.vmem %s2, 4
    %v1263 = vld [vmem:[%s1262] sm:$0x3]
    %s1264 = scalar_lea.vmem %s2, 6
    %v1265 = vld [vmem:[%s1264] sm:$0x3]
    %v1267 = vrot.slane %v1265, 6
    %v1269 = vsel %vm148, %v1263, %v1267
    %v1271 = vrot.slane %v1244, 4
    %v1273 = vsel %vm148, %v1238, %v1271
    %v1274 = vsel %vm87, %v1261, 0.0
    %v1276 = vrot.slane %v1261, 2
    %1277 = vrot.lane.b32.xlu0 %v1276, 32
    %v1278 = vpop.permute.xlu0 %1277
    %v1280 = vsel %vm87, 0.0, %v1278
    %v1282 = vrot.slane %v1280, 6
    %v1284 = vsel %vm148, %v1274, %v1282
    %v1286 = vsel %vm172, %v1284, 0
    %1288 = vmatprep.subr.mxu0 0.0
    %1289 = vmatpush1.msra.mxu0 %v1246
    %1290 = vmatprep.subr.mxu0 0.0
    %1291 = vmatpush1.msra.mxu0 %v1247
    %1292 = vmatprep.subr.mxu0 0.0
    %1293 = vmatpush1.msra.mxu0 %v1248
    %1294 = vmatprep.subr.mxu0 0.0
    %1295 = vmatpush1.msra.mxu0 %v1249
    %1296 = vmatprep.subr.mxu0 0.0
    %1297 = vmatpush1.msra.mxu0 %v1250
    %1298 = vmatprep.subr.mxu0 0.0
    %1299 = vmatpush1.msra.mxu0 %v1251
    %1300 = vmatprep.subr.mxu0 0.0
    %1301 = vmatpush1.msra.mxu0 %v1252
    %1302 = vmatprep.subr.mxu0 0.0
    %1303 = vmatpush1.msra.mxu0 %v1253
    %1304 = vmatprep.subr.mxu0 0.0
    %1305 = vmatpush1.msra.mxu0 0.0
    %1306 = vmatprep.subr.mxu0 0.0
    %1307 = vmatpush1.msra.mxu0 0.0
    %1308 = vmatprep.subr.mxu0 0.0
    %1309 = vmatpush1.msra.mxu0 0.0
    %1310 = vmatprep.subr.mxu0 0.0
    %1311 = vmatpush1.msra.mxu0 0.0
    %1312 = vmatprep.subr.mxu0 0.0
    %1313 = vmatpush1.msra.mxu0 0.0
    %1314 = vmatprep.subr.mxu0 0.0
    %1315 = vmatpush1.msra.mxu0 0.0
    %1316 = vmatprep.subr.mxu0 0.0
    %1317 = vmatpush1.msra.mxu0 0.0
    %1318 = vmatprep.subr.mxu0 0.0
    %1319 = vmatpush1.msra.mxu0 0.0
    %1320 = vmatprep.subr.mxu0 0.0
    %1321 = vmatpush1.msra.mxu0 0.0
    %1322 = vmatprep.subr.mxu0 0.0
    %1323 = vmatpush1.msra.mxu0 0.0
    %1324 = vmatprep.subr.mxu0 0.0
    %1325 = vmatpush1.msra.mxu0 0.0
    %1326 = vmatprep.subr.mxu0 0.0
    %1327 = vmatpush1.msra.mxu0 0.0
    %1328 = vmatprep.subr.mxu0 0.0
    %1329 = vmatpush1.msra.mxu0 0.0
    %1330 = vmatprep.subr.mxu0 0.0
    %1331 = vmatpush1.msra.mxu0 0.0
    %1332 = vmatprep.subr.mxu0 0.0
    %1333 = vmatpush1.msra.mxu0 0.0
    %1334 = vmatprep.subr.mxu0 0.0
    %1335 = vmatpush1.msra.mxu0 0.0
    %1336 = vmatprep.subr.mxu0 0.0
    %1337 = vmatpush1.msra.mxu0 0.0
    %1338 = vmatprep.subr.mxu0 0.0
    %1339 = vmatpush1.msra.mxu0 0.0
    %1340 = vmatprep.subr.mxu0 0.0
    %1341 = vmatpush1.msra.mxu0 0.0
    %1342 = vmatprep.subr.mxu0 0.0
    %1343 = vmatpush1.msra.mxu0 0.0
    %1344 = vmatprep.subr.mxu0 0.0
    %1345 = vmatpush1.msra.mxu0 0.0
    %1346 = vmatprep.subr.mxu0 0.0
    %1347 = vmatpush1.msra.mxu0 0.0
    %1348 = vmatprep.subr.mxu0 0.0
    %1349 = vmatpush1.msra.mxu0 0.0
    %1350 = vmatprep.subr.mxu0 0.0
    %1351 = vmatpush1.msra.mxu0 0.0
    %1352 = vmatprep.mubr.f32.mxu0 0.0
    %1353 = vmatmul.mubr.f32.gmra.mrb[0].mxu0 %v1286
    %v1354 = vpop.f32.mrb[0].mxu0
    %v1355 = vadd.f32 0.0, %v1354
    %v1356 = vpop.f32.mrb[0].mxu0
    %1357 = vdwg.mxu0
    %v1358 = vadd.f32 %v1273, %v1355
    %v1359 = vxor.u32 %v1358, 2147483648
    %v1360 = vmul.f32 %v1359, 1.442695
    %v1361 = vpow.pop %v1360
    %v1362 = vadd.f32 %v1361, 1.0
    %v1363 = vrcp.pop %v1362
    %v1364 = vmul.f32 1.0, %v1363
    %v1365 = vtanh.pop %v1358
    %1367 = vrot.lane.b32.xlu0 %v1269, 32
    %v1368 = vpop.permute.xlu0 %1367
    %v1370 = vmul.f32 %v1364, %v1368
    %1372 = vrot.lane.b32.xlu0 %v1365, 64
    %v1373 = vpop.permute.xlu0 %1372
    %v1375 = vmul.f32 %v1364, %v1373
    %1377 = vrot.lane.b32.xlu0 %v1375, 32
    %v1378 = vpop.permute.xlu0 %1377
    %v1380 = vadd.f32 %v1370, %v1378
    %v1381 = vtanh.pop %v1380
    %1383 = vrot.lane.b32.xlu0 %v1381, 64
    %v1384 = vpop.permute.xlu0 %1383
    %v1386 = vmul.f32 %v1364, %v1384
    %v1388 = vrot.slane %v1238, 2
    %v1390 = vrot.slane %v1244, 2
    %v1392 = vsel %vm148, %v1388, %v1390
    %1394 = vrot.lane.b32.xlu0 %v1386, 32
    %v1395 = vpop.permute.xlu0 %1394
    %v1397 = vsel %vm87, %v1395, 0.0
    %v1398 = vrot.slane %v1386, 2
    %1399 = vrot.lane.b32.xlu0 %v1398, 64
    %v1400 = vpop.permute.xlu0 %1399
    %v1402 = vsel %vm87, 0.0, %v1400
    %v1404 = vrot.slane %v1402, 6
    %v1406 = vsel %vm148, %v1397, %v1404
    %v1408 = vsel %vm172, %v1406, 0
    %1410 = vmatprep.subr.mxu0 0.0
    %1411 = vmatpush1.msra.mxu0 %v1246
    %1412 = vmatprep.subr.mxu0 0.0
    %1413 = vmatpush1.msra.mxu0 %v1247
    %1414 = vmatprep.subr.mxu0 0.0
    %1415 = vmatpush1.msra.mxu0 %v1248
    %1416 = vmatprep.subr.mxu0 0.0
    %1417 = vmatpush1.msra.mxu0 %v1249
    %1418 = vmatprep.subr.mxu0 0.0
    %1419 = vmatpush1.msra.mxu0 %v1250
    %1420 = vmatprep.subr.mxu0 0.0
    %1421 = vmatpush1.msra.mxu0 %v1251
    %1422 = vmatprep.subr.mxu0 0.0
    %1423 = vmatpush1.msra.mxu0 %v1252
    %1424 = vmatprep.subr.mxu0 0.0
    %1425 = vmatpush1.msra.mxu0 %v1253
    %1426 = vmatprep.subr.mxu0 0.0
    %1427 = vmatpush1.msra.mxu0 0.0
    %1428 = vmatprep.subr.mxu0 0.0
    %1429 = vmatpush1.msra.mxu0 0.0
    %1430 = vmatprep.subr.mxu0 0.0
    %1431 = vmatpush1.msra.mxu0 0.0
    %1432 = vmatprep.subr.mxu0 0.0
    %1433 = vmatpush1.msra.mxu0 0.0
    %1434 = vmatprep.subr.mxu0 0.0
    %1435 = vmatpush1.msra.mxu0 0.0
    %1436 = vmatprep.subr.mxu0 0.0
    %1437 = vmatpush1.msra.mxu0 0.0
    %1438 = vmatprep.subr.mxu0 0.0
    %1439 = vmatpush1.msra.mxu0 0.0
    %1440 = vmatprep.subr.mxu0 0.0
    %1441 = vmatpush1.msra.mxu0 0.0
    %1442 = vmatprep.subr.mxu0 0.0
    %1443 = vmatpush1.msra.mxu0 0.0
    %1444 = vmatprep.subr.mxu0 0.0
    %1445 = vmatpush1.msra.mxu0 0.0
    %1446 = vmatprep.subr.mxu0 0.0
    %1447 = vmatpush1.msra.mxu0 0.0
    %1448 = vmatprep.subr.mxu0 0.0
    %1449 = vmatpush1.msra.mxu0 0.0
    %1450 = vmatprep.subr.mxu0 0.0
    %1451 = vmatpush1.msra.mxu0 0.0
    %1452 = vmatprep.subr.mxu0 0.0
    %1453 = vmatpush1.msra.mxu0 0.0
    %1454 = vmatprep.subr.mxu0 0.0
    %1455 = vmatpush1.msra.mxu0 0.0
    %1456 = vmatprep.subr.mxu0 0.0
    %1457 = vmatpush1.msra.mxu0 0.0
    %1458 = vmatprep.subr.mxu0 0.0
    %1459 = vmatpush1.msra.mxu0 0.0
    %1460 = vmatprep.subr.mxu0 0.0
    %1461 = vmatpush1.msra.mxu0 0.0
    %1462 = vmatprep.subr.mxu0 0.0
    %1463 = vmatpush1.msra.mxu0 0.0
    %1464 = vmatprep.subr.mxu0 0.0
    %1465 = vmatpush1.msra.mxu0 0.0
    %1466 = vmatprep.subr.mxu0 0.0
    %1467 = vmatpush1.msra.mxu0 0.0
    %1468 = vmatprep.subr.mxu0 0.0
    %1469 = vmatpush1.msra.mxu0 0.0
    %1470 = vmatprep.subr.mxu0 0.0
    %1471 = vmatpush1.msra.mxu0 0.0
    %1472 = vmatprep.subr.mxu0 0.0
    %1473 = vmatpush1.msra.mxu0 0.0
    %1474 = vmatprep.mubr.f32.mxu0 0.0
    %1475 = vmatmul.mubr.f32.gmra.mrb[0].mxu0 %v1408
    %v1476 = vpop.f32.mrb[0].mxu0
    %v1477 = vadd.f32 0.0, %v1476
    %v1478 = vpop.f32.mrb[0].mxu0
    %1479 = vdwg.mxu0
    %v1480 = vadd.f32 %v1392, %v1477
    %v1481 = vxor.u32 %v1480, 2147483648
    %v1482 = vmul.f32 %v1481, 1.442695
    %v1483 = vpow.pop %v1482
    %v1484 = vadd.f32 %v1483, 1.0
    %v1485 = vrcp.pop %v1484
    %v1486 = vmul.f32 1.0, %v1485
    %v1487 = vtanh.pop %v1480
    %v1488 = vmul.f32 %v1486, %v1380
    %1490 = vrot.lane.b32.xlu0 %v1487, 64
    %v1491 = vpop.permute.xlu0 %1490
    %v1493 = vmul.f32 %v1486, %v1491
    %1495 = vrot.lane.b32.xlu0 %v1493, 32
    %v1496 = vpop.permute.xlu0 %1495
    %v1498 = vadd.f32 %v1488, %v1496
    %v1499 = vtanh.pop %v1498
    %1501 = vrot.lane.b32.xlu0 %v1499, 64
    %v1502 = vpop.permute.xlu0 %1501
    %v1504 = vmul.f32 %v1486, %v1502
    %v1505 = vrot.slane %v1238, 4
    %v1507 = vsel %vm148, %v1505, %v1244
    %1509 = vrot.lane.b32.xlu0 %v1504, 32
    %v1510 = vpop.permute.xlu0 %1509
    %v1512 = vsel %vm87, %v1510, 0.0
    %v1513 = vrot.slane %v1504, 2
    %1514 = vrot.lane.b32.xlu0 %v1513, 64
    %v1515 = vpop.permute.xlu0 %1514
    %v1517 = vsel %vm87, 0.0, %v1515
    %v1519 = vrot.slane %v1517, 6
    %v1521 = vsel %vm148, %v1512, %v1519
    %v1523 = vsel %vm172, %v1521, 0
    %1525 = vmatprep.subr.mxu0 0.0
    %1526 = vmatpush1.msra.mxu0 %v1246
    %1527 = vmatprep.subr.mxu0 0.0
    %1528 = vmatpush1.msra.mxu0 %v1247
    %1529 = vmatprep.subr.mxu0 0.0
    %1530 = vmatpush1.msra.mxu0 %v1248
    %1531 = vmatprep.subr.mxu0 0.0
    %1532 = vmatpush1.msra.mxu0 %v1249
    %1533 = vmatprep.subr.mxu0 0.0
    %1534 = vmatpush1.msra.mxu0 %v1250
    %1535 = vmatprep.subr.mxu0 0.0
    %1536 = vmatpush1.msra.mxu0 %v1251
    %1537 = vmatprep.subr.mxu0 0.0
    %1538 = vmatpush1.msra.mxu0 %v1252
    %1539 = vmatprep.subr.mxu0 0.0
    %1540 = vmatpush1.msra.mxu0 %v1253
    %1541 = vmatprep.subr.mxu0 0.0
    %1542 = vmatpush1.msra.mxu0 0.0
    %1543 = vmatprep.subr.mxu0 0.0
    %1544 = vmatpush1.msra.mxu0 0.0
    %1545 = vmatprep.subr.mxu0 0.0
    %1546 = vmatpush1.msra.mxu0 0.0
    %1547 = vmatprep.subr.mxu0 0.0
    %1548 = vmatpush1.msra.mxu0 0.0
    %1549 = vmatprep.subr.mxu0 0.0
    %1550 = vmatpush1.msra.mxu0 0.0
    %1551 = vmatprep.subr.mxu0 0.0
    %1552 = vmatpush1.msra.mxu0 0.0
    %1553 = vmatprep.subr.mxu0 0.0
    %1554 = vmatpush1.msra.mxu0 0.0
    %1555 = vmatprep.subr.mxu0 0.0
    %1556 = vmatpush1.msra.mxu0 0.0
    %1557 = vmatprep.subr.mxu0 0.0
    %1558 = vmatpush1.msra.mxu0 0.0
    %1559 = vmatprep.subr.mxu0 0.0
    %1560 = vmatpush1.msra.mxu0 0.0
    %1561 = vmatprep.subr.mxu0 0.0
    %1562 = vmatpush1.msra.mxu0 0.0
    %1563 = vmatprep.subr.mxu0 0.0
    %1564 = vmatpush1.msra.mxu0 0.0
    %1565 = vmatprep.subr.mxu0 0.0
    %1566 = vmatpush1.msra.mxu0 0.0
    %1567 = vmatprep.subr.mxu0 0.0
    %1568 = vmatpush1.msra.mxu0 0.0
    %1569 = vmatprep.subr.mxu0 0.0
    %1570 = vmatpush1.msra.mxu0 0.0
    %1571 = vmatprep.subr.mxu0 0.0
    %1572 = vmatpush1.msra.mxu0 0.0
    %1573 = vmatprep.subr.mxu0 0.0
    %1574 = vmatpush1.msra.mxu0 0.0
    %1575 = vmatprep.subr.mxu0 0.0
    %1576 = vmatpush1.msra.mxu0 0.0
    %1577 = vmatprep.subr.mxu0 0.0
    %1578 = vmatpush1.msra.mxu0 0.0
    %1579 = vmatprep.subr.mxu0 0.0
    %1580 = vmatpush1.msra.mxu0 0.0
    %1581 = vmatprep.subr.mxu0 0.0
    %1582 = vmatpush1.msra.mxu0 0.0
    %1583 = vmatprep.subr.mxu0 0.0
    %1584 = vmatpush1.msra.mxu0 0.0
    %1585 = vmatprep.subr.mxu0 0.0
    %1586 = vmatpush1.msra.mxu0 0.0
    %1587 = vmatprep.subr.mxu0 0.0
    %1588 = vmatpush1.msra.mxu0 0.0
    %1589 = vmatprep.mubr.f32.mxu0 0.0
    %1590 = vmatmul.mubr.f32.gmra.mrb[0].mxu0 %v1523
    %v1591 = vpop.f32.mrb[0].mxu0
    %v1592 = vadd.f32 0.0, %v1591
    %v1593 = vpop.f32.mrb[0].mxu0
    %1594 = vdwg.mxu0
    %v1595 = vadd.f32 %v1507, %v1592
    %v1596 = vxor.u32 %v1595, 2147483648
    %v1597 = vmul.f32 %v1596, 1.442695
    %v1598 = vpow.pop %v1597
    %v1599 = vadd.f32 %v1598, 1.0
    %v1600 = vrcp.pop %v1599
    %v1601 = vmul.f32 1.0, %v1600
    %v1602 = vtanh.pop %v1595
    %v1603 = vmul.f32 %v1601, %v1498
    %1605 = vrot.lane.b32.xlu0 %v1602, 64
    %v1606 = vpop.permute.xlu0 %1605
    %v1608 = vmul.f32 %v1601, %v1606
    %1610 = vrot.lane.b32.xlu0 %v1608, 32
    %v1611 = vpop.permute.xlu0 %1610
    %v1613 = vadd.f32 %v1603, %v1611
    %v1614 = vtanh.pop %v1613
    %1616 = vrot.lane.b32.xlu0 %v1614, 64
    %v1617 = vpop.permute.xlu0 %1616
    %v1619 = vmul.f32 %v1601, %v1617
    %v1620 = vrot.slane %v1238, 6
    %v1622 = vrot.slane %v1244, 6
    %v1624 = vsel %vm148, %v1620, %v1622
    %1626 = vrot.lane.b32.xlu0 %v1619, 32
    %v1627 = vpop.permute.xlu0 %1626
    %v1629 = vsel %vm87, %v1627, 0.0
    %v1630 = vrot.slane %v1619, 2
    %1631 = vrot.lane.b32.xlu0 %v1630, 64
    %v1632 = vpop.permute.xlu0 %1631
    %v1634 = vsel %vm87, 0.0, %v1632
    %v1636 = vrot.slane %v1634, 6
    %v1638 = vsel %vm148, %v1629, %v1636
    %v1640 = vsel %vm172, %v1638, 0
    %1642 = vmatprep.subr.mxu0 0.0
    %1643 = vmatpush1.msra.mxu0 %v1246
    %1644 = vmatprep.subr.mxu0 0.0
    %1645 = vmatpush1.msra.mxu0 %v1247
    %1646 = vmatprep.subr.mxu0 0.0
    %1647 = vmatpush1.msra.mxu0 %v1248
    %1648 = vmatprep.subr.mxu0 0.0
    %1649 = vmatpush1.msra.mxu0 %v1249
    %1650 = vmatprep.subr.mxu0 0.0
    %1651 = vmatpush1.msra.mxu0 %v1250
    %1652 = vmatprep.subr.mxu0 0.0
    %1653 = vmatpush1.msra.mxu0 %v1251
    %1654 = vmatprep.subr.mxu0 0.0
    %1655 = vmatpush1.msra.mxu0 %v1252
    %1656 = vmatprep.subr.mxu0 0.0
    %1657 = vmatpush1.msra.mxu0 %v1253
    %1658 = vmatprep.subr.mxu0 0.0
    %1659 = vmatpush1.msra.mxu0 0.0
    %1660 = vmatprep.subr.mxu0 0.0
    %1661 = vmatpush1.msra.mxu0 0.0
    %1662 = vmatprep.subr.mxu0 0.0
    %1663 = vmatpush1.msra.mxu0 0.0
    %1664 = vmatprep.subr.mxu0 0.0
    %1665 = vmatpush1.msra.mxu0 0.0
    %1666 = vmatprep.subr.mxu0 0.0
    %1667 = vmatpush1.msra.mxu0 0.0
    %1668 = vmatprep.subr.mxu0 0.0
    %1669 = vmatpush1.msra.mxu0 0.0
    %1670 = vmatprep.subr.mxu0 0.0
    %1671 = vmatpush1.msra.mxu0 0.0
    %1672 = vmatprep.subr.mxu0 0.0
    %1673 = vmatpush1.msra.mxu0 0.0
    %1674 = vmatprep.subr.mxu0 0.0
    %1675 = vmatpush1.msra.mxu0 0.0
    %1676 = vmatprep.subr.mxu0 0.0
    %1677 = vmatpush1.msra.mxu0 0.0
    %1678 = vmatprep.subr.mxu0 0.0
    %1679 = vmatpush1.msra.mxu0 0.0
    %1680 = vmatprep.subr.mxu0 0.0
    %1681 = vmatpush1.msra.mxu0 0.0
    %1682 = vmatprep.subr.mxu0 0.0
    %1683 = vmatpush1.msra.mxu0 0.0
    %1684 = vmatprep.subr.mxu0 0.0
    %1685 = vmatpush1.msra.mxu0 0.0
    %1686 = vmatprep.subr.mxu0 0.0
    %1687 = vmatpush1.msra.mxu0 0.0
    %1688 = vmatprep.subr.mxu0 0.0
    %1689 = vmatpush1.msra.mxu0 0.0
    %1690 = vmatprep.subr.mxu0 0.0
    %1691 = vmatpush1.msra.mxu0 0.0
    %1692 = vmatprep.subr.mxu0 0.0
    %1693 = vmatpush1.msra.mxu0 0.0
    %1694 = vmatprep.subr.mxu0 0.0
    %1695 = vmatpush1.msra.mxu0 0.0
    %1696 = vmatprep.subr.mxu0 0.0
    %1697 = vmatpush1.msra.mxu0 0.0
    %1698 = vmatprep.subr.mxu0 0.0
    %1699 = vmatpush1.msra.mxu0 0.0
    %1700 = vmatprep.subr.mxu0 0.0
    %1701 = vmatpush1.msra.mxu0 0.0
    %1702 = vmatprep.subr.mxu0 0.0
    %1703 = vmatpush1.msra.mxu0 0.0
    %1704 = vmatprep.subr.mxu0 0.0
    %1705 = vmatpush1.msra.mxu0 0.0
    %1706 = vmatprep.mubr.f32.mxu0 0.0
    %1707 = vmatmul.mubr.f32.gmra.mrb[0].mxu0 %v1640
    %v1708 = vpop.f32.mrb[0].mxu0
    %v1709 = vadd.f32 0.0, %v1708
    %v1710 = vpop.f32.mrb[0].mxu0
    %1711 = vdwg.mxu0
    %v1712 = vadd.f32 %v1624, %v1709
    %v1713 = vxor.u32 %v1712, 2147483648
    %v1714 = vmul.f32 %v1713, 1.442695
    %v1715 = vpow.pop %v1714
    %v1716 = vadd.f32 %v1715, 1.0
    %v1717 = vrcp.pop %v1716
    %v1718 = vmul.f32 1.0, %v1717
    %v1719 = vtanh.pop %v1712
    %v1720 = vmul.f32 %v1718, %v1613
    %1722 = vrot.lane.b32.xlu0 %v1719, 64
    %v1723 = vpop.permute.xlu0 %1722
    %v1725 = vmul.f32 %v1718, %v1723
    %1727 = vrot.lane.b32.xlu0 %v1725, 32
    %v1728 = vpop.permute.xlu0 %1727
    %v1730 = vadd.f32 %v1720, %v1728
    %v1731 = vtanh.pop %v1730
    %1733 = vrot.lane.b32.xlu0 %v1731, 64
    %v1734 = vpop.permute.xlu0 %1733
    %v1736 = vmul.f32 %v1718, %v1734
    %v1738 = vrot.slane %v1240, 4
    %v1740 = vsel %vm148, %v1242, %v1738
    %1742 = vrot.lane.b32.xlu0 %v1736, 32
    %v1743 = vpop.permute.xlu0 %1742
    %v1745 = vsel %vm87, %v1743, 0.0
    %v1746 = vrot.slane %v1736, 2
    %1747 = vrot.lane.b32.xlu0 %v1746, 64
    %v1748 = vpop.permute.xlu0 %1747
    %v1750 = vsel %vm87, 0.0, %v1748
    %v1752 = vrot.slane %v1750, 6
    %v1754 = vsel %vm148, %v1745, %v1752
    %v1756 = vsel %vm172, %v1754, 0
    %1758 = vmatprep.subr.mxu0 0.0
    %1759 = vmatpush1.msra.mxu0 %v1246
    %1760 = vmatprep.subr.mxu0 0.0
    %1761 = vmatpush1.msra.mxu0 %v1247
    %1762 = vmatprep.subr.mxu0 0.0
    %1763 = vmatpush1.msra.mxu0 %v1248
    %1764 = vmatprep.subr.mxu0 0.0
    %1765 = vmatpush1.msra.mxu0 %v1249
    %1766 = vmatprep.subr.mxu0 0.0
    %1767 = vmatpush1.msra.mxu0 %v1250
    %1768 = vmatprep.subr.mxu0 0.0
    %1769 = vmatpush1.msra.mxu0 %v1251
    %1770 = vmatprep.subr.mxu0 0.0
    %1771 = vmatpush1.msra.mxu0 %v1252
    %1772 = vmatprep.subr.mxu0 0.0
    %1773 = vmatpush1.msra.mxu0 %v1253
    %1774 = vmatprep.subr.mxu0 0.0
    %1775 = vmatpush1.msra.mxu0 0.0
    %1776 = vmatprep.subr.mxu0 0.0
    %1777 = vmatpush1.msra.mxu0 0.0
    %1778 = vmatprep.subr.mxu0 0.0
    %1779 = vmatpush1.msra.mxu0 0.0
    %1780 = vmatprep.subr.mxu0 0.0
    %1781 = vmatpush1.msra.mxu0 0.0
    %1782 = vmatprep.subr.mxu0 0.0
    %1783 = vmatpush1.msra.mxu0 0.0
    %1784 = vmatprep.subr.mxu0 0.0
    %1785 = vmatpush1.msra.mxu0 0.0
    %1786 = vmatprep.subr.mxu0 0.0
    %1787 = vmatpush1.msra.mxu0 0.0
    %1788 = vmatprep.subr.mxu0 0.0
    %1789 = vmatpush1.msra.mxu0 0.0
    %1790 = vmatprep.subr.mxu0 0.0
    %1791 = vmatpush1.msra.mxu0 0.0
    %1792 = vmatprep.subr.mxu0 0.0
    %1793 = vmatpush1.msra.mxu0 0.0
    %1794 = vmatprep.subr.mxu0 0.0
    %1795 = vmatpush1.msra.mxu0 0.0
    %1796 = vmatprep.subr.mxu0 0.0
    %1797 = vmatpush1.msra.mxu0 0.0
    %1798 = vmatprep.subr.mxu0 0.0
    %1799 = vmatpush1.msra.mxu0 0.0
    %1800 = vmatprep.subr.mxu0 0.0
    %1801 = vmatpush1.msra.mxu0 0.0
    %1802 = vmatprep.subr.mxu0 0.0
    %1803 = vmatpush1.msra.mxu0 0.0
    %1804 = vmatprep.subr.mxu0 0.0
    %1805 = vmatpush1.msra.mxu0 0.0
    %1806 = vmatprep.subr.mxu0 0.0
    %1807 = vmatpush1.msra.mxu0 0.0
    %1808 = vmatprep.subr.mxu0 0.0
    %1809 = vmatpush1.msra.mxu0 0.0
    %1810 = vmatprep.subr.mxu0 0.0
    %1811 = vmatpush1.msra.mxu0 0.0
    %1812 = vmatprep.subr.mxu0 0.0
    %1813 = vmatpush1.msra.mxu0 0.0
    %1814 = vmatprep.subr.mxu0 0.0
    %1815 = vmatpush1.msra.mxu0 0.0
    %1816 = vmatprep.subr.mxu0 0.0
    %1817 = vmatpush1.msra.mxu0 0.0
    %1818 = vmatprep.subr.mxu0 0.0
    %1819 = vmatpush1.msra.mxu0 0.0
    %1820 = vmatprep.subr.mxu0 0.0
    %1821 = vmatpush1.msra.mxu0 0.0
    %1822 = vmatprep.mubr.f32.mxu0 0.0
    %1823 = vmatmul.mubr.f32.gmra.mrb[0].mxu0 %v1756
    %v1824 = vpop.f32.mrb[0].mxu0
    %v1825 = vadd.f32 0.0, %v1824
    %v1826 = vpop.f32.mrb[0].mxu0
    %1827 = vdwg.mxu0
    %v1828 = vadd.f32 %v1740, %v1825
    %v1829 = vxor.u32 %v1828, 2147483648
    %v1830 = vmul.f32 %v1829, 1.442695
    %v1831 = vpow.pop %v1830
    %v1832 = vadd.f32 %v1831, 1.0
    %v1833 = vrcp.pop %v1832
    %v1834 = vmul.f32 1.0, %v1833
    %v1835 = vtanh.pop %v1828
    %v1836 = vmul.f32 %v1834, %v1730
    %1838 = vrot.lane.b32.xlu0 %v1835, 64
    %v1839 = vpop.permute.xlu0 %1838
    %v1841 = vmul.f32 %v1834, %v1839
    %1843 = vrot.lane.b32.xlu0 %v1841, 32
    %v1844 = vpop.permute.xlu0 %1843
    %v1846 = vadd.f32 %v1836, %v1844
    %v1847 = vtanh.pop %v1846
    %1849 = vrot.lane.b32.xlu0 %v1847, 64
    %v1850 = vpop.permute.xlu0 %1849
    %v1852 = vmul.f32 %v1834, %v1850
    %v1854 = vrot.slane %v1242, 2
    %v1856 = vrot.slane %v1240, 2
    %v1858 = vsel %vm148, %v1854, %v1856
    %1860 = vrot.lane.b32.xlu0 %v1852, 32
    %v1861 = vpop.permute.xlu0 %1860
    %v1863 = vsel %vm87, %v1861, 0.0
    %v1864 = vrot.slane %v1852, 2
    %1865 = vrot.lane.b32.xlu0 %v1864, 64
    %v1866 = vpop.permute.xlu0 %1865
    %v1868 = vsel %vm87, 0.0, %v1866
    %v1870 = vrot.slane %v1868, 6
    %v1872 = vsel %vm148, %v1863, %v1870
    %v1874 = vsel %vm172, %v1872, 0
    %1876 = vmatprep.subr.mxu0 0.0
    %1877 = vmatpush1.msra.mxu0 %v1246
    %1878 = vmatprep.subr.mxu0 0.0
    %1879 = vmatpush1.msra.mxu0 %v1247
    %1880 = vmatprep.subr.mxu0 0.0
    %1881 = vmatpush1.msra.mxu0 %v1248
    %1882 = vmatprep.subr.mxu0 0.0
    %1883 = vmatpush1.msra.mxu0 %v1249
    %1884 = vmatprep.subr.mxu0 0.0
    %1885 = vmatpush1.msra.mxu0 %v1250
    %1886 = vmatprep.subr.mxu0 0.0
    %1887 = vmatpush1.msra.mxu0 %v1251
    %1888 = vmatprep.subr.mxu0 0.0
    %1889 = vmatpush1.msra.mxu0 %v1252
    %1890 = vmatprep.subr.mxu0 0.0
    %1891 = vmatpush1.msra.mxu0 %v1253
    %1892 = vmatprep.subr.mxu0 0.0
    %1893 = vmatpush1.msra.mxu0 0.0
    %1894 = vmatprep.subr.mxu0 0.0
    %1895 = vmatpush1.msra.mxu0 0.0
    %1896 = vmatprep.subr.mxu0 0.0
    %1897 = vmatpush1.msra.mxu0 0.0
    %1898 = vmatprep.subr.mxu0 0.0
    %1899 = vmatpush1.msra.mxu0 0.0
    %1900 = vmatprep.subr.mxu0 0.0
    %1901 = vmatpush1.msra.mxu0 0.0
    %1902 = vmatprep.subr.mxu0 0.0
    %1903 = vmatpush1.msra.mxu0 0.0
    %1904 = vmatprep.subr.mxu0 0.0
    %1905 = vmatpush1.msra.mxu0 0.0
    %1906 = vmatprep.subr.mxu0 0.0
    %1907 = vmatpush1.msra.mxu0 0.0
    %1908 = vmatprep.subr.mxu0 0.0
    %1909 = vmatpush1.msra.mxu0 0.0
    %1910 = vmatprep.subr.mxu0 0.0
    %1911 = vmatpush1.msra.mxu0 0.0
    %1912 = vmatprep.subr.mxu0 0.0
    %1913 = vmatpush1.msra.mxu0 0.0
    %1914 = vmatprep.subr.mxu0 0.0
    %1915 = vmatpush1.msra.mxu0 0.0
    %1916 = vmatprep.subr.mxu0 0.0
    %1917 = vmatpush1.msra.mxu0 0.0
    %1918 = vmatprep.subr.mxu0 0.0
    %1919 = vmatpush1.msra.mxu0 0.0
    %1920 = vmatprep.subr.mxu0 0.0
    %1921 = vmatpush1.msra.mxu0 0.0
    %1922 = vmatprep.subr.mxu0 0.0
    %1923 = vmatpush1.msra.mxu0 0.0
    %1924 = vmatprep.subr.mxu0 0.0
    %1925 = vmatpush1.msra.mxu0 0.0
    %1926 = vmatprep.subr.mxu0 0.0
    %1927 = vmatpush1.msra.mxu0 0.0
    %1928 = vmatprep.subr.mxu0 0.0
    %1929 = vmatpush1.msra.mxu0 0.0
    %1930 = vmatprep.subr.mxu0 0.0
    %1931 = vmatpush1.msra.mxu0 0.0
    %1932 = vmatprep.subr.mxu0 0.0
    %1933 = vmatpush1.msra.mxu0 0.0
    %1934 = vmatprep.subr.mxu0 0.0
    %1935 = vmatpush1.msra.mxu0 0.0
    %1936 = vmatprep.subr.mxu0 0.0
    %1937 = vmatpush1.msra.mxu0 0.0
    %1938 = vmatprep.subr.mxu0 0.0
    %1939 = vmatpush1.msra.mxu0 0.0
    %1940 = vmatprep.mubr.f32.mxu0 0.0
    %1941 = vmatmul.mubr.f32.gmra.mrb[0].mxu0 %v1874
    %v1942 = vpop.f32.mrb[0].mxu0
    %v1943 = vadd.f32 0.0, %v1942
    %v1944 = vpop.f32.mrb[0].mxu0
    %1945 = vdwg.mxu0
    %v1946 = vadd.f32 %v1858, %v1943
    %v1947 = vxor.u32 %v1946, 2147483648
    %v1948 = vmul.f32 %v1947, 1.442695
    %v1949 = vpow.pop %v1948
    %v1950 = vadd.f32 %v1949, 1.0
    %v1951 = vrcp.pop %v1950
    %v1952 = vmul.f32 1.0, %v1951
    %v1953 = vtanh.pop %v1946
    %v1954 = vmul.f32 %v1952, %v1846
    %1956 = vrot.lane.b32.xlu0 %v1953, 64
    %v1957 = vpop.permute.xlu0 %1956
    %v1959 = vmul.f32 %v1952, %v1957
    %1961 = vrot.lane.b32.xlu0 %v1959, 32
    %v1962 = vpop.permute.xlu0 %1961
    %v1964 = vadd.f32 %v1954, %v1962
    %v1965 = vtanh.pop %v1964
    %1967 = vrot.lane.b32.xlu0 %v1965, 64
    %v1968 = vpop.permute.xlu0 %1967
    %v1970 = vmul.f32 %v1952, %v1968
    %v1971 = vrot.slane %v1242, 4
    %v1973 = vsel %vm148, %v1971, %v1240
    %1975 = vrot.lane.b32.xlu0 %v1970, 32
    %v1976 = vpop.permute.xlu0 %1975
    %v1978 = vsel %vm87, %v1976, 0.0
    %v1979 = vrot.slane %v1970, 2
    %1980 = vrot.lane.b32.xlu0 %v1979, 64
    %v1981 = vpop.permute.xlu0 %1980
    %v1983 = vsel %vm87, 0.0, %v1981
    %v1985 = vrot.slane %v1983, 6
    %v1987 = vsel %vm148, %v1978, %v1985
    %v1989 = vsel %vm172, %v1987, 0
    %1991 = vmatprep.subr.mxu0 0.0
    %1992 = vmatpush1.msra.mxu0 %v1246
    %1993 = vmatprep.subr.mxu0 0.0
    %1994 = vmatpush1.msra.mxu0 %v1247
    %1995 = vmatprep.subr.mxu0 0.0
    %1996 = vmatpush1.msra.mxu0 %v1248
    %1997 = vmatprep.subr.mxu0 0.0
    %1998 = vmatpush1.msra.mxu0 %v1249
    %1999 = vmatprep.subr.mxu0 0.0
    %2000 = vmatpush1.msra.mxu0 %v1250
    %2001 = vmatprep.subr.mxu0 0.0
    %2002 = vmatpush1.msra.mxu0 %v1251
    %2003 = vmatprep.subr.mxu0 0.0
    %2004 = vmatpush1.msra.mxu0 %v1252
    %2005 = vmatprep.subr.mxu0 0.0
    %2006 = vmatpush1.msra.mxu0 %v1253
    %2007 = vmatprep.subr.mxu0 0.0
    %2008 = vmatpush1.msra.mxu0 0.0
    %2009 = vmatprep.subr.mxu0 0.0
    %2010 = vmatpush1.msra.mxu0 0.0
    %2011 = vmatprep.subr.mxu0 0.0
    %2012 = vmatpush1.msra.mxu0 0.0
    %2013 = vmatprep.subr.mxu0 0.0
    %2014 = vmatpush1.msra.mxu0 0.0
    %2015 = vmatprep.subr.mxu0 0.0
    %2016 = vmatpush1.msra.mxu0 0.0
    %2017 = vmatprep.subr.mxu0 0.0
    %2018 = vmatpush1.msra.mxu0 0.0
    %2019 = vmatprep.subr.mxu0 0.0
    %2020 = vmatpush1.msra.mxu0 0.0
    %2021 = vmatprep.subr.mxu0 0.0
    %2022 = vmatpush1.msra.mxu0 0.0
    %2023 = vmatprep.subr.mxu0 0.0
    %2024 = vmatpush1.msra.mxu0 0.0
    %2025 = vmatprep.subr.mxu0 0.0
    %2026 = vmatpush1.msra.mxu0 0.0
    %2027 = vmatprep.subr.mxu0 0.0
    %2028 = vmatpush1.msra.mxu0 0.0
    %2029 = vmatprep.subr.mxu0 0.0
    %2030 = vmatpush1.msra.mxu0 0.0
    %2031 = vmatprep.subr.mxu0 0.0
    %2032 = vmatpush1.msra.mxu0 0.0
    %2033 = vmatprep.subr.mxu0 0.0
    %2034 = vmatpush1.msra.mxu0 0.0
    %2035 = vmatprep.subr.mxu0 0.0
    %2036 = vmatpush1.msra.mxu0 0.0
    %2037 = vmatprep.subr.mxu0 0.0
    %2038 = vmatpush1.msra.mxu0 0.0
    %2039 = vmatprep.subr.mxu0 0.0
    %2040 = vmatpush1.msra.mxu0 0.0
    %2041 = vmatprep.subr.mxu0 0.0
    %2042 = vmatpush1.msra.mxu0 0.0
    %2043 = vmatprep.subr.mxu0 0.0
    %2044 = vmatpush1.msra.mxu0 0.0
    %2045 = vmatprep.subr.mxu0 0.0
    %2046 = vmatpush1.msra.mxu0 0.0
    %2047 = vmatprep.subr.mxu0 0.0
    %2048 = vmatpush1.msra.mxu0 0.0
    %2049 = vmatprep.subr.mxu0 0.0
    %2050 = vmatpush1.msra.mxu0 0.0
    %2051 = vmatprep.subr.mxu0 0.0
    %2052 = vmatpush1.msra.mxu0 0.0
    %2053 = vmatprep.subr.mxu0 0.0
    %2054 = vmatpush1.msra.mxu0 0.0
    %2055 = vmatprep.mubr.f32.mxu0 0.0
    %2056 = vmatmul.mubr.f32.gmra.mrb[0].mxu0 %v1989
    %v2057 = vpop.f32.mrb[0].mxu0
    %v2058 = vadd.f32 0.0, %v2057
    %v2059 = vpop.f32.mrb[0].mxu0
    %2060 = vdwg.mxu0
    %v2061 = vadd.f32 %v1973, %v2058
    %v2062 = vxor.u32 %v2061, 2147483648
    %v2063 = vmul.f32 %v2062, 1.442695
    %v2064 = vpow.pop %v2063
    %v2065 = vadd.f32 %v2064, 1.0
    %v2066 = vrcp.pop %v2065
    %v2067 = vmul.f32 1.0, %v2066
    %v2068 = vtanh.pop %v2061
    %v2069 = vmul.f32 %v2067, %v1964
    %2071 = vrot.lane.b32.xlu0 %v2068, 64
    %v2072 = vpop.permute.xlu0 %2071
    %v2074 = vmul.f32 %v2067, %v2072
    %2076 = vrot.lane.b32.xlu0 %v2074, 32
    %v2077 = vpop.permute.xlu0 %2076
    %v2079 = vadd.f32 %v2069, %v2077
    %v2080 = vtanh.pop %v2079
    %2082 = vrot.lane.b32.xlu0 %v2080, 64
    %v2083 = vpop.permute.xlu0 %2082
    %v2085 = vmul.f32 %v2067, %v2083
    %v2086 = vrot.slane %v1242, 6
    %v2088 = vrot.slane %v1240, 6
    %v2090 = vsel %vm148, %v2086, %v2088
    %2092 = vrot.lane.b32.xlu0 %v2085, 32
    %v2093 = vpop.permute.xlu0 %2092
    %v2095 = vsel %vm87, %v2093, 0.0
    %v2096 = vrot.slane %v2085, 2
    %2097 = vrot.lane.b32.xlu0 %v2096, 64
    %v2098 = vpop.permute.xlu0 %2097
    %v2100 = vsel %vm87, 0.0, %v2098
    %v2102 = vrot.slane %v2100, 6
    %v2104 = vsel %vm148, %v2095, %v2102
    %v2106 = vsel %vm172, %v2104, 0
    %2108 = vmatprep.subr.mxu0 0.0
    %2109 = vmatpush1.msra.mxu0 %v1246
    %2110 = vmatprep.subr.mxu0 0.0
    %2111 = vmatpush1.msra.mxu0 %v1247
    %2112 = vmatprep.subr.mxu0 0.0
    %2113 = vmatpush1.msra.mxu0 %v1248
    %2114 = vmatprep.subr.mxu0 0.0
    %2115 = vmatpush1.msra.mxu0 %v1249
    %2116 = vmatprep.subr.mxu0 0.0
    %2117 = vmatpush1.msra.mxu0 %v1250
    %2118 = vmatprep.subr.mxu0 0.0
    %2119 = vmatpush1.msra.mxu0 %v1251
    %2120 = vmatprep.subr.mxu0 0.0
    %2121 = vmatpush1.msra.mxu0 %v1252
    %2122 = vmatprep.subr.mxu0 0.0
    %2123 = vmatpush1.msra.mxu0 %v1253
    %2124 = vmatprep.subr.mxu0 0.0
    %2125 = vmatpush1.msra.mxu0 0.0
    %2126 = vmatprep.subr.mxu0 0.0
    %2127 = vmatpush1.msra.mxu0 0.0
    %2128 = vmatprep.subr.mxu0 0.0
    %2129 = vmatpush1.msra.mxu0 0.0
    %2130 = vmatprep.subr.mxu0 0.0
    %2131 = vmatpush1.msra.mxu0 0.0
    %2132 = vmatprep.subr.mxu0 0.0
    %2133 = vmatpush1.msra.mxu0 0.0
    %2134 = vmatprep.subr.mxu0 0.0
    %2135 = vmatpush1.msra.mxu0 0.0
    %2136 = vmatprep.subr.mxu0 0.0
    %2137 = vmatpush1.msra.mxu0 0.0
    %2138 = vmatprep.subr.mxu0 0.0
    %2139 = vmatpush1.msra.mxu0 0.0
    %2140 = vmatprep.subr.mxu0 0.0
    %2141 = vmatpush1.msra.mxu0 0.0
    %2142 = vmatprep.subr.mxu0 0.0
    %2143 = vmatpush1.msra.mxu0 0.0
    %2144 = vmatprep.subr.mxu0 0.0
    %2145 = vmatpush1.msra.mxu0 0.0
    %2146 = vmatprep.subr.mxu0 0.0
    %2147 = vmatpush1.msra.mxu0 0.0
    %2148 = vmatprep.subr.mxu0 0.0
    %2149 = vmatpush1.msra.mxu0 0.0
    %2150 = vmatprep.subr.mxu0 0.0
    %2151 = vmatpush1.msra.mxu0 0.0
    %2152 = vmatprep.subr.mxu0 0.0
    %2153 = vmatpush1.msra.mxu0 0.0
    %2154 = vmatprep.subr.mxu0 0.0
    %2155 = vmatpush1.msra.mxu0 0.0
    %2156 = vmatprep.subr.mxu0 0.0
    %2157 = vmatpush1.msra.mxu0 0.0
    %2158 = vmatprep.subr.mxu0 0.0
    %2159 = vmatpush1.msra.mxu0 0.0
    %2160 = vmatprep.subr.mxu0 0.0
    %2161 = vmatpush1.msra.mxu0 0.0
    %2162 = vmatprep.subr.mxu0 0.0
    %2163 = vmatpush1.msra.mxu0 0.0
    %2164 = vmatprep.subr.mxu0 0.0
    %2165 = vmatpush1.msra.mxu0 0.0
    %2166 = vmatprep.subr.mxu0 0.0
    %2167 = vmatpush1.msra.mxu0 0.0
    %2168 = vmatprep.subr.mxu0 0.0
    %2169 = vmatpush1.msra.mxu0 0.0
    %2170 = vmatprep.subr.mxu0 0.0
    %2171 = vmatpush1.msra.mxu0 0.0
    %2172 = vmatprep.mubr.f32.mxu0 0.0
    %2173 = vmatmul.mubr.f32.gmra.mrb[0].mxu0 %v2106
    %v2174 = vpop.f32.mrb[0].mxu0
    %v2175 = vadd.f32 0.0, %v2174
    %v2176 = vpop.f32.mrb[0].mxu0
    %2177 = vdwg.mxu0
    %v2178 = vadd.f32 %v2090, %v2175
    %v2179 = vxor.u32 %v2178, 2147483648
    %v2180 = vmul.f32 %v2179, 1.442695
    %v2181 = vpow.pop %v2180
    %v2182 = vadd.f32 %v2181, 1.0
    %v2183 = vrcp.pop %v2182
    %v2184 = vmul.f32 1.0, %v2183
    %v2185 = vtanh.pop %v2178
    %v2186 = vmul.f32 %v2184, %v2079
    %2188 = vrot.lane.b32.xlu0 %v2185, 64
    %v2189 = vpop.permute.xlu0 %2188
    %v2191 = vmul.f32 %v2184, %v2189
    %2193 = vrot.lane.b32.xlu0 %v2191, 32
    %v2194 = vpop.permute.xlu0 %2193
    %v2196 = vadd.f32 %v2186, %v2194
    %v2197 = vtanh.pop %v2196
    %2199 = vrot.lane.b32.xlu0 %v2197, 64
    %v2200 = vpop.permute.xlu0 %2199
    %v2202 = vmul.f32 %v2184, %v2200
    %v2203 = vrot.slane %v1504, 6
    %v2205 = vrot.slane %v1619, 4
    %v2208 = vrot.slane %v1970, 6
    %v2210 = vrot.slane %v2085, 4
    %v2213 = vrot.slane %v2202, 2
    %v2215 = vsel %vm148, %v1386, %v2203
    %v2216 = vsel %vm1104, %v2215, %v2205
    %v2217 = vsel %vm1106, %v2216, %v1746
    %v2218 = vsel %vm148, %v1852, %v2208
    %v2219 = vsel %vm1104, %v2218, %v2210
    %v2220 = vsel %vm1106, %v2219, %v2213
    %v2221 = vrot.slane %v1852, 4
    %v2223 = vrot.slane %v1386, 4
    %v2225 = vsel %vm148, %v2213, %v2085
    %v2226 = vsel %vm1104, %v2225, %v2208
    %v2227 = vsel %vm1106, %v2226, %v2221
    %v2228 = vsel %vm148, %v1746, %v1619
    %v2229 = vsel %vm1104, %v2228, %v2203
    %v2230 = vsel %vm1106, %v2229, %v2223
    %2233 = vrot.lane.b32.xlu0 %v2217, 32
    %v2234 = vpop.permute.xlu0 %2233
    %2235 = vrot.lane.b32.xlu0 %v2220, 32
    %v2236 = vpop.permute.xlu0 %2235
    %2241 = vrot.lane.b32.xlu0 %v2227, 64
    %v2242 = vpop.permute.xlu0 %2241
    %2243 = vrot.lane.b32.xlu0 %v2230, 64
    %v2244 = vpop.permute.xlu0 %2243
    %v2247 = vsel %vm87, %v2234, %v2242
    %v2248 = vsel %vm87, %v2236, %v2244
    %v2249 = vrot.slane %v2202, 4
    %v2251 = vsel %vm1104, %v1090, %v2249
    %v2252 = vsel %vm1106, %v2251, %v2249
    %2254 = vrot.lane.b32.xlu0 %v2252, 32
    %v2255 = vpop.permute.xlu0 %2254
    %2257 = vst.msk [vmem:[#allocation2] sm:$0xff] %vm87, %v2255
    %v2259 = vrot.slane %v2196, 4
    %v2261 = vsel %vm1104, %v1084, %v2259
    %v2262 = vsel %vm1106, %v2261, %v2259
    %2264 = vrot.lane.b32.xlu0 %v2262, 96
    %v2265 = vpop.permute.xlu0 %2264
    %2267 = vst.msk [vmem:[#allocation4] sm:$0xff] %vm87, %v2265
    %v2268 = vpack.c.bf16 %v2248, %v2247
    %v2269 = vld [vmem:[%s9] sm:$0xf]
    %v2270 = vld [vmem:[%s9 + $0x4] sm:$0xf]
    %v2271 = vld [vmem:[%s9 + $0x8] sm:$0xf]
    %v2272 = vld [vmem:[%s9 + $0xc] sm:$0xf]
    %v2273 = vld [vmem:[%s9 + $0x10] sm:$0xf]
    %v2274 = vld [vmem:[%s9 + $0x14] sm:$0xf]
    %v2275 = vld [vmem:[%s9 + $0x18] sm:$0xf]
    %v2276 = vld [vmem:[%s9 + $0x1c] sm:$0xf]
    %v2277 = vld [vmem:[%s10] sm:$0x1]
    %v2279 = vlaneseq
    %v2280 = vshrl.u32 %v2279, 7
    %v2281 = vsub.s32 0, %v2280
    %v2282 = vrot.slane %v2277, %v2281
    %v2292 = vunpack.c.l.b16 %v2269
    %v2293 = vunpack.c.l.b16 %v2270
    %v2294 = vunpack.c.l.b16 %v2271
    %v2295 = vunpack.c.l.b16 %v2272
    %v2296 = vunpack.c.l.b16 %v2273
    %v2297 = vunpack.c.l.b16 %v2274
    %v2298 = vunpack.c.l.b16 %v2275
    %v2299 = vunpack.c.l.b16 %v2276
    %v2300 = vpack.c.b16 %v2293, %v2292
    %v2301 = vpack.c.b16 %v2295, %v2294
    %v2302 = vpack.c.b16 %v2297, %v2296
    %v2303 = vpack.c.b16 %v2299, %v2298
    %v2309 = vsel %vm172, %v2268, 0
    %2311 = vmatprep.subr.bf16.mxu0 0
    %2312 = vmatpush1.bf16.msra.mxu0 %v2300
    %2313 = vmatprep.subr.bf16.mxu0 0
    %2314 = vmatpush1.bf16.msra.mxu0 %v2301
    %2315 = vmatprep.subr.bf16.mxu0 0
    %2316 = vmatpush1.bf16.msra.mxu0 %v2302
    %2317 = vmatprep.subr.bf16.mxu0 0
    %2318 = vmatpush1.bf16.msra.mxu0 %v2303
    %2319 = vmatprep.subr.bf16.mxu0 0
    %2320 = vmatpush1.bf16.msra.mxu0 0
    %2321 = vmatprep.subr.bf16.mxu0 0
    %2322 = vmatpush1.bf16.msra.mxu0 0
    %2323 = vmatprep.subr.bf16.mxu0 0
    %2324 = vmatpush1.bf16.msra.mxu0 0
    %2325 = vmatprep.subr.bf16.mxu0 0
    %2326 = vmatpush1.bf16.msra.mxu0 0
    %2327 = vmatprep.subr.bf16.mxu0 0
    %2328 = vmatpush1.bf16.msra.mxu0 0
    %2329 = vmatprep.subr.bf16.mxu0 0
    %2330 = vmatpush1.bf16.msra.mxu0 0
    %2331 = vmatprep.subr.bf16.mxu0 0
    %2332 = vmatpush1.bf16.msra.mxu0 0
    %2333 = vmatprep.subr.bf16.mxu0 0
    %2334 = vmatpush1.bf16.msra.mxu0 0
    %2335 = vmatprep.subr.bf16.mxu0 0
    %2336 = vmatpush1.bf16.msra.mxu0 0
    %2337 = vmatprep.subr.bf16.mxu0 0
    %2338 = vmatpush1.bf16.msra.mxu0 0
    %2339 = vmatprep.subr.bf16.mxu0 0
    %2340 = vmatpush1.bf16.msra.mxu0 0
    %2341 = vmatprep.subr.bf16.mxu0 0
    %2342 = vmatpush1.bf16.msra.mxu0 0
    %2343 = vmatprep.mubr.bf16.mxu0 0
    %2344 = vmatmul.mubr.bf16.gmra.mrb[0].mxu0 %v2309
    %v2345 = vpop.f32.mrb[0].mxu0
    %v2346 = vadd.f32 %v2282, %v2345
    %v2347 = vpop.f32.mrb[0].mxu0
    %v2348 = vpop.f32.mrb[0].mxu0
    %v2349 = vadd.f32 %v2282, %v2348
    %v2350 = vpop.f32.mrb[0].mxu0
    %2351 = vdwg.mxu0
    %2352 = vst [vmem:[%s11] sm:$0xff] %v2346
    %2353 = vst [vmem:[%s11 + $0x8] sm:$0xff] %v2349
    // Predicated region
    $region46: #{rnn_model_forward.1} parent=1 // pred_check
      _
    $region47: #{rnn_model_forward.1} parent=1 // pred_check_branch
      %2355 = sbr.rel (0) target = $region49
    $region48: #{rnn_model_forward.1} parent=1 // pred_region
      _
    $region49: #{rnn_model_forward.1} parent=1 // pred_fallthru
      _
    // Predicated region
    $region50: #{rnn_model_forward.1} parent=1 // pred_check
      _
    $region51: #{rnn_model_forward.1} parent=1 // pred_check_branch
      %2357 = sbr.rel (0) target = $region53
    $region52: #{rnn_model_forward.1} parent=1 // pred_region
      %s2359 = ssub.s32 128, 128
      %2360 = vsyncadd [#allocation3], %s2359
      %s2362 = sshll.u32 [#allocation2], 4
      %s2363 = int_to_ptr.vmem [resolvable:$true] %s2362
      %2365 = dma.vmem_to_hbm [thread:$0]  %s2363, 128, %s12, [#allocation3]
    $region53: #{rnn_model_forward.1} parent=1 // pred_fallthru
      _
    // Predicated region
    $region54: #{rnn_model_forward.1} parent=1 // pred_check
      _
    $region55: #{rnn_model_forward.1} parent=1 // pred_check_branch
      %2367 = sbr.rel (0) target = $region57
    $region56: #{rnn_model_forward.1} parent=1 // pred_region
      %s2369 = ssub.s32 128, 128
      %2370 = vsyncadd [#allocation5], %s2369
      %s2372 = sshll.u32 [#allocation4], 4
      %s2373 = int_to_ptr.vmem [resolvable:$true] %s2372
      %2375 = dma.vmem_to_hbm [thread:$0]  %s2373, 128, %s13, [#allocation5]
    $region57: #{rnn_model_forward.1} parent=1 // pred_fallthru
      _
    // Predicated region
    $region58: #{rnn_model_forward.1} parent=1 // pred_check
      _
    $region59: #{rnn_model_forward.1} parent=1 // pred_check_branch
      %2377 = sbr.rel (0) target = $region61
    $region60: #{rnn_model_forward.1} parent=1 // pred_region
      _
    $region61: #{rnn_model_forward.1} parent=1 // pred_fallthru
      _
    // Predicated region
    $region62: #{rnn_model_forward.1} parent=1 // pred_check
      _
    $region63: #{rnn_model_forward.1} parent=1 // pred_check_branch
      %2379 = sbr.rel (0) target = $region65
    $region64: #{rnn_model_forward.1} parent=1 // pred_region
      %2380 = dma.done [#allocation3], 128
    $region65: #{rnn_model_forward.1} parent=1 // pred_fallthru
      _
    // Predicated region
    $region66: #{rnn_model_forward.1} parent=1 // pred_check
      _
    $region67: #{rnn_model_forward.1} parent=1 // pred_check_branch
      %2382 = sbr.rel (0) target = $region69
    $region68: #{rnn_model_forward.1} parent=1 // pred_region
      %2383 = dma.done [#allocation5], 128
    $region69: #{rnn_model_forward.1} parent=1 // pred_fallthru
      _
    %2384 = vsyncpa [#allocation3], 1
    %2385 = vsyncpa [#allocation5], 1

</llo_original>
